<compile_context>
chip_gen: v7x
topology: tpu7x:2x2x1
jax: 0.10.0
libtpu: 0.0.40
codegen_flags: <defaults>
</compile_context>

<pallas_src>
import functools

import jax
import jax.numpy as jnp
import numpy as np
from jax.experimental import pallas as pl
from jax.experimental.pallas import tpu as pltpu

WINDOW_SIZE = 30
HID_GC1 = 250
HID_GC2 = 500   # hidden1
HID_LIN1 = 20   # hidden2
HID_LIN2 = 100
OUT = 4


def _silu(x):
    return x * jax.nn.sigmoid(x)


def _round_up(x, m):
    return ((x + m - 1) // m) * m


def gconvnet_kernel(adj_ref, x_ref,
                    w1_ref, b1_ref, w2_ref, b2_ref,
                    wh_ref, bh_ref, wh2_ref, bh2_ref,
                    wo_ref, bo_ref,
                    out_ref, *, graphs_per_block, nodes_per_graph):
    # One grid step == one block of `graphs_per_block` graphs packed as a
    # block-diagonal adjacency tile.
    adj = adj_ref[...].astype(jnp.float32)                  # (n, n) 0/1 (bf16 exact)

    # DGL GraphConv norm='both': A_hat = D_in^-1/2 A D_out^-1/2, folded into
    # the adjacency once and reused by both conv layers.  Degree clamp to >=1
    # is equivalent to DGL's inf->0 convention here.
    deg_in = jnp.sum(adj, axis=1, keepdims=True)            # (n, 1) row sums
    deg_out = jnp.sum(adj, axis=0, keepdims=True)           # (1, n) col sums
    norm_in = jax.lax.rsqrt(jnp.maximum(deg_in, 1.0))
    norm_out = jax.lax.rsqrt(jnp.maximum(deg_out, 1.0))
    adj_n = (adj * norm_in * norm_out).astype(jnp.bfloat16)  # (n, n) bf16

    x = x_ref[...]                                           # (n, 32) f32

    # --- GraphConv 1: 32(pad of 30) -> 256(pad of 250), SiLU ---
    h = jnp.dot(adj_n, x.astype(jnp.bfloat16),
                preferred_element_type=jnp.float32)          # (n, 32) f32
    h = jnp.dot(h.astype(jnp.bfloat16), w1_ref[...],
                preferred_element_type=jnp.float32) + b1_ref[...]
    h = _silu(h)                                             # (n, 256) f32

    # --- GraphConv 2: 256 -> 512(pad of 500), SiLU ---
    h = jnp.dot(adj_n, h.astype(jnp.bfloat16),
                preferred_element_type=jnp.float32)
    h = jnp.dot(h.astype(jnp.bfloat16), w2_ref[...],
                preferred_element_type=jnp.float32) + b2_ref[...]
    h = _silu(h)                                             # (n, 512) f32

    # --- dgl.nn.MaxPooling: per-graph max over each graph's node rows ---
    # Sublane-aligned reshape (n_g = 16, multiple of 8) -> layout-compatible.
    hidden = h.shape[-1]
    g = jnp.max(h.reshape(graphs_per_block, nodes_per_graph, hidden), axis=1)  # (G, 512)

    # --- MLP head ---
    g = _silu(jnp.dot(g.astype(jnp.bfloat16), wh_ref[...],
                      preferred_element_type=jnp.float32) + bh_ref[...])       # (G, 20)
    # TODO(synk): nn.Dropout(p=0.2) -> identity (eval mode).
    g = _silu(jnp.dot(g, wh2_ref[...],
                      preferred_element_type=jnp.float32) + bh2_ref[...])      # (G, 100)
    # TODO(synk): nn.Dropout(p=0.2) -> identity (eval mode).
    y = jnp.dot(g, wo_ref[...], preferred_element_type=jnp.float32) + bo_ref[...]
    out_ref[...] = jax.nn.sigmoid(y)                                           # (G, 4)


def gconvnet_forward(adj_blocks, feats_blocks, params, *, node_tile_target=256):
    """adj_blocks: (B, n_g, n_g) per-graph adjacency; feats_blocks: (B, n_g, F).

    node_tile_target: width of the block-diagonal adjacency SpMM tile.
    256 matches the native v6e/v7x MXU dimension; use 128 on v5e.
    """
    num_graphs, n_g, _ = adj_blocks.shape
    feat_dim = feats_blocks.shape[-1]

    # Graphs per grid step (block-diagonal tile width ~ node_tile_target).
    G = max(1, min(num_graphs, max(1, node_tile_target // n_g)))

    # Pad the graph count to a multiple of G with empty graphs (zero adjacency,
    # zero features).  Padded graphs live in their own diagonal blocks, so they
    # cannot contaminate real graphs; their outputs are sliced off below.
    num_padded = _round_up(num_graphs, G)
    if num_padded != num_graphs:
        pad = num_padded - num_graphs
        adj_blocks = jnp.concatenate(
            [adj_blocks, jnp.zeros((pad, n_g, n_g), adj_blocks.dtype)], axis=0)
        feats_blocks = jnp.concatenate(
            [feats_blocks, jnp.zeros((pad, n_g, feat_dim), feats_blocks.dtype)], axis=0)
    num_blocks = num_padded // G
    n = G * n_g

    # Alignment padding of the awkward feature dims (zero pads are exact:
    # padded columns stay 0 through bias-add(0), SiLU(0)=0 and max pooling).
    FP = _round_up(feat_dim, 8)        # 30  -> 32
    H1P = _round_up(HID_GC1, 128)      # 250 -> 256
    H2P = _round_up(HID_GC2, 128)      # 500 -> 512

    def pad2(a, r, c):
        return jnp.pad(a, ((0, r - a.shape[0]), (0, c - a.shape[1])))

    # bf16 MXU operands for the large matmuls (adjacency is 0/1 -> exact).
    w1p = pad2(params["w1"], FP, H1P).astype(jnp.bfloat16)
    b1p = pad2(params["b1"], 1, H1P).astype(jnp.float32)
    w2p = pad2(params["w2"], H1P, H2P).astype(jnp.bfloat16)
    b2p = pad2(params["b2"], 1, H2P).astype(jnp.float32)
    whp = pad2(params["wh"], H2P, HID_LIN1).astype(jnp.bfloat16)

    feats_p = jnp.pad(feats_blocks.astype(jnp.float32),
                      ((0, 0), (0, 0), (0, FP - feat_dim)))
    feats_bd = feats_p.reshape(num_blocks, n, FP)

    # Block-diagonal adjacency tile per grid step: (num_blocks, n, n) bf16.
    adj_g = adj_blocks.astype(jnp.float32).reshape(num_blocks, G, n_g, n_g)
    eye_g = jnp.eye(G, dtype=jnp.float32)
    adj_bd = jnp.einsum("bgij,gh->bgihj", adj_g, eye_g).reshape(
        num_blocks, n, n).astype(jnp.bfloat16)

    def resident(arr):
        # Full-array block, constant block index -> DMA'd once, stays in VMEM
        # across the whole grid.
        return pl.BlockSpec(arr.shape, lambda b, nd=arr.ndim: (0,) * nd)

    in_specs = [
        pl.BlockSpec((None, n, n), lambda b: (b, 0, 0)),       # adjacency tile
        pl.BlockSpec((None, n, FP), lambda b: (b, 0, 0)),      # feature slab
        resident(w1p), resident(b1p),
        resident(w2p), resident(b2p),
        resident(whp), resident(params["bh"]),
        resident(params["wh2"]), resident(params["bh2"]),
        resident(params["wo"]), resident(params["bo"]),
    ]
    out_specs = pl.BlockSpec((None, G, OUT), lambda b: (b, 0, 0))

    kernel = functools.partial(gconvnet_kernel,
                               graphs_per_block=G, nodes_per_graph=n_g)

    out = pl.pallas_call(
        kernel,
        grid=(num_blocks,),
        in_specs=in_specs,
        out_specs=out_specs,
        out_shape=jax.ShapeDtypeStruct((num_blocks, G, OUT), jnp.float32),
        compiler_params=pltpu.CompilerParams(
            # Shard the graph-block axis over the TensorCores (v7x megacore);
            # if profiling ever shows single-core occupancy, switch to
            # pltpu.CORE_PARALLEL on this axis.
            dimension_semantics=("parallel",),
        ),
    )(
        adj_bd, feats_bd,
        w1p, b1p, w2p, b2p,
        whp, params["bh"], params["wh2"], params["bh2"],
        params["wo"], params["bo"],
    )
    return out.reshape(num_padded, OUT)[:num_graphs]


def init_params(key):
    """Deterministic synthetic parameter init (shapes match the PyTorch module)."""
    ks = jax.random.split(key, 10)

    def dense(k, fan_in, fan_out):
        scale = 1.0 / np.sqrt(fan_in)
        return jax.random.uniform(k, (fan_in, fan_out), jnp.float32, -scale, scale)

    return {
        "w1": dense(ks[0], WINDOW_SIZE, HID_GC1),
        "b1": jnp.zeros((1, HID_GC1), jnp.float32),
        "w2": dense(ks[1], HID_GC1, HID_GC2),
        "b2": jnp.zeros((1, HID_GC2), jnp.float32),
        "wh": dense(ks[2], HID_GC2, HID_LIN1),
        "bh": jax.random.uniform(ks[3], (1, HID_LIN1), jnp.float32, -0.04, 0.04),
        "wh2": dense(ks[4], HID_LIN1, HID_LIN2),
        "bh2": jax.random.uniform(ks[5], (1, HID_LIN2), jnp.float32, -0.2, 0.2),
        "wo": dense(ks[6], HID_LIN2, OUT),
        "bo": jax.random.uniform(ks[7], (1, OUT), jnp.float32, -0.1, 0.1),
    }


def reference_forward(adj_blocks, feats_blocks, params, *, mixed_precision=True):
    """Pure-JAX per-graph reference.  mixed_precision=True mirrors the kernel's
    bf16 MXU operands / f32 accumulation; False is the original all-f32 module
    semantics."""
    cast = (lambda a: a.astype(jnp.bfloat16)) if mixed_precision else (lambda a: a)

    adj = adj_blocks.astype(jnp.float32)                       # (B, n, n)
    deg_in = jnp.sum(adj, axis=-1, keepdims=True)              # (B, n, 1)
    deg_out = jnp.sum(adj, axis=-2, keepdims=True)             # (B, 1, n)
    norm_in = jax.lax.rsqrt(jnp.maximum(deg_in, 1.0))
    norm_out = jax.lax.rsqrt(jnp.maximum(deg_out, 1.0))
    adj_n = cast(adj * norm_in * norm_out)

    h = jnp.einsum("bij,bjf->bif", adj_n, cast(feats_blocks.astype(jnp.float32)),
                   preferred_element_type=jnp.float32)
    h = _silu(jnp.einsum("bnf,fo->bno", cast(h), cast(params["w1"]),
                         preferred_element_type=jnp.float32) + params["b1"])
    h = jnp.einsum("bij,bjf->bif", adj_n, cast(h),
                   preferred_element_type=jnp.float32)
    h = _silu(jnp.einsum("bnf,fo->bno", cast(h), cast(params["w2"]),
                         preferred_element_type=jnp.float32) + params["b2"])
    g = jnp.max(h, axis=1)                                     # (B, 500)
    g = _silu(jnp.einsum("bf,fo->bo", cast(g), cast(params["wh"]),
                         preferred_element_type=jnp.float32) + params["bh"])
    g = _silu(g @ params["wh2"] + params["bh2"])
    return jax.nn.sigmoid(g @ params["wo"] + params["bo"])


def build_random_graph_blocks(key, num_graphs, nodes_per_graph, p=0.3):
    """Per-graph symmetric 0/1 adjacency (no self-loops), varying degrees."""
    upper = jax.random.bernoulli(
        key, p, (num_graphs, nodes_per_graph, nodes_per_graph)).astype(jnp.float32)
    upper = jnp.triu(upper, k=1)
    return upper + jnp.swapaxes(upper, -1, -2)


if __name__ == "__main__":
    num_graphs = 32          # grid = (2,) after batching 16 graphs per step
    nodes_per_graph = 16

    key = jax.random.PRNGKey(0)
    k_adj, k_feat, k_param = jax.random.split(key, 3)

    adj_blocks = build_random_graph_blocks(k_adj, num_graphs, nodes_per_graph)   # (32, 16, 16)
    feats_blocks = jax.random.normal(
        k_feat, (num_graphs, nodes_per_graph, WINDOW_SIZE), jnp.float32)          # (32, 16, 30)
    params = init_params(k_param)

    out = gconvnet_forward(adj_blocks, feats_blocks, params)
    out = jax.block_until_ready(out)
    assert out.shape == (num_graphs, OUT)

    # Exact-semantics check against a reference mirroring the kernel's
    # bf16 MXU operands / f32 accumulation.
    ref_mixed = reference_forward(adj_blocks, feats_blocks, params, mixed_precision=True)
    np.testing.assert_allclose(np.asarray(out), np.asarray(ref_mixed),
                               rtol=2e-3, atol=2e-3)

    # Looser sanity check against the original all-f32 module semantics.
    ref_f32 = reference_forward(adj_blocks, feats_blocks, params, mixed_precision=False)
    np.testing.assert_allclose(np.asarray(out), np.asarray(ref_f32),
                               rtol=5e-2, atol=5e-2)

    print("KERNEL_OK")
</pallas_src>

<mosaic_0001>
module attributes {stable_mosaic.version = 11 : i64} {
  func.func @gconvnet_kernel(%arg0: i32, %arg1: memref<1x256x256xbf16, #tpu.memory_space<vmem>>, %arg2: memref<1x256x32xf32, #tpu.memory_space<vmem>>, %arg3: memref<32x256xbf16, #tpu.memory_space<vmem>>, %arg4: memref<1x256xf32, #tpu.memory_space<vmem>>, %arg5: memref<256x512xbf16, #tpu.memory_space<vmem>>, %arg6: memref<1x512xf32, #tpu.memory_space<vmem>>, %arg7: memref<512x20xbf16, #tpu.memory_space<vmem>>, %arg8: memref<1x20xf32, #tpu.memory_space<vmem>>, %arg9: memref<20x100xf32, #tpu.memory_space<vmem>>, %arg10: memref<1x100xf32, #tpu.memory_space<vmem>>, %arg11: memref<100x4xf32, #tpu.memory_space<vmem>>, %arg12: memref<1x4xf32, #tpu.memory_space<vmem>>, %arg13: memref<1x16x4xf32, #tpu.memory_space<vmem>>) attributes {dimension_semantics = [#tpu.dimension_semantics<parallel>], iteration_bounds = array<i64: 2>, scalar_prefetch = 0 : i64, scratch_operands = 0 : i64, tpu.core_type = #tpu.core_type<tc>, window_params = [{transform_indices = @transform_0, window_bounds = array<i64: 1, 256, 256>}, {transform_indices = @transform_1, window_bounds = array<i64: 1, 256, 32>}, {pipeline_mode = #tpu.pipeline_mode<synchronous>, transform_indices = @transform_2, window_bounds = array<i64: 32, 256>}, {pipeline_mode = #tpu.pipeline_mode<synchronous>, transform_indices = @transform_3, window_bounds = array<i64: 1, 256>}, {pipeline_mode = #tpu.pipeline_mode<synchronous>, transform_indices = @transform_4, window_bounds = array<i64: 256, 512>}, {pipeline_mode = #tpu.pipeline_mode<synchronous>, transform_indices = @transform_5, window_bounds = array<i64: 1, 512>}, {pipeline_mode = #tpu.pipeline_mode<synchronous>, transform_indices = @transform_6, window_bounds = array<i64: 512, 20>}, {pipeline_mode = #tpu.pipeline_mode<synchronous>, transform_indices = @transform_7, window_bounds = array<i64: 1, 20>}, {pipeline_mode = #tpu.pipeline_mode<synchronous>, transform_indices = @transform_8, window_bounds = array<i64: 20, 100>}, {pipeline_mode = #tpu.pipeline_mode<synchronous>, transform_indices = @transform_9, window_bounds = array<i64: 1, 100>}, {pipeline_mode = #tpu.pipeline_mode<synchronous>, transform_indices = @transform_10, window_bounds = array<i64: 100, 4>}, {pipeline_mode = #tpu.pipeline_mode<synchronous>, transform_indices = @transform_11, window_bounds = array<i64: 1, 4>}, {transform_indices = @transform_12, window_bounds = array<i64: 1, 16, 4>}]} {
    %c0 = arith.constant 0 : index
    %c0_0 = arith.constant 0 : index
    %c0_1 = arith.constant 0 : index
    %0 = vector.load %arg1[%c0, %c0_0, %c0_1] : memref<1x256x256xbf16, #tpu.memory_space<vmem>>, vector<1x256x256xbf16>
    %1 = vector.shape_cast %0 : vector<1x256x256xbf16> to vector<256x256xbf16>
    %2 = arith.extf %1 : vector<256x256xbf16> to vector<256x256xf32>
    %cst = arith.constant dense<0.000000e+00> : vector<256xf32>
    %3 = vector.multi_reduction <add>, %2, %cst [1] : vector<256x256xf32> to vector<256xf32>
    %4 = vector.shape_cast %3 : vector<256xf32> to vector<256x1xf32>
    %cst_2 = arith.constant dense<0.000000e+00> : vector<256xf32>
    %5 = vector.multi_reduction <add>, %2, %cst_2 [0] : vector<256x256xf32> to vector<256xf32>
    %6 = vector.shape_cast %5 : vector<256xf32> to vector<1x256xf32>
    %cst_3 = arith.constant 1.000000e+00 : f32
    %7 = vector.broadcast %cst_3 : f32 to vector<256x1xf32>
    %8 = arith.maximumf %4, %7 : vector<256x1xf32>
    %9 = math.rsqrt %8 : vector<256x1xf32>
    %cst_4 = arith.constant 1.000000e+00 : f32
    %10 = vector.broadcast %cst_4 : f32 to vector<1x256xf32>
    %11 = arith.maximumf %6, %10 : vector<1x256xf32>
    %12 = math.rsqrt %11 : vector<1x256xf32>
    %13 = vector.broadcast %9 : vector<256x1xf32> to vector<256x256xf32>
    %14 = arith.mulf %2, %13 : vector<256x256xf32>
    %15 = vector.broadcast %12 : vector<1x256xf32> to vector<256x256xf32>
    %16 = arith.mulf %14, %15 : vector<256x256xf32>
    %17 = arith.truncf %16 : vector<256x256xf32> to vector<256x256xbf16>
    %c0_5 = arith.constant 0 : index
    %c0_6 = arith.constant 0 : index
    %c0_7 = arith.constant 0 : index
    %18 = vector.load %arg2[%c0_5, %c0_6, %c0_7] : memref<1x256x32xf32, #tpu.memory_space<vmem>>, vector<1x256x32xf32>
    %19 = vector.shape_cast %18 : vector<1x256x32xf32> to vector<256x32xf32>
    %20 = arith.truncf %19 : vector<256x32xf32> to vector<256x32xbf16>
    %cst_8 = arith.constant dense<0.000000e+00> : vector<256x32xf32>
    %21 = tpu.matmul %17, %20, %cst_8 {dimension_numbers = #tpu.dot_dimension_numbers<[1], [0], [0], [1], [0, 0, 1, 1], [], []>} : vector<256x256xbf16>, vector<256x32xbf16>, vector<256x32xf32> -> vector<256x32xf32>
    %22 = arith.truncf %21 : vector<256x32xf32> to vector<256x32xbf16>
    %c0_9 = arith.constant 0 : index
    %c0_10 = arith.constant 0 : index
    %23 = vector.load %arg3[%c0_9, %c0_10] : memref<32x256xbf16, #tpu.memory_space<vmem>>, vector<32x256xbf16>
    %cst_11 = arith.constant dense<0.000000e+00> : vector<256x256xf32>
    %24 = tpu.matmul %22, %23, %cst_11 {dimension_numbers = #tpu.dot_dimension_numbers<[1], [0], [0], [1], [0, 0, 1, 1], [], []>} : vector<256x32xbf16>, vector<32x256xbf16>, vector<256x256xf32> -> vector<256x256xf32>
    %c0_12 = arith.constant 0 : index
    %c0_13 = arith.constant 0 : index
    %25 = vector.load %arg4[%c0_12, %c0_13] : memref<1x256xf32, #tpu.memory_space<vmem>>, vector<1x256xf32>
    %26 = vector.broadcast %25 : vector<1x256xf32> to vector<256x256xf32>
    %27 = arith.addf %24, %26 : vector<256x256xf32>
    %28 = arith.negf %27 : vector<256x256xf32>
    %29 = math.exp %28 : vector<256x256xf32>
    %cst_14 = arith.constant 1.000000e+00 : f32
    %30 = vector.broadcast %cst_14 : f32 to vector<256x256xf32>
    %31 = arith.addf %30, %29 : vector<256x256xf32>
    %32 = arith.divf %30, %31 : vector<256x256xf32>
    %33 = arith.mulf %27, %32 : vector<256x256xf32>
    %34 = arith.truncf %33 : vector<256x256xf32> to vector<256x256xbf16>
    %cst_15 = arith.constant dense<0.000000e+00> : vector<256x256xf32>
    %35 = tpu.matmul %17, %34, %cst_15 {dimension_numbers = #tpu.dot_dimension_numbers<[1], [0], [0], [1], [0, 0, 1, 1], [], []>} : vector<256x256xbf16>, vector<256x256xbf16>, vector<256x256xf32> -> vector<256x256xf32>
    %36 = arith.truncf %35 : vector<256x256xf32> to vector<256x256xbf16>
    %c0_16 = arith.constant 0 : index
    %c0_17 = arith.constant 0 : index
    %37 = vector.load %arg5[%c0_16, %c0_17] : memref<256x512xbf16, #tpu.memory_space<vmem>>, vector<256x512xbf16>
    %cst_18 = arith.constant dense<0.000000e+00> : vector<256x512xf32>
    %38 = tpu.matmul %36, %37, %cst_18 {dimension_numbers = #tpu.dot_dimension_numbers<[1], [0], [0], [1], [0, 0, 1, 1], [], []>} : vector<256x256xbf16>, vector<256x512xbf16>, vector<256x512xf32> -> vector<256x512xf32>
    %c0_19 = arith.constant 0 : index
    %c0_20 = arith.constant 0 : index
    %39 = vector.load %arg6[%c0_19, %c0_20] : memref<1x512xf32, #tpu.memory_space<vmem>>, vector<1x512xf32>
    %40 = vector.broadcast %39 : vector<1x512xf32> to vector<256x512xf32>
    %41 = arith.addf %38, %40 : vector<256x512xf32>
    %42 = arith.negf %41 : vector<256x512xf32>
    %43 = math.exp %42 : vector<256x512xf32>
    %cst_21 = arith.constant 1.000000e+00 : f32
    %44 = vector.broadcast %cst_21 : f32 to vector<256x512xf32>
    %45 = arith.addf %44, %43 : vector<256x512xf32>
    %46 = arith.divf %44, %45 : vector<256x512xf32>
    %47 = arith.mulf %41, %46 : vector<256x512xf32>
    %48 = vector.shape_cast %47 : vector<256x512xf32> to vector<16x16x512xf32>
    %cst_22 = arith.constant dense<0xFF800000> : vector<16x512xf32>
    %49 = vector.multi_reduction <maximumf>, %48, %cst_22 [1] : vector<16x16x512xf32> to vector<16x512xf32>
    %50 = arith.truncf %49 : vector<16x512xf32> to vector<16x512xbf16>
    %c0_23 = arith.constant 0 : index
    %c0_24 = arith.constant 0 : index
    %51 = vector.load %arg7[%c0_23, %c0_24] : memref<512x20xbf16, #tpu.memory_space<vmem>>, vector<512x20xbf16>
    %cst_25 = arith.constant dense<0.000000e+00> : vector<16x20xf32>
    %52 = tpu.matmul %50, %51, %cst_25 {dimension_numbers = #tpu.dot_dimension_numbers<[1], [0], [0], [1], [0, 0, 1, 1], [], []>} : vector<16x512xbf16>, vector<512x20xbf16>, vector<16x20xf32> -> vector<16x20xf32>
    %c0_26 = arith.constant 0 : index
    %c0_27 = arith.constant 0 : index
    %53 = vector.load %arg8[%c0_26, %c0_27] : memref<1x20xf32, #tpu.memory_space<vmem>>, vector<1x20xf32>
    %54 = vector.broadcast %53 : vector<1x20xf32> to vector<16x20xf32>
    %55 = arith.addf %52, %54 : vector<16x20xf32>
    %56 = arith.negf %55 : vector<16x20xf32>
    %57 = math.exp %56 : vector<16x20xf32>
    %cst_28 = arith.constant 1.000000e+00 : f32
    %58 = vector.broadcast %cst_28 : f32 to vector<16x20xf32>
    %59 = arith.addf %58, %57 : vector<16x20xf32>
    %60 = arith.divf %58, %59 : vector<16x20xf32>
    %61 = arith.mulf %55, %60 : vector<16x20xf32>
    %c0_29 = arith.constant 0 : index
    %c0_30 = arith.constant 0 : index
    %62 = vector.load %arg9[%c0_29, %c0_30] : memref<20x100xf32, #tpu.memory_space<vmem>>, vector<20x100xf32>
    %cst_31 = arith.constant dense<0.000000e+00> : vector<16x100xf32>
    %63 = tpu.matmul %61, %62, %cst_31 {dimension_numbers = #tpu.dot_dimension_numbers<[1], [0], [0], [1], [0, 0, 1, 1], [], []>} : vector<16x20xf32>, vector<20x100xf32>, vector<16x100xf32> -> vector<16x100xf32>
    %c0_32 = arith.constant 0 : index
    %c0_33 = arith.constant 0 : index
    %64 = vector.load %arg10[%c0_32, %c0_33] : memref<1x100xf32, #tpu.memory_space<vmem>>, vector<1x100xf32>
    %65 = vector.broadcast %64 : vector<1x100xf32> to vector<16x100xf32>
    %66 = arith.addf %63, %65 : vector<16x100xf32>
    %67 = arith.negf %66 : vector<16x100xf32>
    %68 = math.exp %67 : vector<16x100xf32>
    %cst_34 = arith.constant 1.000000e+00 : f32
    %69 = vector.broadcast %cst_34 : f32 to vector<16x100xf32>
    %70 = arith.addf %69, %68 : vector<16x100xf32>
    %71 = arith.divf %69, %70 : vector<16x100xf32>
    %72 = arith.mulf %66, %71 : vector<16x100xf32>
    %c0_35 = arith.constant 0 : index
    %c0_36 = arith.constant 0 : index
    %73 = vector.load %arg11[%c0_35, %c0_36] : memref<100x4xf32, #tpu.memory_space<vmem>>, vector<100x4xf32>
    %cst_37 = arith.constant dense<0.000000e+00> : vector<16x4xf32>
    %74 = tpu.matmul %72, %73, %cst_37 {dimension_numbers = #tpu.dot_dimension_numbers<[1], [0], [0], [1], [0, 0, 1, 1], [], []>} : vector<16x100xf32>, vector<100x4xf32>, vector<16x4xf32> -> vector<16x4xf32>
    %c0_38 = arith.constant 0 : index
    %c0_39 = arith.constant 0 : index
    %75 = vector.load %arg12[%c0_38, %c0_39] : memref<1x4xf32, #tpu.memory_space<vmem>>, vector<1x4xf32>
    %76 = vector.broadcast %75 : vector<1x4xf32> to vector<16x4xf32>
    %77 = arith.addf %74, %76 : vector<16x4xf32>
    %78 = arith.negf %77 : vector<16x4xf32>
    %79 = math.exp %78 : vector<16x4xf32>
    %cst_40 = arith.constant 1.000000e+00 : f32
    %80 = vector.broadcast %cst_40 : f32 to vector<16x4xf32>
    %81 = arith.addf %80, %79 : vector<16x4xf32>
    %82 = arith.divf %80, %81 : vector<16x4xf32>
    %c0_41 = arith.constant 0 : index
    %c0_42 = arith.constant 0 : index
    %c0_43 = arith.constant 0 : index
    %83 = vector.load %arg13[%c0_41, %c0_42, %c0_43] : memref<1x16x4xf32, #tpu.memory_space<vmem>>, vector<1x16x4xf32>
    %84 = vector.shape_cast %83 : vector<1x16x4xf32> to vector<16x4xf32>
    %85 = vector.shape_cast %82 : vector<16x4xf32> to vector<1x16x4xf32>
    tpu.vector_store %arg13[%c0_41, %c0_42, %c0_43], %85 {strides = array<i32>} : memref<1x16x4xf32, #tpu.memory_space<vmem>>, vector<1x16x4xf32>,
    return
  }
  func.func @transform_0(%arg0: i32) -> (i32, i32, i32) {
    %c0_i32 = arith.constant 0 : i32
    %c0_i32_0 = arith.constant 0 : i32
    %c0_i32_1 = arith.constant 0 : i32
    return %arg0, %c0_i32, %c0_i32_0 : i32, i32, i32
  }
  func.func @transform_1(%arg0: i32) -> (i32, i32, i32) {
    %c0_i32 = arith.constant 0 : i32
    %c0_i32_0 = arith.constant 0 : i32
    %c0_i32_1 = arith.constant 0 : i32
    return %arg0, %c0_i32, %c0_i32_0 : i32, i32, i32
  }
  func.func @transform_2(%arg0: i32) -> (i32, i32) {
    %c0_i32 = arith.constant 0 : i32
    %c0_i32_0 = arith.constant 0 : i32
    %c0_i32_1 = arith.constant 0 : i32
    return %c0_i32, %c0_i32_0 : i32, i32
  }
  func.func @transform_3(%arg0: i32) -> (i32, i32) {
    %c0_i32 = arith.constant 0 : i32
    %c0_i32_0 = arith.constant 0 : i32
    %c0_i32_1 = arith.constant 0 : i32
    return %c0_i32, %c0_i32_0 : i32, i32
  }
  func.func @transform_4(%arg0: i32) -> (i32, i32) {
    %c0_i32 = arith.constant 0 : i32
    %c0_i32_0 = arith.constant 0 : i32
    %c0_i32_1 = arith.constant 0 : i32
    return %c0_i32, %c0_i32_0 : i32, i32
  }
  func.func @transform_5(%arg0: i32) -> (i32, i32) {
    %c0_i32 = arith.constant 0 : i32
    %c0_i32_0 = arith.constant 0 : i32
    %c0_i32_1 = arith.constant 0 : i32
    return %c0_i32, %c0_i32_0 : i32, i32
  }
  func.func @transform_6(%arg0: i32) -> (i32, i32) {
    %c0_i32 = arith.constant 0 : i32
    %c0_i32_0 = arith.constant 0 : i32
    %c0_i32_1 = arith.constant 0 : i32
    return %c0_i32, %c0_i32_0 : i32, i32
  }
  func.func @transform_7(%arg0: i32) -> (i32, i32) {
    %c0_i32 = arith.constant 0 : i32
    %c0_i32_0 = arith.constant 0 : i32
    %c0_i32_1 = arith.constant 0 : i32
    return %c0_i32, %c0_i32_0 : i32, i32
  }
  func.func @transform_8(%arg0: i32) -> (i32, i32) {
    %c0_i32 = arith.constant 0 : i32
    %c0_i32_0 = arith.constant 0 : i32
    %c0_i32_1 = arith.constant 0 : i32
    return %c0_i32, %c0_i32_0 : i32, i32
  }
  func.func @transform_9(%arg0: i32) -> (i32, i32) {
    %c0_i32 = arith.constant 0 : i32
    %c0_i32_0 = arith.constant 0 : i32
    %c0_i32_1 = arith.constant 0 : i32
    return %c0_i32, %c0_i32_0 : i32, i32
  }
  func.func @transform_10(%arg0: i32) -> (i32, i32) {
    %c0_i32 = arith.constant 0 : i32
    %c0_i32_0 = arith.constant 0 : i32
    %c0_i32_1 = arith.constant 0 : i32
    return %c0_i32, %c0_i32_0 : i32, i32
  }
  func.func @transform_11(%arg0: i32) -> (i32, i32) {
    %c0_i32 = arith.constant 0 : i32
    %c0_i32_0 = arith.constant 0 : i32
    %c0_i32_1 = arith.constant 0 : i32
    return %c0_i32, %c0_i32_0 : i32, i32
  }
  func.func @transform_12(%arg0: i32) -> (i32, i32, i32) {
    %c0_i32 = arith.constant 0 : i32
    %c0_i32_0 = arith.constant 0 : i32
    %c0_i32_1 = arith.constant 0 : i32
    return %arg0, %c0_i32, %c0_i32_0 : i32, i32, i32
  }
}

</mosaic_0001>

<llo_original>
// kernel: tpu_custom_call.1
$region0: #{tpu_custom_call.1}
  #allocation0 [shape = 'u32[]', space=smem, size = 0x4, offset = 0x4, fixed_abs, tag = 'smem constant byte address 0x4 - core index']
  #allocation1 [shape = 'u32[144,128]{1,0:T(1,128)}', space=vmem, size = 0x12000, scoped, tag = 'internal scratch']
  %s0 = inlined_call_operand.vmem [shape: bf16[2,256,256], index: 0, kind: input, shape index: {}]
  %s1 = inlined_call_operand.vmem [shape: f32[2,256,32], index: 1, kind: input, shape index: {}]
  %s2 = inlined_call_operand.hbm [shape: bf16[32,256], index: 2, kind: input, shape index: {}]
  %s3 = inlined_call_operand.vmem [shape: f32[1,256], index: 3, kind: input, shape index: {}]
  %s4 = inlined_call_operand.vmem [shape: bf16[256,512], index: 4, kind: input, shape index: {}]
  %s5 = inlined_call_operand.hbm [shape: f32[1,512], index: 5, kind: input, shape index: {}]
  %s6 = inlined_call_operand.vmem [shape: bf16[512,20], index: 6, kind: input, shape index: {}]
  %s7 = inlined_call_operand.hbm [shape: f32[1,20], index: 7, kind: input, shape index: {}]
  %s8 = inlined_call_operand.hbm [shape: f32[20,100], index: 8, kind: input, shape index: {}]
  %s9 = inlined_call_operand.vmem [shape: f32[1,100], index: 9, kind: input, shape index: {}]
  %s10 = inlined_call_operand.vmem [shape: f32[100,4], index: 10, kind: input, shape index: {}]
  %s11 = inlined_call_operand.vmem [shape: f32[1,4], index: 11, kind: input, shape index: {}]
  %s12 = inlined_call_operand.vmem [shape: f32[2,16,4], index: 12, kind: output, shape index: {}]
  %s13 = sld [smem:[#allocation0]]
  $region97: #{tpu_custom_call.1} parent=0
    _
  %s15 = ssub.s32 1, %s13
  %s16 = scalar_select 0, %s15, %s13
  $region1: #{tpu_custom_call.1} parent=0
    #allocation2 [shape = 'u8[16384]{0}', space=vmem, size = 0x4000, scoped, tag = 'input window, operand 2, single buffered']
    #allocation3 [shape = 's32[2]{0}', space=sflag, size = 0x8, scoped, tag = 'scoped memory for tpu_custom_call.1']
    #allocation4 [shape = 'u8[2048]{0}', space=vmem, size = 0x800, scoped, tag = 'input window, operand 5, single buffered']
    #allocation5 [shape = 's32[1]{0}', space=sflag, size = 0x4, scoped, tag = 'scoped memory for tpu_custom_call.1']
    #allocation6 [shape = 'u8[512]{0}', space=vmem, size = 0x400, scoped, tag = 'input window, operand 7, single buffered']
    #allocation7 [shape = 'u8[12288]{0}', space=vmem, size = 0x3000, scoped, tag = 'input window, operand 8, single buffered']
    #allocation8 [shape = 's32[1]{0}', space=sflag, size = 0x4, scoped, tag = 'scoped memory for tpu_custom_call.1']
    %17 = vsyncpa [#allocation3], 0
    %18 = vsyncpa [#allocation5], 0
    %19 = vsyncpa [#allocation8], 0
    loop: start=0, step=1, limit=4
    $region2: #{tpu_custom_call.1} parent=1 // loop_pre_header
      _
    $region3: #{tpu_custom_call.1} parent=1 // loop_header
      %s21 = sphi 0, %s25
      %p22 = scmp.ge.s32.totalorder %s21, 4
      %s31 = sphi 0, %s33
      %s34 = sphi 0, %s31
      %s35 = sphi 0, %s34
      %s51 = sphi 0, %s35
      %s57 = sphi 0, %s59
      %s60 = sphi 0, %s57
      %s61 = sphi 0, %s60
      %s77 = sphi 0, %s61
      %s81 = sphi 0, %s81
      %s83 = sphi 0, %s81
      %s84 = sphi 0, %s83
      %s98 = sphi 0, %s84
      %s102 = sphi 0, %s102
      %s104 = sphi 0, %s102
      %s105 = sphi 0, %s104
      %s119 = sphi 0, %s105
      %s123 = sphi 0, %s123
      %s125 = sphi 0, %s123
      %s126 = sphi 0, %s125
      %s140 = sphi 0, %s126
      %s144 = sphi 0, %s144
      %s146 = sphi 0, %s144
      %s147 = sphi 0, %s146
      %s161 = sphi 0, %s147
      %s165 = sphi 0, %s165
      %s167 = sphi 0, %s165
      %s168 = sphi 0, %s167
      %s182 = sphi 0, %s168
      %s186 = sphi 0, %s186
      %s188 = sphi 0, %s186
      %s189 = sphi 0, %s188
      %s203 = sphi 0, %s189
      %s207 = sphi 0, %s207
      %s209 = sphi 0, %s207
      %s210 = sphi 0, %s209
      %s224 = sphi 0, %s210
      %s228 = sphi 0, %s228
      %s230 = sphi 0, %s228
      %s231 = sphi 0, %s230
      %s245 = sphi 0, %s231
      %s249 = sphi 0, %s249
      %s251 = sphi 0, %s249
      %s252 = sphi 0, %s251
      %s266 = sphi 0, %s252
      %s270 = sphi 0, %s270
      %s272 = sphi 0, %s270
      %s273 = sphi 0, %s272
      %s287 = sphi 0, %s273
      %s293 = sphi 0, %s295
      %s296 = sphi 0, %s293
      %s297 = sphi 0, %s296
      %s313 = sphi 0, %s297
    $region4: #{tpu_custom_call.1} parent=1 // loop_header_branch
      %24 = sbr.rel (%p22) target = $region8
    $region5: #{tpu_custom_call.1} parent=1 // loop_body
      %s26 = ssub.s32 %s21, 1
      %s27 = ssub.s32 %s21, 2
      %s28 = sadd.s32 %s21, 1
      %s29 = ssub.s32 %s21, %s28
      %p30 = scmp.eq.s32.totalorder %s29, 0
      %s32 = sadd.s32 %s31, 1
      %s33 = scalar_select %p30, %s31, %s32
      %p36 = pneg %p30
      %p37 = scmp.eq.s32.totalorder %s21, 1
      %p38 = por %p36, %p37
      %p39 = scmp.ne.s32.totalorder %s31, %s34
      %p40 = scmp.eq.s32.totalorder %s21, 0
      %p41 = por %p39, %p40
      %p42 = scmp.ne.s32.totalorder %s31, %s34
      %p43 = scmp.eq.s32.totalorder %s26, 1
      %p44 = por %p42, %p43
      %p45 = scmp.ne.s32.totalorder %s34, %s35
      %p46 = scmp.eq.s32.totalorder %s26, 0
      %p47 = por %p45, %p46
      %p48 = scmp.ne.s32.totalorder %s34, %s35
      %p49 = scmp.eq.s32.totalorder %s27, 1
      %p50 = por %p48, %p49
      %p52 = scmp.ne.s32.totalorder %s35, %s51
      %p53 = scmp.eq.s32.totalorder %s27, 0
      %p54 = por %p52, %p53
      %s55 = ssub.s32 %s21, %s28
      %p56 = scmp.eq.s32.totalorder %s55, 0
      %s58 = sadd.s32 %s57, 1
      %s59 = scalar_select %p56, %s57, %s58
      %p62 = pneg %p56
      %p63 = scmp.eq.s32.totalorder %s21, 1
      %p64 = por %p62, %p63
      %p65 = scmp.ne.s32.totalorder %s57, %s60
      %p66 = scmp.eq.s32.totalorder %s21, 0
      %p67 = por %p65, %p66
      %p68 = scmp.ne.s32.totalorder %s57, %s60
      %p69 = scmp.eq.s32.totalorder %s26, 1
      %p70 = por %p68, %p69
      %p71 = scmp.ne.s32.totalorder %s60, %s61
      %p72 = scmp.eq.s32.totalorder %s26, 0
      %p73 = por %p71, %p72
      %p74 = scmp.ne.s32.totalorder %s60, %s61
      %p75 = scmp.eq.s32.totalorder %s27, 1
      %p76 = por %p74, %p75
      %p78 = scmp.ne.s32.totalorder %s61, %s77
      %p79 = scmp.eq.s32.totalorder %s27, 0
      %p80 = por %p78, %p79
      %s82 = sadd.s32 %s81, 1
      %p85 = scmp.eq.s32.totalorder %s21, 1
      %p86 = scmp.ne.s32.totalorder %s81, %s83
      %p87 = scmp.eq.s32.totalorder %s21, 0
      %p88 = por %p86, %p87
      %p89 = scmp.ne.s32.totalorder %s81, %s83
      %p90 = scmp.eq.s32.totalorder %s26, 1
      %p91 = por %p89, %p90
      %p92 = scmp.ne.s32.totalorder %s83, %s84
      %p93 = scmp.eq.s32.totalorder %s26, 0
      %p94 = por %p92, %p93
      %p95 = scmp.ne.s32.totalorder %s83, %s84
      %p96 = scmp.eq.s32.totalorder %s27, 1
      %p97 = por %p95, %p96
      %p99 = scmp.ne.s32.totalorder %s84, %s98
      %p100 = scmp.eq.s32.totalorder %s27, 0
      %p101 = por %p99, %p100
      %s103 = sadd.s32 %s102, 1
      %p106 = scmp.eq.s32.totalorder %s21, 1
      %p107 = scmp.ne.s32.totalorder %s102, %s104
      %p108 = scmp.eq.s32.totalorder %s21, 0
      %p109 = por %p107, %p108
      %p110 = scmp.ne.s32.totalorder %s102, %s104
      %p111 = scmp.eq.s32.totalorder %s26, 1
      %p112 = por %p110, %p111
      %p113 = scmp.ne.s32.totalorder %s104, %s105
      %p114 = scmp.eq.s32.totalorder %s26, 0
      %p115 = por %p113, %p114
      %p116 = scmp.ne.s32.totalorder %s104, %s105
      %p117 = scmp.eq.s32.totalorder %s27, 1
      %p118 = por %p116, %p117
      %p120 = scmp.ne.s32.totalorder %s105, %s119
      %p121 = scmp.eq.s32.totalorder %s27, 0
      %p122 = por %p120, %p121
      %s124 = sadd.s32 %s123, 1
      %p127 = scmp.eq.s32.totalorder %s21, 1
      %p128 = scmp.ne.s32.totalorder %s123, %s125
      %p129 = scmp.eq.s32.totalorder %s21, 0
      %p130 = por %p128, %p129
      %p131 = scmp.ne.s32.totalorder %s123, %s125
      %p132 = scmp.eq.s32.totalorder %s26, 1
      %p133 = por %p131, %p132
      %p134 = scmp.ne.s32.totalorder %s125, %s126
      %p135 = scmp.eq.s32.totalorder %s26, 0
      %p136 = por %p134, %p135
      %p137 = scmp.ne.s32.totalorder %s125, %s126
      %p138 = scmp.eq.s32.totalorder %s27, 1
      %p139 = por %p137, %p138
      %p141 = scmp.ne.s32.totalorder %s126, %s140
      %p142 = scmp.eq.s32.totalorder %s27, 0
      %p143 = por %p141, %p142
      %s145 = sadd.s32 %s144, 1
      %p148 = scmp.eq.s32.totalorder %s21, 1
      %p149 = scmp.ne.s32.totalorder %s144, %s146
      %p150 = scmp.eq.s32.totalorder %s21, 0
      %p151 = por %p149, %p150
      %p152 = scmp.ne.s32.totalorder %s144, %s146
      %p153 = scmp.eq.s32.totalorder %s26, 1
      %p154 = por %p152, %p153
      %p155 = scmp.ne.s32.totalorder %s146, %s147
      %p156 = scmp.eq.s32.totalorder %s26, 0
      %p157 = por %p155, %p156
      %p158 = scmp.ne.s32.totalorder %s146, %s147
      %p159 = scmp.eq.s32.totalorder %s27, 1
      %p160 = por %p158, %p159
      %p162 = scmp.ne.s32.totalorder %s147, %s161
      %p163 = scmp.eq.s32.totalorder %s27, 0
      %p164 = por %p162, %p163
      %s166 = sadd.s32 %s165, 1
      %p169 = scmp.eq.s32.totalorder %s21, 1
      %p170 = scmp.ne.s32.totalorder %s165, %s167
      %p171 = scmp.eq.s32.totalorder %s21, 0
      %p172 = por %p170, %p171
      %p173 = scmp.ne.s32.totalorder %s165, %s167
      %p174 = scmp.eq.s32.totalorder %s26, 1
      %p175 = por %p173, %p174
      %p176 = scmp.ne.s32.totalorder %s167, %s168
      %p177 = scmp.eq.s32.totalorder %s26, 0
      %p178 = por %p176, %p177
      %p179 = scmp.ne.s32.totalorder %s167, %s168
      %p180 = scmp.eq.s32.totalorder %s27, 1
      %p181 = por %p179, %p180
      %p183 = scmp.ne.s32.totalorder %s168, %s182
      %p184 = scmp.eq.s32.totalorder %s27, 0
      %p185 = por %p183, %p184
      %s187 = sadd.s32 %s186, 1
      %p190 = scmp.eq.s32.totalorder %s21, 1
      %p191 = scmp.ne.s32.totalorder %s186, %s188
      %p192 = scmp.eq.s32.totalorder %s21, 0
      %p193 = por %p191, %p192
      %p194 = scmp.ne.s32.totalorder %s186, %s188
      %p195 = scmp.eq.s32.totalorder %s26, 1
      %p196 = por %p194, %p195
      %p197 = scmp.ne.s32.totalorder %s188, %s189
      %p198 = scmp.eq.s32.totalorder %s26, 0
      %p199 = por %p197, %p198
      %p200 = scmp.ne.s32.totalorder %s188, %s189
      %p201 = scmp.eq.s32.totalorder %s27, 1
      %p202 = por %p200, %p201
      %p204 = scmp.ne.s32.totalorder %s189, %s203
      %p205 = scmp.eq.s32.totalorder %s27, 0
      %p206 = por %p204, %p205
      %s208 = sadd.s32 %s207, 1
      %p211 = scmp.eq.s32.totalorder %s21, 1
      %p212 = scmp.ne.s32.totalorder %s207, %s209
      %p213 = scmp.eq.s32.totalorder %s21, 0
      %p214 = por %p212, %p213
      %p215 = scmp.ne.s32.totalorder %s207, %s209
      %p216 = scmp.eq.s32.totalorder %s26, 1
      %p217 = por %p215, %p216
      %p218 = scmp.ne.s32.totalorder %s209, %s210
      %p219 = scmp.eq.s32.totalorder %s26, 0
      %p220 = por %p218, %p219
      %p221 = scmp.ne.s32.totalorder %s209, %s210
      %p222 = scmp.eq.s32.totalorder %s27, 1
      %p223 = por %p221, %p222
      %p225 = scmp.ne.s32.totalorder %s210, %s224
      %p226 = scmp.eq.s32.totalorder %s27, 0
      %p227 = por %p225, %p226
      %s229 = sadd.s32 %s228, 1
      %p232 = scmp.eq.s32.totalorder %s21, 1
      %p233 = scmp.ne.s32.totalorder %s228, %s230
      %p234 = scmp.eq.s32.totalorder %s21, 0
      %p235 = por %p233, %p234
      %p236 = scmp.ne.s32.totalorder %s228, %s230
      %p237 = scmp.eq.s32.totalorder %s26, 1
      %p238 = por %p236, %p237
      %p239 = scmp.ne.s32.totalorder %s230, %s231
      %p240 = scmp.eq.s32.totalorder %s26, 0
      %p241 = por %p239, %p240
      %p242 = scmp.ne.s32.totalorder %s230, %s231
      %p243 = scmp.eq.s32.totalorder %s27, 1
      %p244 = por %p242, %p243
      %p246 = scmp.ne.s32.totalorder %s231, %s245
      %p247 = scmp.eq.s32.totalorder %s27, 0
      %p248 = por %p246, %p247
      %s250 = sadd.s32 %s249, 1
      %p253 = scmp.eq.s32.totalorder %s21, 1
      %p254 = scmp.ne.s32.totalorder %s249, %s251
      %p255 = scmp.eq.s32.totalorder %s21, 0
      %p256 = por %p254, %p255
      %p257 = scmp.ne.s32.totalorder %s249, %s251
      %p258 = scmp.eq.s32.totalorder %s26, 1
      %p259 = por %p257, %p258
      %p260 = scmp.ne.s32.totalorder %s251, %s252
      %p261 = scmp.eq.s32.totalorder %s26, 0
      %p262 = por %p260, %p261
      %p263 = scmp.ne.s32.totalorder %s251, %s252
      %p264 = scmp.eq.s32.totalorder %s27, 1
      %p265 = por %p263, %p264
      %p267 = scmp.ne.s32.totalorder %s252, %s266
      %p268 = scmp.eq.s32.totalorder %s27, 0
      %p269 = por %p267, %p268
      %s271 = sadd.s32 %s270, 1
      %p274 = scmp.eq.s32.totalorder %s21, 1
      %p275 = scmp.ne.s32.totalorder %s270, %s272
      %p276 = scmp.eq.s32.totalorder %s21, 0
      %p277 = por %p275, %p276
      %p278 = scmp.ne.s32.totalorder %s270, %s272
      %p279 = scmp.eq.s32.totalorder %s26, 1
      %p280 = por %p278, %p279
      %p281 = scmp.ne.s32.totalorder %s272, %s273
      %p282 = scmp.eq.s32.totalorder %s26, 0
      %p283 = por %p281, %p282
      %p284 = scmp.ne.s32.totalorder %s272, %s273
      %p285 = scmp.eq.s32.totalorder %s27, 1
      %p286 = por %p284, %p285
      %p288 = scmp.ne.s32.totalorder %s273, %s287
      %p289 = scmp.eq.s32.totalorder %s27, 0
      %p290 = por %p288, %p289
      %s291 = ssub.s32 %s21, %s28
      %p292 = scmp.eq.s32.totalorder %s291, 0
      %s294 = sadd.s32 %s293, 1
      %s295 = scalar_select %p292, %s293, %s294
      %p298 = pneg %p292
      %p299 = scmp.eq.s32.totalorder %s21, 1
      %p300 = por %p298, %p299
      %p301 = scmp.ne.s32.totalorder %s293, %s296
      %p302 = scmp.eq.s32.totalorder %s21, 0
      %p303 = por %p301, %p302
      %p304 = scmp.ne.s32.totalorder %s293, %s296
      %p305 = scmp.eq.s32.totalorder %s26, 1
      %p306 = por %p304, %p305
      %p307 = scmp.ne.s32.totalorder %s296, %s297
      %p308 = scmp.eq.s32.totalorder %s26, 0
      %p309 = por %p307, %p308
      %p310 = scmp.ne.s32.totalorder %s296, %s297
      %p311 = scmp.eq.s32.totalorder %s27, 1
      %p312 = por %p310, %p311
      %p314 = scmp.ne.s32.totalorder %s297, %s313
      %p315 = scmp.eq.s32.totalorder %s27, 0
      %p316 = por %p314, %p315
      %p317 = scmp.le.s32.totalorder 1, %s21
      %p318 = scmp.lt.s32.totalorder %s21, 3
      %p319 = pnand %p317, %p318
      %p320 = pneg %p319
      // Predicated region
      $region9: #{tpu_custom_call.1} parent=5 // pred_check
        _
      $region10: #{tpu_custom_call.1} parent=5 // pred_check_branch
        %322 = sbr.rel (%p319) target = $region12
      $region11: #{tpu_custom_call.1} parent=5 // pred_region
        %s323 = ssub.s32 %s21, 1
        // Predicated region
        $region13: #{tpu_custom_call.1} parent=11 // pred_check
          %p324 = pneg %p94
        $region14: #{tpu_custom_call.1} parent=11 // pred_check_branch
          %326 = sbr.rel (%p324) target = $region16
        $region15: #{tpu_custom_call.1} parent=11 // pred_region
          %s328 = ssub.s32 512, 512
          %329 = vsyncadd [#allocation3], %s328
          %s330 = sshll.u32 [#allocation2], 4
          %s331 = int_to_ptr.vmem [resolvable:$true] %s330
          %336 = dma.hbm_to_vmem [thread:$0]  %s2, 512, %s331, [#allocation3], 128, 128, 8
        $region16: #{tpu_custom_call.1} parent=11 // pred_fallthru
          _
        // Predicated region
        $region17: #{tpu_custom_call.1} parent=11 // pred_check
          %p337 = pneg %p115
        $region18: #{tpu_custom_call.1} parent=11 // pred_check_branch
          %339 = sbr.rel (%p337) target = $region20
        $region19: #{tpu_custom_call.1} parent=11 // pred_region
          _
        $region20: #{tpu_custom_call.1} parent=11 // pred_fallthru
          _
        // Predicated region
        $region21: #{tpu_custom_call.1} parent=11 // pred_check
          %p340 = pneg %p136
        $region22: #{tpu_custom_call.1} parent=11 // pred_check_branch
          %342 = sbr.rel (%p340) target = $region24
        $region23: #{tpu_custom_call.1} parent=11 // pred_region
          _
        $region24: #{tpu_custom_call.1} parent=11 // pred_fallthru
          _
        // Predicated region
        $region25: #{tpu_custom_call.1} parent=11 // pred_check
          %p343 = pneg %p157
        $region26: #{tpu_custom_call.1} parent=11 // pred_check_branch
          %345 = sbr.rel (%p343) target = $region28
        $region27: #{tpu_custom_call.1} parent=11 // pred_region
          %s347 = ssub.s32 64, 64
          %348 = vsyncadd [#allocation5], %s347
          %s350 = sshll.u32 [#allocation4], 4
          %s351 = int_to_ptr.vmem [resolvable:$true] %s350
          %353 = dma.hbm_to_vmem [thread:$0]  %s5, 64, %s351, [#allocation5]
        $region28: #{tpu_custom_call.1} parent=11 // pred_fallthru
          _
        // Predicated region
        $region29: #{tpu_custom_call.1} parent=11 // pred_check
          %p354 = pneg %p178
        $region30: #{tpu_custom_call.1} parent=11 // pred_check_branch
          %356 = sbr.rel (%p354) target = $region32
        $region31: #{tpu_custom_call.1} parent=11 // pred_region
          _
        $region32: #{tpu_custom_call.1} parent=11 // pred_fallthru
          _
        // Predicated region
        $region33: #{tpu_custom_call.1} parent=11 // pred_check
          %p357 = pneg %p199
        $region34: #{tpu_custom_call.1} parent=11 // pred_check_branch
          %359 = sbr.rel (%p357) target = $region36
        $region35: #{tpu_custom_call.1} parent=11 // pred_region
          %s361 = ssub.s32 16, 16
          %362 = vsyncadd [#allocation5], %s361
          %s364 = sshll.u32 [#allocation6], 4
          %s365 = int_to_ptr.vmem [resolvable:$true] %s364
          %367 = dma.hbm_to_vmem [thread:$0]  %s7, 16, %s365, [#allocation5]
        $region36: #{tpu_custom_call.1} parent=11 // pred_fallthru
          _
        // Predicated region
        $region37: #{tpu_custom_call.1} parent=11 // pred_check
          %p368 = pneg %p220
        $region38: #{tpu_custom_call.1} parent=11 // pred_check_branch
          %370 = sbr.rel (%p368) target = $region40
        $region39: #{tpu_custom_call.1} parent=11 // pred_region
          %s372 = ssub.s32 384, 384
          %373 = vsyncadd [#allocation8], %s372
          %s374 = sshll.u32 [#allocation7], 4
          %s375 = int_to_ptr.vmem [resolvable:$true] %s374
          %380 = dma.hbm_to_vmem [thread:$0]  %s8, 384, %s375, [#allocation8], 128, 128, 8
        $region40: #{tpu_custom_call.1} parent=11 // pred_fallthru
          _
        // Predicated region
        $region41: #{tpu_custom_call.1} parent=11 // pred_check
          %p381 = pneg %p241
        $region42: #{tpu_custom_call.1} parent=11 // pred_check_branch
          %383 = sbr.rel (%p381) target = $region44
        $region43: #{tpu_custom_call.1} parent=11 // pred_region
          _
        $region44: #{tpu_custom_call.1} parent=11 // pred_fallthru
          _
        // Predicated region
        $region45: #{tpu_custom_call.1} parent=11 // pred_check
          %p384 = pneg %p262
        $region46: #{tpu_custom_call.1} parent=11 // pred_check_branch
          %386 = sbr.rel (%p384) target = $region48
        $region47: #{tpu_custom_call.1} parent=11 // pred_region
          _
        $region48: #{tpu_custom_call.1} parent=11 // pred_fallthru
          _
        // Predicated region
        $region49: #{tpu_custom_call.1} parent=11 // pred_check
          %p387 = pneg %p283
        $region50: #{tpu_custom_call.1} parent=11 // pred_check_branch
          %389 = sbr.rel (%p387) target = $region52
        $region51: #{tpu_custom_call.1} parent=11 // pred_region
          _
        $region52: #{tpu_custom_call.1} parent=11 // pred_fallthru
          _
      $region12: #{tpu_custom_call.1} parent=5 // pred_fallthru
        _
      %p390 = scmp.lt.s32.totalorder %s21, 2
      // Predicated region
      $region53: #{tpu_custom_call.1} parent=5 // pred_check
        %p391 = pneg %p390
      $region54: #{tpu_custom_call.1} parent=5 // pred_check_branch
        %393 = sbr.rel (%p391) target = $region56
      $region55: #{tpu_custom_call.1} parent=5 // pred_region
        // Predicated region
        $region57: #{tpu_custom_call.1} parent=55 // pred_check
          %p394 = pneg %p41
        $region58: #{tpu_custom_call.1} parent=55 // pred_check_branch
          %396 = sbr.rel (%p394) target = $region60
        $region59: #{tpu_custom_call.1} parent=55 // pred_region
          %p397 = scmp.lt.s32.totalorder %s21, 1
          %s398 = scalar_select %p397, %s21, 1
          %s399 = smul.addr %s398, 64
          %s400 = smul.addr %s399, 4
          %s401 = scalar_lea.vmem %s0, %s400
        $region60: #{tpu_custom_call.1} parent=55 // pred_fallthru
          _
        // Predicated region
        $region61: #{tpu_custom_call.1} parent=55 // pred_check
          %p402 = pneg %p67
        $region62: #{tpu_custom_call.1} parent=55 // pred_check_branch
          %404 = sbr.rel (%p402) target = $region64
        $region63: #{tpu_custom_call.1} parent=55 // pred_region
          %p405 = scmp.lt.s32.totalorder %s21, 1
          %s406 = scalar_select %p405, %s21, 1
          %s407 = smul.addr %s406, 32
          %s408 = smul.addr %s407, 8
          %s409 = scalar_lea.vmem %s1, %s408
        $region64: #{tpu_custom_call.1} parent=55 // pred_fallthru
          _
      $region56: #{tpu_custom_call.1} parent=5 // pred_fallthru
        _
      %p410 = scmp.le.s32.totalorder 1, %s21
      %p411 = scmp.lt.s32.totalorder %s21, 3
      %p412 = pnand %p410, %p411
      %p413 = pneg %p412
      // Predicated region
      $region65: #{tpu_custom_call.1} parent=5 // pred_check
        _
      $region66: #{tpu_custom_call.1} parent=5 // pred_check_branch
        %415 = sbr.rel (%p412) target = $region68
      $region67: #{tpu_custom_call.1} parent=5 // pred_region
        %s416 = ssub.s32 %s21, 1
        // Predicated region
        $region69: #{tpu_custom_call.1} parent=67 // pred_check
          %p417 = pneg %p94
        $region70: #{tpu_custom_call.1} parent=67 // pred_check_branch
          %419 = sbr.rel (%p417) target = $region72
        $region71: #{tpu_custom_call.1} parent=67 // pred_region
          %420 = dma.done [#allocation3], 512
        $region72: #{tpu_custom_call.1} parent=67 // pred_fallthru
          _
        // Predicated region
        $region73: #{tpu_custom_call.1} parent=67 // pred_check
          %p421 = pneg %p157
        $region74: #{tpu_custom_call.1} parent=67 // pred_check_branch
          %423 = sbr.rel (%p421) target = $region76
        $region75: #{tpu_custom_call.1} parent=67 // pred_region
          %424 = dma.done [#allocation5], 64
        $region76: #{tpu_custom_call.1} parent=67 // pred_fallthru
          _
        // Predicated region
        $region77: #{tpu_custom_call.1} parent=67 // pred_check
          %p425 = pneg %p199
        $region78: #{tpu_custom_call.1} parent=67 // pred_check_branch
          %427 = sbr.rel (%p425) target = $region80
        $region79: #{tpu_custom_call.1} parent=67 // pred_region
          %428 = dma.done [#allocation5], 16
        $region80: #{tpu_custom_call.1} parent=67 // pred_fallthru
          _
        // Predicated region
        $region81: #{tpu_custom_call.1} parent=67 // pred_check
          %p429 = pneg %p220
        $region82: #{tpu_custom_call.1} parent=67 // pred_check_branch
          %431 = sbr.rel (%p429) target = $region84
        $region83: #{tpu_custom_call.1} parent=67 // pred_region
          %432 = dma.done [#allocation8], 384
        $region84: #{tpu_custom_call.1} parent=67 // pred_fallthru
          _
        %p433 = scmp.lt.s32.totalorder %s26, 1
        %s434 = scalar_select %p433, %s26, 1
        %s435 = smul.addr %s434, 64
        %s436 = smul.addr %s435, 4
        %s437 = scalar_lea.vmem %s0, %s436
        %p438 = pneg %p47
        %p439 = pneg %p44
        %p440 = scmp.lt.s32.totalorder %s26, 1
        %s441 = scalar_select %p440, %s26, 1
        %s442 = smul.addr %s441, 32
        %s443 = smul.addr %s442, 8
        %s444 = scalar_lea.vmem %s1, %s443
        %p445 = pneg %p73
        %p446 = pneg %p70
        %p447 = pneg %p94
        %p448 = pneg %p91
        %p449 = pneg %p115
        %p450 = pneg %p112
        %p451 = pneg %p136
        %p452 = pneg %p133
        %p453 = pneg %p157
        %p454 = pneg %p154
        %p455 = pneg %p178
        %p456 = pneg %p175
        %p457 = pneg %p199
        %p458 = pneg %p196
        %p459 = pneg %p220
        %p460 = pneg %p217
        %p461 = pneg %p241
        %p462 = pneg %p238
        %p463 = pneg %p262
        %p464 = pneg %p259
        %p465 = pneg %p283
        %p466 = pneg %p280
        %p467 = pneg %p309
        %p468 = pneg %p306
        %p469 = scmp.lt.s32.totalorder %s26, 1
        %s470 = scalar_select %p469, %s26, 1
        %s471 = smul.addr %s470, 2
        %s472 = smul.addr %s471, 8
        %s473 = scalar_lea.vmem %s12, %s472
        %p474 = scmp.lt.s32.totalorder %s26, 1
        %s475 = scalar_select %p474, %s26, 1
        %s476 = smul.addr %s475, 64
        %s477 = smul.addr %s476, 4
        %s478 = scalar_lea.vmem %s0, %s477
        %p479 = scmp.lt.s32.totalorder %s26, 1
        %s480 = scalar_select %p479, %s26, 1
        %s481 = smul.addr %s480, 32
        %s482 = smul.addr %s481, 8
        %s483 = scalar_lea.vmem %s1, %s482
        %p484 = scmp.lt.s32.totalorder %s26, 1
        %s485 = scalar_select %p484, %s26, 1
        %s486 = smul.addr %s485, 2
        %s487 = smul.addr %s486, 8
        %s488 = scalar_lea.vmem %s12, %s487
        %v490 = vld [vmem:[%s478] sm:$0xff]
        %v491 = vld [vmem:[%s478 + $0x8] sm:$0xff]
        %v492 = vld [vmem:[%s478 + $0x10] sm:$0xff]
        %v493 = vld [vmem:[%s478 + $0x18] sm:$0xff]
        %v494 = vld [vmem:[%s478 + $0x20] sm:$0xff]
        %v495 = vld [vmem:[%s478 + $0x28] sm:$0xff]
        %v496 = vld [vmem:[%s478 + $0x30] sm:$0xff]
        %v497 = vld [vmem:[%s478 + $0x38] sm:$0xff]
        %v498 = vld [vmem:[%s478 + $0x40] sm:$0xff]
        %v499 = vld [vmem:[%s478 + $0x48] sm:$0xff]
        %v500 = vld [vmem:[%s478 + $0x50] sm:$0xff]
        %v501 = vld [vmem:[%s478 + $0x58] sm:$0xff]
        %v502 = vld [vmem:[%s478 + $0x60] sm:$0xff]
        %v503 = vld [vmem:[%s478 + $0x68] sm:$0xff]
        %v504 = vld [vmem:[%s478 + $0x70] sm:$0xff]
        %v505 = vld [vmem:[%s478 + $0x78] sm:$0xff]
        %v506 = vld [vmem:[%s478 + $0x80] sm:$0xff]
        %v507 = vld [vmem:[%s478 + $0x88] sm:$0xff]
        %v508 = vld [vmem:[%s478 + $0x90] sm:$0xff]
        %v509 = vld [vmem:[%s478 + $0x98] sm:$0xff]
        %v510 = vld [vmem:[%s478 + $0xa0] sm:$0xff]
        %v511 = vld [vmem:[%s478 + $0xa8] sm:$0xff]
        %v512 = vld [vmem:[%s478 + $0xb0] sm:$0xff]
        %v513 = vld [vmem:[%s478 + $0xb8] sm:$0xff]
        %v514 = vld [vmem:[%s478 + $0xc0] sm:$0xff]
        %v515 = vld [vmem:[%s478 + $0xc8] sm:$0xff]
        %v516 = vld [vmem:[%s478 + $0xd0] sm:$0xff]
        %v517 = vld [vmem:[%s478 + $0xd8] sm:$0xff]
        %v518 = vld [vmem:[%s478 + $0xe0] sm:$0xff]
        %v519 = vld [vmem:[%s478 + $0xe8] sm:$0xff]
        %v520 = vld [vmem:[%s478 + $0xf0] sm:$0xff]
        %v521 = vld [vmem:[%s478 + $0xf8] sm:$0xff]
        %v522 = vunpack.c.l.bf16 %v490
        %v523 = vunpack.c.h.bf16 %v490
        %v524 = vunpack.c.l.bf16 %v491
        %v525 = vunpack.c.h.bf16 %v491
        %v526 = vunpack.c.l.bf16 %v492
        %v527 = vunpack.c.h.bf16 %v492
        %v528 = vunpack.c.l.bf16 %v493
        %v529 = vunpack.c.h.bf16 %v493
        %v530 = vunpack.c.l.bf16 %v494
        %v531 = vunpack.c.h.bf16 %v494
        %v532 = vunpack.c.l.bf16 %v495
        %v533 = vunpack.c.h.bf16 %v495
        %v534 = vunpack.c.l.bf16 %v496
        %v535 = vunpack.c.h.bf16 %v496
        %v536 = vunpack.c.l.bf16 %v497
        %v537 = vunpack.c.h.bf16 %v497
        %v538 = vunpack.c.l.bf16 %v498
        %v539 = vunpack.c.h.bf16 %v498
        %v540 = vunpack.c.l.bf16 %v499
        %v541 = vunpack.c.h.bf16 %v499
        %v542 = vunpack.c.l.bf16 %v500
        %v543 = vunpack.c.h.bf16 %v500
        %v544 = vunpack.c.l.bf16 %v501
        %v545 = vunpack.c.h.bf16 %v501
        %v546 = vunpack.c.l.bf16 %v502
        %v547 = vunpack.c.h.bf16 %v502
        %v548 = vunpack.c.l.bf16 %v503
        %v549 = vunpack.c.h.bf16 %v503
        %v550 = vunpack.c.l.bf16 %v504
        %v551 = vunpack.c.h.bf16 %v504
        %v552 = vunpack.c.l.bf16 %v505
        %v553 = vunpack.c.h.bf16 %v505
        %v554 = vunpack.c.l.bf16 %v506
        %v555 = vunpack.c.h.bf16 %v506
        %v556 = vunpack.c.l.bf16 %v507
        %v557 = vunpack.c.h.bf16 %v507
        %v558 = vunpack.c.l.bf16 %v508
        %v559 = vunpack.c.h.bf16 %v508
        %v560 = vunpack.c.l.bf16 %v509
        %v561 = vunpack.c.h.bf16 %v509
        %v562 = vunpack.c.l.bf16 %v510
        %v563 = vunpack.c.h.bf16 %v510
        %v564 = vunpack.c.l.bf16 %v511
        %v565 = vunpack.c.h.bf16 %v511
        %v566 = vunpack.c.l.bf16 %v512
        %v567 = vunpack.c.h.bf16 %v512
        %v568 = vunpack.c.l.bf16 %v513
        %v569 = vunpack.c.h.bf16 %v513
        %v570 = vunpack.c.l.bf16 %v514
        %v571 = vunpack.c.h.bf16 %v514
        %v572 = vunpack.c.l.bf16 %v515
        %v573 = vunpack.c.h.bf16 %v515
        %v574 = vunpack.c.l.bf16 %v516
        %v575 = vunpack.c.h.bf16 %v516
        %v576 = vunpack.c.l.bf16 %v517
        %v577 = vunpack.c.h.bf16 %v517
        %v578 = vunpack.c.l.bf16 %v518
        %v579 = vunpack.c.h.bf16 %v518
        %v580 = vunpack.c.l.bf16 %v519
        %v581 = vunpack.c.h.bf16 %v519
        %v582 = vunpack.c.l.bf16 %v520
        %v583 = vunpack.c.h.bf16 %v520
        %v584 = vunpack.c.l.bf16 %v521
        %v585 = vunpack.c.h.bf16 %v521
        %v586 = vadd.f32 %v522, %v523
        %587 = vadd.xlane.f32.xlu0 %v586
        %v588 = vpop.xlane.xlu0 %587
        %v589 = vadd.f32 %v524, %v525
        %590 = vadd.xlane.f32.xlu0 %v589
        %v591 = vpop.xlane.xlu0 %590
        %v592 = vadd.f32 %v526, %v527
        %593 = vadd.xlane.f32.xlu0 %v592
        %v594 = vpop.xlane.xlu0 %593
        %v595 = vadd.f32 %v528, %v529
        %596 = vadd.xlane.f32.xlu0 %v595
        %v597 = vpop.xlane.xlu0 %596
        %v598 = vadd.f32 %v530, %v531
        %599 = vadd.xlane.f32.xlu0 %v598
        %v600 = vpop.xlane.xlu0 %599
        %v601 = vadd.f32 %v532, %v533
        %602 = vadd.xlane.f32.xlu0 %v601
        %v603 = vpop.xlane.xlu0 %602
        %v604 = vadd.f32 %v534, %v535
        %605 = vadd.xlane.f32.xlu0 %v604
        %v606 = vpop.xlane.xlu0 %605
        %v607 = vadd.f32 %v536, %v537
        %608 = vadd.xlane.f32.xlu0 %v607
        %v609 = vpop.xlane.xlu0 %608
        %v610 = vadd.f32 %v538, %v539
        %611 = vadd.xlane.f32.xlu0 %v610
        %v612 = vpop.xlane.xlu0 %611
        %v613 = vadd.f32 %v540, %v541
        %614 = vadd.xlane.f32.xlu0 %v613
        %v615 = vpop.xlane.xlu0 %614
        %v616 = vadd.f32 %v542, %v543
        %617 = vadd.xlane.f32.xlu0 %v616
        %v618 = vpop.xlane.xlu0 %617
        %v619 = vadd.f32 %v544, %v545
        %620 = vadd.xlane.f32.xlu0 %v619
        %v621 = vpop.xlane.xlu0 %620
        %v622 = vadd.f32 %v546, %v547
        %623 = vadd.xlane.f32.xlu0 %v622
        %v624 = vpop.xlane.xlu0 %623
        %v625 = vadd.f32 %v548, %v549
        %626 = vadd.xlane.f32.xlu0 %v625
        %v627 = vpop.xlane.xlu0 %626
        %v628 = vadd.f32 %v550, %v551
        %629 = vadd.xlane.f32.xlu0 %v628
        %v630 = vpop.xlane.xlu0 %629
        %v631 = vadd.f32 %v552, %v553
        %632 = vadd.xlane.f32.xlu0 %v631
        %v633 = vpop.xlane.xlu0 %632
        %v634 = vadd.f32 %v554, %v555
        %635 = vadd.xlane.f32.xlu0 %v634
        %v636 = vpop.xlane.xlu0 %635
        %v637 = vadd.f32 %v556, %v557
        %638 = vadd.xlane.f32.xlu0 %v637
        %v639 = vpop.xlane.xlu0 %638
        %v640 = vadd.f32 %v558, %v559
        %641 = vadd.xlane.f32.xlu0 %v640
        %v642 = vpop.xlane.xlu0 %641
        %v643 = vadd.f32 %v560, %v561
        %644 = vadd.xlane.f32.xlu0 %v643
        %v645 = vpop.xlane.xlu0 %644
        %v646 = vadd.f32 %v562, %v563
        %647 = vadd.xlane.f32.xlu0 %v646
        %v648 = vpop.xlane.xlu0 %647
        %v649 = vadd.f32 %v564, %v565
        %650 = vadd.xlane.f32.xlu0 %v649
        %v651 = vpop.xlane.xlu0 %650
        %v652 = vadd.f32 %v566, %v567
        %653 = vadd.xlane.f32.xlu0 %v652
        %v654 = vpop.xlane.xlu0 %653
        %v655 = vadd.f32 %v568, %v569
        %656 = vadd.xlane.f32.xlu0 %v655
        %v657 = vpop.xlane.xlu0 %656
        %v658 = vadd.f32 %v570, %v571
        %659 = vadd.xlane.f32.xlu0 %v658
        %v660 = vpop.xlane.xlu0 %659
        %v661 = vadd.f32 %v572, %v573
        %662 = vadd.xlane.f32.xlu0 %v661
        %v663 = vpop.xlane.xlu0 %662
        %v664 = vadd.f32 %v574, %v575
        %665 = vadd.xlane.f32.xlu0 %v664
        %v666 = vpop.xlane.xlu0 %665
        %v667 = vadd.f32 %v576, %v577
        %668 = vadd.xlane.f32.xlu0 %v667
        %v669 = vpop.xlane.xlu0 %668
        %v670 = vadd.f32 %v578, %v579
        %671 = vadd.xlane.f32.xlu0 %v670
        %v672 = vpop.xlane.xlu0 %671
        %v673 = vadd.f32 %v580, %v581
        %674 = vadd.xlane.f32.xlu0 %v673
        %v675 = vpop.xlane.xlu0 %674
        %v676 = vadd.f32 %v582, %v583
        %677 = vadd.xlane.f32.xlu0 %v676
        %v678 = vpop.xlane.xlu0 %677
        %v679 = vadd.f32 %v584, %v585
        %680 = vadd.xlane.f32.xlu0 %v679
        %v681 = vpop.xlane.xlu0 %680
        %v682 = vadd.f32 %v522, %v524
        %v683 = vadd.f32 %v682, %v526
        %v684 = vadd.f32 %v683, %v528
        %v685 = vadd.f32 %v684, %v530
        %v686 = vadd.f32 %v685, %v532
        %v687 = vadd.f32 %v686, %v534
        %v688 = vadd.f32 %v687, %v536
        %v689 = vadd.f32 %v688, %v538
        %v690 = vadd.f32 %v689, %v540
        %v691 = vadd.f32 %v690, %v542
        %v692 = vadd.f32 %v691, %v544
        %v693 = vadd.f32 %v692, %v546
        %v694 = vadd.f32 %v693, %v548
        %v695 = vadd.f32 %v694, %v550
        %v696 = vadd.f32 %v695, %v552
        %v697 = vadd.f32 %v696, %v554
        %v698 = vadd.f32 %v697, %v556
        %v699 = vadd.f32 %v698, %v558
        %v700 = vadd.f32 %v699, %v560
        %v701 = vadd.f32 %v700, %v562
        %v702 = vadd.f32 %v701, %v564
        %v703 = vadd.f32 %v702, %v566
        %v704 = vadd.f32 %v703, %v568
        %v705 = vadd.f32 %v704, %v570
        %v706 = vadd.f32 %v705, %v572
        %v707 = vadd.f32 %v706, %v574
        %v708 = vadd.f32 %v707, %v576
        %v709 = vadd.f32 %v708, %v578
        %v710 = vadd.f32 %v709, %v580
        %v711 = vadd.f32 %v710, %v582
        %v712 = vadd.f32 %v711, %v584
        %v713 = vrot.slane %v712, 4
        %v714 = vadd.f32 %v712, %v713
        %v715 = vrot.slane %v714, 2
        %v716 = vadd.f32 %v714, %v715
        %v717 = vrot.slane %v716, 1
        %v718 = vadd.f32 %v716, %v717
        %v719 = vadd.f32 %v523, %v525
        %v720 = vadd.f32 %v719, %v527
        %v721 = vadd.f32 %v720, %v529
        %v722 = vadd.f32 %v721, %v531
        %v723 = vadd.f32 %v722, %v533
        %v724 = vadd.f32 %v723, %v535
        %v725 = vadd.f32 %v724, %v537
        %v726 = vadd.f32 %v725, %v539
        %v727 = vadd.f32 %v726, %v541
        %v728 = vadd.f32 %v727, %v543
        %v729 = vadd.f32 %v728, %v545
        %v730 = vadd.f32 %v729, %v547
        %v731 = vadd.f32 %v730, %v549
        %v732 = vadd.f32 %v731, %v551
        %v733 = vadd.f32 %v732, %v553
        %v734 = vadd.f32 %v733, %v555
        %v735 = vadd.f32 %v734, %v557
        %v736 = vadd.f32 %v735, %v559
        %v737 = vadd.f32 %v736, %v561
        %v738 = vadd.f32 %v737, %v563
        %v739 = vadd.f32 %v738, %v565
        %v740 = vadd.f32 %v739, %v567
        %v741 = vadd.f32 %v740, %v569
        %v742 = vadd.f32 %v741, %v571
        %v743 = vadd.f32 %v742, %v573
        %v744 = vadd.f32 %v743, %v575
        %v745 = vadd.f32 %v744, %v577
        %v746 = vadd.f32 %v745, %v579
        %v747 = vadd.f32 %v746, %v581
        %v748 = vadd.f32 %v747, %v583
        %v749 = vadd.f32 %v748, %v585
        %v750 = vrot.slane %v749, 4
        %v751 = vadd.f32 %v749, %v750
        %v752 = vrot.slane %v751, 2
        %v753 = vadd.f32 %v751, %v752
        %v754 = vrot.slane %v753, 1
        %v755 = vadd.f32 %v753, %v754
        %v756 = vmax.f32 %v588, 1.0
        %v757 = vmax.f32 %v591, 1.0
        %v758 = vmax.f32 %v594, 1.0
        %v759 = vmax.f32 %v597, 1.0
        %v760 = vmax.f32 %v600, 1.0
        %v761 = vmax.f32 %v603, 1.0
        %v762 = vmax.f32 %v606, 1.0
        %v763 = vmax.f32 %v609, 1.0
        %v764 = vmax.f32 %v612, 1.0
        %v765 = vmax.f32 %v615, 1.0
        %v766 = vmax.f32 %v618, 1.0
        %v767 = vmax.f32 %v621, 1.0
        %v768 = vmax.f32 %v624, 1.0
        %v769 = vmax.f32 %v627, 1.0
        %v770 = vmax.f32 %v630, 1.0
        %v771 = vmax.f32 %v633, 1.0
        %v772 = vmax.f32 %v636, 1.0
        %v773 = vmax.f32 %v639, 1.0
        %v774 = vmax.f32 %v642, 1.0
        %v775 = vmax.f32 %v645, 1.0
        %v776 = vmax.f32 %v648, 1.0
        %v777 = vmax.f32 %v651, 1.0
        %v778 = vmax.f32 %v654, 1.0
        %v779 = vmax.f32 %v657, 1.0
        %v780 = vmax.f32 %v660, 1.0
        %v781 = vmax.f32 %v663, 1.0
        %v782 = vmax.f32 %v666, 1.0
        %v783 = vmax.f32 %v669, 1.0
        %v784 = vmax.f32 %v672, 1.0
        %v785 = vmax.f32 %v675, 1.0
        %v786 = vmax.f32 %v678, 1.0
        %v787 = vmax.f32 %v681, 1.0
        %v788 = vrsqrt.pop %v756
        %v789 = vrsqrt.pop %v757
        %v790 = vrsqrt.pop %v758
        %v791 = vrsqrt.pop %v759
        %v792 = vrsqrt.pop %v760
        %v793 = vrsqrt.pop %v761
        %v794 = vrsqrt.pop %v762
        %v795 = vrsqrt.pop %v763
        %v796 = vrsqrt.pop %v764
        %v797 = vrsqrt.pop %v765
        %v798 = vrsqrt.pop %v766
        %v799 = vrsqrt.pop %v767
        %v800 = vrsqrt.pop %v768
        %v801 = vrsqrt.pop %v769
        %v802 = vrsqrt.pop %v770
        %v803 = vrsqrt.pop %v771
        %v804 = vrsqrt.pop %v772
        %v805 = vrsqrt.pop %v773
        %v806 = vrsqrt.pop %v774
        %v807 = vrsqrt.pop %v775
        %v808 = vrsqrt.pop %v776
        %v809 = vrsqrt.pop %v777
        %v810 = vrsqrt.pop %v778
        %v811 = vrsqrt.pop %v779
        %v812 = vrsqrt.pop %v780
        %v813 = vrsqrt.pop %v781
        %v814 = vrsqrt.pop %v782
        %v815 = vrsqrt.pop %v783
        %v816 = vrsqrt.pop %v784
        %v817 = vrsqrt.pop %v785
        %v818 = vrsqrt.pop %v786
        %v819 = vrsqrt.pop %v787
        %v820 = vmax.f32 %v718, 1.0
        %v821 = vmax.f32 %v755, 1.0
        %v822 = vrsqrt.pop %v820
        %v823 = vrsqrt.pop %v821
        %v824 = vmul.f32 %v522, %v788
        %v825 = vmul.f32 %v523, %v788
        %v826 = vmul.f32 %v524, %v789
        %v827 = vmul.f32 %v525, %v789
        %v828 = vmul.f32 %v526, %v790
        %v829 = vmul.f32 %v527, %v790
        %v830 = vmul.f32 %v528, %v791
        %v831 = vmul.f32 %v529, %v791
        %v832 = vmul.f32 %v530, %v792
        %v833 = vmul.f32 %v531, %v792
        %v834 = vmul.f32 %v532, %v793
        %v835 = vmul.f32 %v533, %v793
        %v836 = vmul.f32 %v534, %v794
        %v837 = vmul.f32 %v535, %v794
        %v838 = vmul.f32 %v536, %v795
        %v839 = vmul.f32 %v537, %v795
        %v840 = vmul.f32 %v538, %v796
        %v841 = vmul.f32 %v539, %v796
        %v842 = vmul.f32 %v540, %v797
        %v843 = vmul.f32 %v541, %v797
        %v844 = vmul.f32 %v542, %v798
        %v845 = vmul.f32 %v543, %v798
        %v846 = vmul.f32 %v544, %v799
        %v847 = vmul.f32 %v545, %v799
        %v848 = vmul.f32 %v546, %v800
        %v849 = vmul.f32 %v547, %v800
        %v850 = vmul.f32 %v548, %v801
        %v851 = vmul.f32 %v549, %v801
        %v852 = vmul.f32 %v550, %v802
        %v853 = vmul.f32 %v551, %v802
        %v854 = vmul.f32 %v552, %v803
        %v855 = vmul.f32 %v553, %v803
        %v856 = vmul.f32 %v554, %v804
        %v857 = vmul.f32 %v555, %v804
        %v858 = vmul.f32 %v556, %v805
        %v859 = vmul.f32 %v557, %v805
        %v860 = vmul.f32 %v558, %v806
        %v861 = vmul.f32 %v559, %v806
        %v862 = vmul.f32 %v560, %v807
        %v863 = vmul.f32 %v561, %v807
        %v864 = vmul.f32 %v562, %v808
        %v865 = vmul.f32 %v563, %v808
        %v866 = vmul.f32 %v564, %v809
        %v867 = vmul.f32 %v565, %v809
        %v868 = vmul.f32 %v566, %v810
        %v869 = vmul.f32 %v567, %v810
        %v870 = vmul.f32 %v568, %v811
        %v871 = vmul.f32 %v569, %v811
        %v872 = vmul.f32 %v570, %v812
        %v873 = vmul.f32 %v571, %v812
        %v874 = vmul.f32 %v572, %v813
        %v875 = vmul.f32 %v573, %v813
        %v876 = vmul.f32 %v574, %v814
        %v877 = vmul.f32 %v575, %v814
        %v878 = vmul.f32 %v576, %v815
        %v879 = vmul.f32 %v577, %v815
        %v880 = vmul.f32 %v578, %v816
        %v881 = vmul.f32 %v579, %v816
        %v882 = vmul.f32 %v580, %v817
        %v883 = vmul.f32 %v581, %v817
        %v884 = vmul.f32 %v582, %v818
        %v885 = vmul.f32 %v583, %v818
        %v886 = vmul.f32 %v584, %v819
        %v887 = vmul.f32 %v585, %v819
        %v888 = vmul.f32 %v824, %v822
        %v889 = vmul.f32 %v825, %v823
        %v890 = vmul.f32 %v826, %v822
        %v891 = vmul.f32 %v827, %v823
        %v892 = vmul.f32 %v828, %v822
        %v893 = vmul.f32 %v829, %v823
        %v894 = vmul.f32 %v830, %v822
        %v895 = vmul.f32 %v831, %v823
        %v896 = vmul.f32 %v832, %v822
        %v897 = vmul.f32 %v833, %v823
        %v898 = vmul.f32 %v834, %v822
        %v899 = vmul.f32 %v835, %v823
        %v900 = vmul.f32 %v836, %v822
        %v901 = vmul.f32 %v837, %v823
        %v902 = vmul.f32 %v838, %v822
        %v903 = vmul.f32 %v839, %v823
        %v904 = vmul.f32 %v840, %v822
        %v905 = vmul.f32 %v841, %v823
        %v906 = vmul.f32 %v842, %v822
        %v907 = vmul.f32 %v843, %v823
        %v908 = vmul.f32 %v844, %v822
        %v909 = vmul.f32 %v845, %v823
        %v910 = vmul.f32 %v846, %v822
        %v911 = vmul.f32 %v847, %v823
        %v912 = vmul.f32 %v848, %v822
        %v913 = vmul.f32 %v849, %v823
        %v914 = vmul.f32 %v850, %v822
        %v915 = vmul.f32 %v851, %v823
        %v916 = vmul.f32 %v852, %v822
        %v917 = vmul.f32 %v853, %v823
        %v918 = vmul.f32 %v854, %v822
        %v919 = vmul.f32 %v855, %v823
        %v920 = vmul.f32 %v856, %v822
        %v921 = vmul.f32 %v857, %v823
        %v922 = vmul.f32 %v858, %v822
        %v923 = vmul.f32 %v859, %v823
        %v924 = vmul.f32 %v860, %v822
        %v925 = vmul.f32 %v861, %v823
        %v926 = vmul.f32 %v862, %v822
        %v927 = vmul.f32 %v863, %v823
        %v928 = vmul.f32 %v864, %v822
        %v929 = vmul.f32 %v865, %v823
        %v930 = vmul.f32 %v866, %v822
        %v931 = vmul.f32 %v867, %v823
        %v932 = vmul.f32 %v868, %v822
        %v933 = vmul.f32 %v869, %v823
        %v934 = vmul.f32 %v870, %v822
        %v935 = vmul.f32 %v871, %v823
        %v936 = vmul.f32 %v872, %v822
        %v937 = vmul.f32 %v873, %v823
        %v938 = vmul.f32 %v874, %v822
        %v939 = vmul.f32 %v875, %v823
        %v940 = vmul.f32 %v876, %v822
        %v941 = vmul.f32 %v877, %v823
        %v942 = vmul.f32 %v878, %v822
        %v943 = vmul.f32 %v879, %v823
        %v944 = vmul.f32 %v880, %v822
        %v945 = vmul.f32 %v881, %v823
        %v946 = vmul.f32 %v882, %v822
        %v947 = vmul.f32 %v883, %v823
        %v948 = vmul.f32 %v884, %v822
        %v949 = vmul.f32 %v885, %v823
        %v950 = vmul.f32 %v886, %v822
        %v951 = vmul.f32 %v887, %v823
        %v952 = vpack.c.bf16 %v890, %v888
        %v953 = vpack.c.bf16 %v891, %v889
        %v954 = vpack.c.bf16 %v894, %v892
        %v955 = vpack.c.bf16 %v895, %v893
        %v956 = vpack.c.bf16 %v898, %v896
        %v957 = vpack.c.bf16 %v899, %v897
        %v958 = vpack.c.bf16 %v902, %v900
        %v959 = vpack.c.bf16 %v903, %v901
        %v960 = vpack.c.bf16 %v906, %v904
        %v961 = vpack.c.bf16 %v907, %v905
        %v962 = vpack.c.bf16 %v910, %v908
        %v963 = vpack.c.bf16 %v911, %v909
        %v964 = vpack.c.bf16 %v914, %v912
        %v965 = vpack.c.bf16 %v915, %v913
        %v966 = vpack.c.bf16 %v918, %v916
        %v967 = vpack.c.bf16 %v919, %v917
        %v968 = vpack.c.bf16 %v922, %v920
        %v969 = vpack.c.bf16 %v923, %v921
        %v970 = vpack.c.bf16 %v926, %v924
        %v971 = vpack.c.bf16 %v927, %v925
        %v972 = vpack.c.bf16 %v930, %v928
        %v973 = vpack.c.bf16 %v931, %v929
        %v974 = vpack.c.bf16 %v934, %v932
        %v975 = vpack.c.bf16 %v935, %v933
        %v976 = vpack.c.bf16 %v938, %v936
        %v977 = vpack.c.bf16 %v939, %v937
        %v978 = vpack.c.bf16 %v942, %v940
        %v979 = vpack.c.bf16 %v943, %v941
        %v980 = vpack.c.bf16 %v946, %v944
        %v981 = vpack.c.bf16 %v947, %v945
        %v982 = vpack.c.bf16 %v950, %v948
        %v983 = vpack.c.bf16 %v951, %v949
        %v984 = vld [vmem:[%s483] sm:$0xff]
        %v985 = vld [vmem:[%s483 + $0x8] sm:$0xff]
        %v986 = vld [vmem:[%s483 + $0x10] sm:$0xff]
        %v987 = vld [vmem:[%s483 + $0x18] sm:$0xff]
        %v988 = vld [vmem:[%s483 + $0x20] sm:$0xff]
        %v989 = vld [vmem:[%s483 + $0x28] sm:$0xff]
        %v990 = vld [vmem:[%s483 + $0x30] sm:$0xff]
        %v991 = vld [vmem:[%s483 + $0x38] sm:$0xff]
        %v992 = vld [vmem:[%s483 + $0x40] sm:$0xff]
        %v993 = vld [vmem:[%s483 + $0x48] sm:$0xff]
        %v994 = vld [vmem:[%s483 + $0x50] sm:$0xff]
        %v995 = vld [vmem:[%s483 + $0x58] sm:$0xff]
        %v996 = vld [vmem:[%s483 + $0x60] sm:$0xff]
        %v997 = vld [vmem:[%s483 + $0x68] sm:$0xff]
        %v998 = vld [vmem:[%s483 + $0x70] sm:$0xff]
        %v999 = vld [vmem:[%s483 + $0x78] sm:$0xff]
        %v1000 = vld [vmem:[%s483 + $0x80] sm:$0xff]
        %v1001 = vld [vmem:[%s483 + $0x88] sm:$0xff]
        %v1002 = vld [vmem:[%s483 + $0x90] sm:$0xff]
        %v1003 = vld [vmem:[%s483 + $0x98] sm:$0xff]
        %v1004 = vld [vmem:[%s483 + $0xa0] sm:$0xff]
        %v1005 = vld [vmem:[%s483 + $0xa8] sm:$0xff]
        %v1006 = vld [vmem:[%s483 + $0xb0] sm:$0xff]
        %v1007 = vld [vmem:[%s483 + $0xb8] sm:$0xff]
        %v1008 = vld [vmem:[%s483 + $0xc0] sm:$0xff]
        %v1009 = vld [vmem:[%s483 + $0xc8] sm:$0xff]
        %v1010 = vld [vmem:[%s483 + $0xd0] sm:$0xff]
        %v1011 = vld [vmem:[%s483 + $0xd8] sm:$0xff]
        %v1012 = vld [vmem:[%s483 + $0xe0] sm:$0xff]
        %v1013 = vld [vmem:[%s483 + $0xe8] sm:$0xff]
        %v1014 = vld [vmem:[%s483 + $0xf0] sm:$0xff]
        %v1015 = vld [vmem:[%s483 + $0xf8] sm:$0xff]
        %v1016 = vpack.c.bf16 %v985, %v984
        %v1017 = vpack.c.bf16 %v987, %v986
        %v1018 = vpack.c.bf16 %v989, %v988
        %v1019 = vpack.c.bf16 %v991, %v990
        %v1020 = vpack.c.bf16 %v993, %v992
        %v1021 = vpack.c.bf16 %v995, %v994
        %v1022 = vpack.c.bf16 %v997, %v996
        %v1023 = vpack.c.bf16 %v999, %v998
        %v1024 = vpack.c.bf16 %v1001, %v1000
        %v1025 = vpack.c.bf16 %v1003, %v1002
        %v1026 = vpack.c.bf16 %v1005, %v1004
        %v1027 = vpack.c.bf16 %v1007, %v1006
        %v1028 = vpack.c.bf16 %v1009, %v1008
        %v1029 = vpack.c.bf16 %v1011, %v1010
        %v1030 = vpack.c.bf16 %v1013, %v1012
        %v1031 = vpack.c.bf16 %v1015, %v1014
        %1032 = vmatprep.subr.bf16.mxu0 0
        %1033 = vmatpush1.bf16.msra.mxu0 %v1016
        %1034 = vmatprep.subr.bf16.mxu0 0
        %1035 = vmatpush1.bf16.msra.mxu0 %v1017
        %1036 = vmatprep.subr.bf16.mxu0 0
        %1037 = vmatpush1.bf16.msra.mxu0 %v1018
        %1038 = vmatprep.subr.bf16.mxu0 0
        %1039 = vmatpush1.bf16.msra.mxu0 %v1019
        %1040 = vmatprep.subr.bf16.mxu0 0
        %1041 = vmatpush1.bf16.msra.mxu0 %v1020
        %1042 = vmatprep.subr.bf16.mxu0 0
        %1043 = vmatpush1.bf16.msra.mxu0 %v1021
        %1044 = vmatprep.subr.bf16.mxu0 0
        %1045 = vmatpush1.bf16.msra.mxu0 %v1022
        %1046 = vmatprep.subr.bf16.mxu0 0
        %1047 = vmatpush1.bf16.msra.mxu0 %v1023
        %1048 = vmatprep.subr.bf16.mxu0 0
        %1049 = vmatpush1.bf16.msra.mxu0 %v1024
        %1050 = vmatprep.subr.bf16.mxu0 0
        %1051 = vmatpush1.bf16.msra.mxu0 %v1025
        %1052 = vmatprep.subr.bf16.mxu0 0
        %1053 = vmatpush1.bf16.msra.mxu0 %v1026
        %1054 = vmatprep.subr.bf16.mxu0 0
        %1055 = vmatpush1.bf16.msra.mxu0 %v1027
        %1056 = vmatprep.subr.bf16.mxu0 0
        %1057 = vmatpush1.bf16.msra.mxu0 %v1028
        %1058 = vmatprep.subr.bf16.mxu0 0
        %1059 = vmatpush1.bf16.msra.mxu0 %v1029
        %1060 = vmatprep.subr.bf16.mxu0 0
        %1061 = vmatpush1.bf16.msra.mxu0 %v1030
        %1062 = vmatprep.subr.bf16.mxu0 0
        %1063 = vmatpush1.bf16.msra.mxu0 %v1031
        %1064 = vmatprep.mubr.bf16.mxu0 %v953
        %1065 = vmatmul.mubr.bf16.gmra.mrb[0].mxu0 %v952
        %v1066 = vpop.f32.mrb[0].mxu0
        %v1067 = vadd.f32 0.0, %v1066
        %v1068 = vpop.f32.mrb[0].mxu0
        %v1069 = vpop.f32.mrb[0].mxu0
        %v1070 = vadd.f32 0.0, %v1069
        %v1071 = vpop.f32.mrb[0].mxu0
        %1072 = vmatprep.mubr.bf16.mxu0 %v955
        %1073 = vmatmul.mubr.bf16.gmra.mrb[0].mxu0 %v954
        %v1074 = vpop.f32.mrb[0].mxu0
        %v1075 = vadd.f32 0.0, %v1074
        %v1076 = vpop.f32.mrb[0].mxu0
        %v1077 = vpop.f32.mrb[0].mxu0
        %v1078 = vadd.f32 0.0, %v1077
        %v1079 = vpop.f32.mrb[0].mxu0
        %1080 = vmatprep.mubr.bf16.mxu0 %v957
        %1081 = vmatmul.mubr.bf16.gmra.mrb[0].mxu0 %v956
        %v1082 = vpop.f32.mrb[0].mxu0
        %v1083 = vadd.f32 0.0, %v1082
        %v1084 = vpop.f32.mrb[0].mxu0
        %v1085 = vpop.f32.mrb[0].mxu0
        %v1086 = vadd.f32 0.0, %v1085
        %v1087 = vpop.f32.mrb[0].mxu0
        %1088 = vmatprep.mubr.bf16.mxu0 %v959
        %1089 = vmatmul.mubr.bf16.gmra.mrb[0].mxu0 %v958
        %v1090 = vpop.f32.mrb[0].mxu0
        %v1091 = vadd.f32 0.0, %v1090
        %v1092 = vpop.f32.mrb[0].mxu0
        %v1093 = vpop.f32.mrb[0].mxu0
        %v1094 = vadd.f32 0.0, %v1093
        %v1095 = vpop.f32.mrb[0].mxu0
        %1096 = vmatprep.mubr.bf16.mxu0 %v961
        %1097 = vmatmul.mubr.bf16.gmra.mrb[0].mxu0 %v960
        %v1098 = vpop.f32.mrb[0].mxu0
        %v1099 = vadd.f32 0.0, %v1098
        %v1100 = vpop.f32.mrb[0].mxu0
        %v1101 = vpop.f32.mrb[0].mxu0
        %v1102 = vadd.f32 0.0, %v1101
        %v1103 = vpop.f32.mrb[0].mxu0
        %1104 = vmatprep.mubr.bf16.mxu0 %v963
        %1105 = vmatmul.mubr.bf16.gmra.mrb[0].mxu0 %v962
        %v1106 = vpop.f32.mrb[0].mxu0
        %v1107 = vadd.f32 0.0, %v1106
        %v1108 = vpop.f32.mrb[0].mxu0
        %v1109 = vpop.f32.mrb[0].mxu0
        %v1110 = vadd.f32 0.0, %v1109
        %v1111 = vpop.f32.mrb[0].mxu0
        %1112 = vmatprep.mubr.bf16.mxu0 %v965
        %1113 = vmatmul.mubr.bf16.gmra.mrb[0].mxu0 %v964
        %v1114 = vpop.f32.mrb[0].mxu0
        %v1115 = vadd.f32 0.0, %v1114
        %v1116 = vpop.f32.mrb[0].mxu0
        %v1117 = vpop.f32.mrb[0].mxu0
        %v1118 = vadd.f32 0.0, %v1117
        %v1119 = vpop.f32.mrb[0].mxu0
        %1120 = vmatprep.mubr.bf16.mxu0 %v967
        %1121 = vmatmul.mubr.bf16.gmra.mrb[0].mxu0 %v966
        %v1122 = vpop.f32.mrb[0].mxu0
        %v1123 = vadd.f32 0.0, %v1122
        %v1124 = vpop.f32.mrb[0].mxu0
        %v1125 = vpop.f32.mrb[0].mxu0
        %v1126 = vadd.f32 0.0, %v1125
        %v1127 = vpop.f32.mrb[0].mxu0
        %1128 = vmatprep.mubr.bf16.mxu0 %v969
        %1129 = vmatmul.mubr.bf16.gmra.mrb[0].mxu0 %v968
        %v1130 = vpop.f32.mrb[0].mxu0
        %v1131 = vadd.f32 0.0, %v1130
        %v1132 = vpop.f32.mrb[0].mxu0
        %v1133 = vpop.f32.mrb[0].mxu0
        %v1134 = vadd.f32 0.0, %v1133
        %v1135 = vpop.f32.mrb[0].mxu0
        %1136 = vmatprep.mubr.bf16.mxu0 %v971
        %1137 = vmatmul.mubr.bf16.gmra.mrb[0].mxu0 %v970
        %v1138 = vpop.f32.mrb[0].mxu0
        %v1139 = vadd.f32 0.0, %v1138
        %v1140 = vpop.f32.mrb[0].mxu0
        %v1141 = vpop.f32.mrb[0].mxu0
        %v1142 = vadd.f32 0.0, %v1141
        %v1143 = vpop.f32.mrb[0].mxu0
        %1144 = vmatprep.mubr.bf16.mxu0 %v973
        %1145 = vmatmul.mubr.bf16.gmra.mrb[0].mxu0 %v972
        %v1146 = vpop.f32.mrb[0].mxu0
        %v1147 = vadd.f32 0.0, %v1146
        %v1148 = vpop.f32.mrb[0].mxu0
        %v1149 = vpop.f32.mrb[0].mxu0
        %v1150 = vadd.f32 0.0, %v1149
        %v1151 = vpop.f32.mrb[0].mxu0
        %1152 = vmatprep.mubr.bf16.mxu0 %v975
        %1153 = vmatmul.mubr.bf16.gmra.mrb[0].mxu0 %v974
        %v1154 = vpop.f32.mrb[0].mxu0
        %v1155 = vadd.f32 0.0, %v1154
        %v1156 = vpop.f32.mrb[0].mxu0
        %v1157 = vpop.f32.mrb[0].mxu0
        %v1158 = vadd.f32 0.0, %v1157
        %v1159 = vpop.f32.mrb[0].mxu0
        %1160 = vmatprep.mubr.bf16.mxu0 %v977
        %1161 = vmatmul.mubr.bf16.gmra.mrb[0].mxu0 %v976
        %v1162 = vpop.f32.mrb[0].mxu0
        %v1163 = vadd.f32 0.0, %v1162
        %v1164 = vpop.f32.mrb[0].mxu0
        %v1165 = vpop.f32.mrb[0].mxu0
        %v1166 = vadd.f32 0.0, %v1165
        %v1167 = vpop.f32.mrb[0].mxu0
        %1168 = vmatprep.mubr.bf16.mxu0 %v979
        %1169 = vmatmul.mubr.bf16.gmra.mrb[0].mxu0 %v978
        %v1170 = vpop.f32.mrb[0].mxu0
        %v1171 = vadd.f32 0.0, %v1170
        %v1172 = vpop.f32.mrb[0].mxu0
        %v1173 = vpop.f32.mrb[0].mxu0
        %v1174 = vadd.f32 0.0, %v1173
        %v1175 = vpop.f32.mrb[0].mxu0
        %1176 = vmatprep.mubr.bf16.mxu0 %v981
        %1177 = vmatmul.mubr.bf16.gmra.mrb[0].mxu0 %v980
        %v1178 = vpop.f32.mrb[0].mxu0
        %v1179 = vadd.f32 0.0, %v1178
        %v1180 = vpop.f32.mrb[0].mxu0
        %v1181 = vpop.f32.mrb[0].mxu0
        %v1182 = vadd.f32 0.0, %v1181
        %v1183 = vpop.f32.mrb[0].mxu0
        %1184 = vmatprep.mubr.bf16.mxu0 %v983
        %1185 = vmatmul.mubr.bf16.gmra.mrb[0].mxu0 %v982
        %v1186 = vpop.f32.mrb[0].mxu0
        %v1187 = vadd.f32 0.0, %v1186
        %v1188 = vpop.f32.mrb[0].mxu0
        %v1189 = vpop.f32.mrb[0].mxu0
        %v1190 = vadd.f32 0.0, %v1189
        %v1191 = vpop.f32.mrb[0].mxu0
        %1192 = vdwg.mxu0
        %v1193 = vpack.c.bf16 %v1070, %v1067
        %v1194 = vpack.c.bf16 %v1078, %v1075
        %v1195 = vpack.c.bf16 %v1086, %v1083
        %v1196 = vpack.c.bf16 %v1094, %v1091
        %v1197 = vpack.c.bf16 %v1102, %v1099
        %v1198 = vpack.c.bf16 %v1110, %v1107
        %v1199 = vpack.c.bf16 %v1118, %v1115
        %v1200 = vpack.c.bf16 %v1126, %v1123
        %v1201 = vpack.c.bf16 %v1134, %v1131
        %v1202 = vpack.c.bf16 %v1142, %v1139
        %v1203 = vpack.c.bf16 %v1150, %v1147
        %v1204 = vpack.c.bf16 %v1158, %v1155
        %v1205 = vpack.c.bf16 %v1166, %v1163
        %v1206 = vpack.c.bf16 %v1174, %v1171
        %v1207 = vpack.c.bf16 %v1182, %v1179
        %v1208 = vpack.c.bf16 %v1190, %v1187
        %v1209 = vld [vmem:[#allocation2] sm:$0xff]
        %v1210 = vld [vmem:[#allocation2 + $0x8] sm:$0xff]
        %v1211 = vld [vmem:[#allocation2 + $0x10] sm:$0xff]
        %v1212 = vld [vmem:[#allocation2 + $0x18] sm:$0xff]
        %v1213 = vld [vmem:[%s3] sm:$0x3]
        %v1215 = vlaneseq
        %v1216 = vshrl.u32 %v1215, 7
        %v1217 = vsub.s32 0, %v1216
        %v1218 = vrot.slane %v1213, %v1217
        %v1219 = vlaneseq
        %v1220 = vshrl.u32 %v1219, 7
        %v1221 = vsub.s32 1, %v1220
        %v1222 = vrot.slane %v1213, %v1221
        %v1229 = vunpack.c.l.b16 %v1209
        %v1230 = vunpack.c.h.b16 %v1209
        %v1231 = vunpack.c.l.b16 %v1210
        %v1232 = vunpack.c.h.b16 %v1210
        %v1233 = vunpack.c.l.b16 %v1211
        %v1234 = vunpack.c.h.b16 %v1211
        %v1235 = vunpack.c.l.b16 %v1212
        %v1236 = vunpack.c.h.b16 %v1212
        %v1237 = vpack.c.b16 %v1231, %v1229
        %v1238 = vpack.c.b16 %v1232, %v1230
        %v1239 = vpack.c.b16 %v1235, %v1233
        %v1240 = vpack.c.b16 %v1236, %v1234
        %vm1245 = vcmask 261120
        %v1247 = vsel %vm1245, %v1193, 0
        %v1250 = vsel %vm1245, %v1194, 0
        %v1253 = vsel %vm1245, %v1195, 0
        %v1256 = vsel %vm1245, %v1196, 0
        %v1259 = vsel %vm1245, %v1197, 0
        %v1262 = vsel %vm1245, %v1198, 0
        %v1265 = vsel %vm1245, %v1199, 0
        %v1268 = vsel %vm1245, %v1200, 0
        %v1271 = vsel %vm1245, %v1201, 0
        %v1274 = vsel %vm1245, %v1202, 0
        %v1277 = vsel %vm1245, %v1203, 0
        %v1280 = vsel %vm1245, %v1204, 0
        %v1283 = vsel %vm1245, %v1205, 0
        %v1286 = vsel %vm1245, %v1206, 0
        %v1289 = vsel %vm1245, %v1207, 0
        %v1292 = vsel %vm1245, %v1208, 0
        %1294 = vmatprep.subr.bf16.mxu0 %v1238
        %1295 = vmatpush1.bf16.msra.mxu0 %v1237
        %1296 = vmatprep.subr.bf16.mxu0 %v1240
        %1297 = vmatpush1.bf16.msra.mxu0 %v1239
        %1298 = vmatprep.subr.bf16.mxu0 0
        %1299 = vmatpush1.bf16.msra.mxu0 0
        %1300 = vmatprep.subr.bf16.mxu0 0
        %1301 = vmatpush1.bf16.msra.mxu0 0
        %1302 = vmatprep.subr.bf16.mxu0 0
        %1303 = vmatpush1.bf16.msra.mxu0 0
        %1304 = vmatprep.subr.bf16.mxu0 0
        %1305 = vmatpush1.bf16.msra.mxu0 0
        %1306 = vmatprep.subr.bf16.mxu0 0
        %1307 = vmatpush1.bf16.msra.mxu0 0
        %1308 = vmatprep.subr.bf16.mxu0 0
        %1309 = vmatpush1.bf16.msra.mxu0 0
        %1310 = vmatprep.subr.bf16.mxu0 0
        %1311 = vmatpush1.bf16.msra.mxu0 0
        %1312 = vmatprep.subr.bf16.mxu0 0
        %1313 = vmatpush1.bf16.msra.mxu0 0
        %1314 = vmatprep.subr.bf16.mxu0 0
        %1315 = vmatpush1.bf16.msra.mxu0 0
        %1316 = vmatprep.subr.bf16.mxu0 0
        %1317 = vmatpush1.bf16.msra.mxu0 0
        %1318 = vmatprep.subr.bf16.mxu0 0
        %1319 = vmatpush1.bf16.msra.mxu0 0
        %1320 = vmatprep.subr.bf16.mxu0 0
        %1321 = vmatpush1.bf16.msra.mxu0 0
        %1322 = vmatprep.subr.bf16.mxu0 0
        %1323 = vmatpush1.bf16.msra.mxu0 0
        %1324 = vmatprep.subr.bf16.mxu0 0
        %1325 = vmatpush1.bf16.msra.mxu0 0
        %1326 = vmatprep.mubr.bf16.mxu0 0
        %1327 = vmatmul.mubr.bf16.gmra.mrb[0].mxu0 %v1247
        %v1328 = vpop.f32.mrb[0].mxu0
        %v1329 = vadd.f32 %v1218, %v1328
        %v1330 = vpop.f32.mrb[0].mxu0
        %v1331 = vadd.f32 %v1222, %v1330
        %v1332 = vpop.f32.mrb[0].mxu0
        %v1333 = vadd.f32 %v1218, %v1332
        %v1334 = vpop.f32.mrb[0].mxu0
        %v1335 = vadd.f32 %v1222, %v1334
        %1336 = vmatprep.mubr.bf16.mxu0 0
        %1337 = vmatmul.mubr.bf16.gmra.mrb[0].mxu0 %v1250
        %v1338 = vpop.f32.mrb[0].mxu0
        %v1339 = vadd.f32 %v1218, %v1338
        %v1340 = vpop.f32.mrb[0].mxu0
        %v1341 = vadd.f32 %v1222, %v1340
        %v1342 = vpop.f32.mrb[0].mxu0
        %v1343 = vadd.f32 %v1218, %v1342
        %v1344 = vpop.f32.mrb[0].mxu0
        %v1345 = vadd.f32 %v1222, %v1344
        %1346 = vmatprep.mubr.bf16.mxu0 0
        %1347 = vmatmul.mubr.bf16.gmra.mrb[0].mxu0 %v1253
        %v1348 = vpop.f32.mrb[0].mxu0
        %v1349 = vadd.f32 %v1218, %v1348
        %v1350 = vpop.f32.mrb[0].mxu0
        %v1351 = vadd.f32 %v1222, %v1350
        %v1352 = vpop.f32.mrb[0].mxu0
        %v1353 = vadd.f32 %v1218, %v1352
        %v1354 = vpop.f32.mrb[0].mxu0
        %v1355 = vadd.f32 %v1222, %v1354
        %1356 = vmatprep.mubr.bf16.mxu0 0
        %1357 = vmatmul.mubr.bf16.gmra.mrb[0].mxu0 %v1256
        %v1358 = vpop.f32.mrb[0].mxu0
        %v1359 = vadd.f32 %v1218, %v1358
        %v1360 = vpop.f32.mrb[0].mxu0
        %v1361 = vadd.f32 %v1222, %v1360
        %v1362 = vpop.f32.mrb[0].mxu0
        %v1363 = vadd.f32 %v1218, %v1362
        %v1364 = vpop.f32.mrb[0].mxu0
        %v1365 = vadd.f32 %v1222, %v1364
        %1366 = vmatprep.mubr.bf16.mxu0 0
        %1367 = vmatmul.mubr.bf16.gmra.mrb[0].mxu0 %v1259
        %v1368 = vpop.f32.mrb[0].mxu0
        %v1369 = vadd.f32 %v1218, %v1368
        %v1370 = vpop.f32.mrb[0].mxu0
        %v1371 = vadd.f32 %v1222, %v1370
        %v1372 = vpop.f32.mrb[0].mxu0
        %v1373 = vadd.f32 %v1218, %v1372
        %v1374 = vpop.f32.mrb[0].mxu0
        %v1375 = vadd.f32 %v1222, %v1374
        %1376 = vmatprep.mubr.bf16.mxu0 0
        %1377 = vmatmul.mubr.bf16.gmra.mrb[0].mxu0 %v1262
        %v1378 = vpop.f32.mrb[0].mxu0
        %v1379 = vadd.f32 %v1218, %v1378
        %v1380 = vpop.f32.mrb[0].mxu0
        %v1381 = vadd.f32 %v1222, %v1380
        %v1382 = vpop.f32.mrb[0].mxu0
        %v1383 = vadd.f32 %v1218, %v1382
        %v1384 = vpop.f32.mrb[0].mxu0
        %v1385 = vadd.f32 %v1222, %v1384
        %1386 = vmatprep.mubr.bf16.mxu0 0
        %1387 = vmatmul.mubr.bf16.gmra.mrb[0].mxu0 %v1265
        %v1388 = vpop.f32.mrb[0].mxu0
        %v1389 = vadd.f32 %v1218, %v1388
        %v1390 = vpop.f32.mrb[0].mxu0
        %v1391 = vadd.f32 %v1222, %v1390
        %v1392 = vpop.f32.mrb[0].mxu0
        %v1393 = vadd.f32 %v1218, %v1392
        %v1394 = vpop.f32.mrb[0].mxu0
        %v1395 = vadd.f32 %v1222, %v1394
        %1396 = vmatprep.mubr.bf16.mxu0 0
        %1397 = vmatmul.mubr.bf16.gmra.mrb[0].mxu0 %v1268
        %v1398 = vpop.f32.mrb[0].mxu0
        %v1399 = vadd.f32 %v1218, %v1398
        %v1400 = vpop.f32.mrb[0].mxu0
        %v1401 = vadd.f32 %v1222, %v1400
        %v1402 = vpop.f32.mrb[0].mxu0
        %v1403 = vadd.f32 %v1218, %v1402
        %v1404 = vpop.f32.mrb[0].mxu0
        %v1405 = vadd.f32 %v1222, %v1404
        %1406 = vmatprep.mubr.bf16.mxu0 0
        %1407 = vmatmul.mubr.bf16.gmra.mrb[0].mxu0 %v1271
        %v1408 = vpop.f32.mrb[0].mxu0
        %v1409 = vadd.f32 %v1218, %v1408
        %v1410 = vpop.f32.mrb[0].mxu0
        %v1411 = vadd.f32 %v1222, %v1410
        %v1412 = vpop.f32.mrb[0].mxu0
        %v1413 = vadd.f32 %v1218, %v1412
        %v1414 = vpop.f32.mrb[0].mxu0
        %v1415 = vadd.f32 %v1222, %v1414
        %1416 = vmatprep.mubr.bf16.mxu0 0
        %1417 = vmatmul.mubr.bf16.gmra.mrb[0].mxu0 %v1274
        %v1418 = vpop.f32.mrb[0].mxu0
        %v1419 = vadd.f32 %v1218, %v1418
        %v1420 = vpop.f32.mrb[0].mxu0
        %v1421 = vadd.f32 %v1222, %v1420
        %v1422 = vpop.f32.mrb[0].mxu0
        %v1423 = vadd.f32 %v1218, %v1422
        %v1424 = vpop.f32.mrb[0].mxu0
        %v1425 = vadd.f32 %v1222, %v1424
        %1426 = vmatprep.mubr.bf16.mxu0 0
        %1427 = vmatmul.mubr.bf16.gmra.mrb[0].mxu0 %v1277
        %v1428 = vpop.f32.mrb[0].mxu0
        %v1429 = vadd.f32 %v1218, %v1428
        %v1430 = vpop.f32.mrb[0].mxu0
        %v1431 = vadd.f32 %v1222, %v1430
        %v1432 = vpop.f32.mrb[0].mxu0
        %v1433 = vadd.f32 %v1218, %v1432
        %v1434 = vpop.f32.mrb[0].mxu0
        %v1435 = vadd.f32 %v1222, %v1434
        %1436 = vmatprep.mubr.bf16.mxu0 0
        %1437 = vmatmul.mubr.bf16.gmra.mrb[0].mxu0 %v1280
        %v1438 = vpop.f32.mrb[0].mxu0
        %v1439 = vadd.f32 %v1218, %v1438
        %v1440 = vpop.f32.mrb[0].mxu0
        %v1441 = vadd.f32 %v1222, %v1440
        %v1442 = vpop.f32.mrb[0].mxu0
        %v1443 = vadd.f32 %v1218, %v1442
        %v1444 = vpop.f32.mrb[0].mxu0
        %v1445 = vadd.f32 %v1222, %v1444
        %1446 = vmatprep.mubr.bf16.mxu0 0
        %1447 = vmatmul.mubr.bf16.gmra.mrb[0].mxu0 %v1283
        %v1448 = vpop.f32.mrb[0].mxu0
        %v1449 = vadd.f32 %v1218, %v1448
        %v1450 = vpop.f32.mrb[0].mxu0
        %v1451 = vadd.f32 %v1222, %v1450
        %v1452 = vpop.f32.mrb[0].mxu0
        %v1453 = vadd.f32 %v1218, %v1452
        %v1454 = vpop.f32.mrb[0].mxu0
        %v1455 = vadd.f32 %v1222, %v1454
        %1456 = vmatprep.mubr.bf16.mxu0 0
        %1457 = vmatmul.mubr.bf16.gmra.mrb[0].mxu0 %v1286
        %v1458 = vpop.f32.mrb[0].mxu0
        %v1459 = vadd.f32 %v1218, %v1458
        %v1460 = vpop.f32.mrb[0].mxu0
        %v1461 = vadd.f32 %v1222, %v1460
        %v1462 = vpop.f32.mrb[0].mxu0
        %v1463 = vadd.f32 %v1218, %v1462
        %v1464 = vpop.f32.mrb[0].mxu0
        %v1465 = vadd.f32 %v1222, %v1464
        %1466 = vmatprep.mubr.bf16.mxu0 0
        %1467 = vmatmul.mubr.bf16.gmra.mrb[0].mxu0 %v1289
        %v1468 = vpop.f32.mrb[0].mxu0
        %v1469 = vadd.f32 %v1218, %v1468
        %v1470 = vpop.f32.mrb[0].mxu0
        %v1471 = vadd.f32 %v1222, %v1470
        %v1472 = vpop.f32.mrb[0].mxu0
        %v1473 = vadd.f32 %v1218, %v1472
        %v1474 = vpop.f32.mrb[0].mxu0
        %v1475 = vadd.f32 %v1222, %v1474
        %1476 = vmatprep.mubr.bf16.mxu0 0
        %1477 = vmatmul.mubr.bf16.gmra.mrb[0].mxu0 %v1292
        %v1478 = vpop.f32.mrb[0].mxu0
        %v1479 = vadd.f32 %v1218, %v1478
        %v1480 = vpop.f32.mrb[0].mxu0
        %v1481 = vadd.f32 %v1222, %v1480
        %v1482 = vpop.f32.mrb[0].mxu0
        %v1483 = vadd.f32 %v1218, %v1482
        %v1484 = vpop.f32.mrb[0].mxu0
        %v1485 = vadd.f32 %v1222, %v1484
        %1486 = vdwg.mxu0
        %v1487 = vxor.u32 %v1329, 2147483648
        %v1488 = vxor.u32 %v1331, 2147483648
        %v1489 = vxor.u32 %v1333, 2147483648
        %v1490 = vxor.u32 %v1335, 2147483648
        %v1491 = vxor.u32 %v1339, 2147483648
        %v1492 = vxor.u32 %v1341, 2147483648
        %v1493 = vxor.u32 %v1343, 2147483648
        %v1494 = vxor.u32 %v1345, 2147483648
        %v1495 = vxor.u32 %v1349, 2147483648
        %v1496 = vxor.u32 %v1351, 2147483648
        %v1497 = vxor.u32 %v1353, 2147483648
        %v1498 = vxor.u32 %v1355, 2147483648
        %v1499 = vxor.u32 %v1359, 2147483648
        %v1500 = vxor.u32 %v1361, 2147483648
        %v1501 = vxor.u32 %v1363, 2147483648
        %v1502 = vxor.u32 %v1365, 2147483648
        %v1503 = vxor.u32 %v1369, 2147483648
        %v1504 = vxor.u32 %v1371, 2147483648
        %v1505 = vxor.u32 %v1373, 2147483648
        %v1506 = vxor.u32 %v1375, 2147483648
        %v1507 = vxor.u32 %v1379, 2147483648
        %v1508 = vxor.u32 %v1381, 2147483648
        %v1509 = vxor.u32 %v1383, 2147483648
        %v1510 = vxor.u32 %v1385, 2147483648
        %v1511 = vxor.u32 %v1389, 2147483648
        %v1512 = vxor.u32 %v1391, 2147483648
        %v1513 = vxor.u32 %v1393, 2147483648
        %v1514 = vxor.u32 %v1395, 2147483648
        %v1515 = vxor.u32 %v1399, 2147483648
        %v1516 = vxor.u32 %v1401, 2147483648
        %v1517 = vxor.u32 %v1403, 2147483648
        %v1518 = vxor.u32 %v1405, 2147483648
        %v1519 = vxor.u32 %v1409, 2147483648
        %v1520 = vxor.u32 %v1411, 2147483648
        %v1521 = vxor.u32 %v1413, 2147483648
        %v1522 = vxor.u32 %v1415, 2147483648
        %v1523 = vxor.u32 %v1419, 2147483648
        %v1524 = vxor.u32 %v1421, 2147483648
        %v1525 = vxor.u32 %v1423, 2147483648
        %v1526 = vxor.u32 %v1425, 2147483648
        %v1527 = vxor.u32 %v1429, 2147483648
        %v1528 = vxor.u32 %v1431, 2147483648
        %v1529 = vxor.u32 %v1433, 2147483648
        %v1530 = vxor.u32 %v1435, 2147483648
        %v1531 = vxor.u32 %v1439, 2147483648
        %v1532 = vxor.u32 %v1441, 2147483648
        %v1533 = vxor.u32 %v1443, 2147483648
        %v1534 = vxor.u32 %v1445, 2147483648
        %v1535 = vxor.u32 %v1449, 2147483648
        %v1536 = vxor.u32 %v1451, 2147483648
        %v1537 = vxor.u32 %v1453, 2147483648
        %v1538 = vxor.u32 %v1455, 2147483648
        %v1539 = vxor.u32 %v1459, 2147483648
        %v1540 = vxor.u32 %v1461, 2147483648
        %v1541 = vxor.u32 %v1463, 2147483648
        %v1542 = vxor.u32 %v1465, 2147483648
        %v1543 = vxor.u32 %v1469, 2147483648
        %v1544 = vxor.u32 %v1471, 2147483648
        %v1545 = vxor.u32 %v1473, 2147483648
        %v1546 = vxor.u32 %v1475, 2147483648
        %v1547 = vxor.u32 %v1479, 2147483648
        %v1548 = vxor.u32 %v1481, 2147483648
        %v1549 = vxor.u32 %v1483, 2147483648
        %v1550 = vxor.u32 %v1485, 2147483648
        %v1551 = vmul.f32 %v1487, 1.442695
        %v1552 = vpow.pop %v1551
        %v1553 = vmul.f32 %v1488, 1.442695
        %v1554 = vpow.pop %v1553
        %v1555 = vmul.f32 %v1489, 1.442695
        %v1556 = vpow.pop %v1555
        %v1557 = vmul.f32 %v1490, 1.442695
        %v1558 = vpow.pop %v1557
        %v1559 = vmul.f32 %v1491, 1.442695
        %v1560 = vpow.pop %v1559
        %v1561 = vmul.f32 %v1492, 1.442695
        %v1562 = vpow.pop %v1561
        %v1563 = vmul.f32 %v1493, 1.442695
        %v1564 = vpow.pop %v1563
        %v1565 = vmul.f32 %v1494, 1.442695
        %v1566 = vpow.pop %v1565
        %v1567 = vmul.f32 %v1495, 1.442695
        %v1568 = vpow.pop %v1567
        %v1569 = vmul.f32 %v1496, 1.442695
        %v1570 = vpow.pop %v1569
        %v1571 = vmul.f32 %v1497, 1.442695
        %v1572 = vpow.pop %v1571
        %v1573 = vmul.f32 %v1498, 1.442695
        %v1574 = vpow.pop %v1573
        %v1575 = vmul.f32 %v1499, 1.442695
        %v1576 = vpow.pop %v1575
        %v1577 = vmul.f32 %v1500, 1.442695
        %v1578 = vpow.pop %v1577
        %v1579 = vmul.f32 %v1501, 1.442695
        %v1580 = vpow.pop %v1579
        %v1581 = vmul.f32 %v1502, 1.442695
        %v1582 = vpow.pop %v1581
        %v1583 = vmul.f32 %v1503, 1.442695
        %v1584 = vpow.pop %v1583
        %v1585 = vmul.f32 %v1504, 1.442695
        %v1586 = vpow.pop %v1585
        %v1587 = vmul.f32 %v1505, 1.442695
        %v1588 = vpow.pop %v1587
        %v1589 = vmul.f32 %v1506, 1.442695
        %v1590 = vpow.pop %v1589
        %v1591 = vmul.f32 %v1507, 1.442695
        %v1592 = vpow.pop %v1591
        %v1593 = vmul.f32 %v1508, 1.442695
        %v1594 = vpow.pop %v1593
        %v1595 = vmul.f32 %v1509, 1.442695
        %v1596 = vpow.pop %v1595
        %v1597 = vmul.f32 %v1510, 1.442695
        %v1598 = vpow.pop %v1597
        %v1599 = vmul.f32 %v1511, 1.442695
        %v1600 = vpow.pop %v1599
        %v1601 = vmul.f32 %v1512, 1.442695
        %v1602 = vpow.pop %v1601
        %v1603 = vmul.f32 %v1513, 1.442695
        %v1604 = vpow.pop %v1603
        %v1605 = vmul.f32 %v1514, 1.442695
        %v1606 = vpow.pop %v1605
        %v1607 = vmul.f32 %v1515, 1.442695
        %v1608 = vpow.pop %v1607
        %v1609 = vmul.f32 %v1516, 1.442695
        %v1610 = vpow.pop %v1609
        %v1611 = vmul.f32 %v1517, 1.442695
        %v1612 = vpow.pop %v1611
        %v1613 = vmul.f32 %v1518, 1.442695
        %v1614 = vpow.pop %v1613
        %v1615 = vmul.f32 %v1519, 1.442695
        %v1616 = vpow.pop %v1615
        %v1617 = vmul.f32 %v1520, 1.442695
        %v1618 = vpow.pop %v1617
        %v1619 = vmul.f32 %v1521, 1.442695
        %v1620 = vpow.pop %v1619
        %v1621 = vmul.f32 %v1522, 1.442695
        %v1622 = vpow.pop %v1621
        %v1623 = vmul.f32 %v1523, 1.442695
        %v1624 = vpow.pop %v1623
        %v1625 = vmul.f32 %v1524, 1.442695
        %v1626 = vpow.pop %v1625
        %v1627 = vmul.f32 %v1525, 1.442695
        %v1628 = vpow.pop %v1627
        %v1629 = vmul.f32 %v1526, 1.442695
        %v1630 = vpow.pop %v1629
        %v1631 = vmul.f32 %v1527, 1.442695
        %v1632 = vpow.pop %v1631
        %v1633 = vmul.f32 %v1528, 1.442695
        %v1634 = vpow.pop %v1633
        %v1635 = vmul.f32 %v1529, 1.442695
        %v1636 = vpow.pop %v1635
        %v1637 = vmul.f32 %v1530, 1.442695
        %v1638 = vpow.pop %v1637
        %v1639 = vmul.f32 %v1531, 1.442695
        %v1640 = vpow.pop %v1639
        %v1641 = vmul.f32 %v1532, 1.442695
        %v1642 = vpow.pop %v1641
        %v1643 = vmul.f32 %v1533, 1.442695
        %v1644 = vpow.pop %v1643
        %v1645 = vmul.f32 %v1534, 1.442695
        %v1646 = vpow.pop %v1645
        %v1647 = vmul.f32 %v1535, 1.442695
        %v1648 = vpow.pop %v1647
        %v1649 = vmul.f32 %v1536, 1.442695
        %v1650 = vpow.pop %v1649
        %v1651 = vmul.f32 %v1537, 1.442695
        %v1652 = vpow.pop %v1651
        %v1653 = vmul.f32 %v1538, 1.442695
        %v1654 = vpow.pop %v1653
        %v1655 = vmul.f32 %v1539, 1.442695
        %v1656 = vpow.pop %v1655
        %v1657 = vmul.f32 %v1540, 1.442695
        %v1658 = vpow.pop %v1657
        %v1659 = vmul.f32 %v1541, 1.442695
        %v1660 = vpow.pop %v1659
        %v1661 = vmul.f32 %v1542, 1.442695
        %v1662 = vpow.pop %v1661
        %v1663 = vmul.f32 %v1543, 1.442695
        %v1664 = vpow.pop %v1663
        %v1665 = vmul.f32 %v1544, 1.442695
        %v1666 = vpow.pop %v1665
        %v1667 = vmul.f32 %v1545, 1.442695
        %v1668 = vpow.pop %v1667
        %v1669 = vmul.f32 %v1546, 1.442695
        %v1670 = vpow.pop %v1669
        %v1671 = vmul.f32 %v1547, 1.442695
        %v1672 = vpow.pop %v1671
        %v1673 = vmul.f32 %v1548, 1.442695
        %v1674 = vpow.pop %v1673
        %v1675 = vmul.f32 %v1549, 1.442695
        %v1676 = vpow.pop %v1675
        %v1677 = vmul.f32 %v1550, 1.442695
        %v1678 = vpow.pop %v1677
        %v1679 = vadd.f32 %v1552, 1.0
        %v1680 = vadd.f32 %v1554, 1.0
        %v1681 = vadd.f32 %v1556, 1.0
        %v1682 = vadd.f32 %v1558, 1.0
        %v1683 = vadd.f32 %v1560, 1.0
        %v1684 = vadd.f32 %v1562, 1.0
        %v1685 = vadd.f32 %v1564, 1.0
        %v1686 = vadd.f32 %v1566, 1.0
        %v1687 = vadd.f32 %v1568, 1.0
        %v1688 = vadd.f32 %v1570, 1.0
        %v1689 = vadd.f32 %v1572, 1.0
        %v1690 = vadd.f32 %v1574, 1.0
        %v1691 = vadd.f32 %v1576, 1.0
        %v1692 = vadd.f32 %v1578, 1.0
        %v1693 = vadd.f32 %v1580, 1.0
        %v1694 = vadd.f32 %v1582, 1.0
        %v1695 = vadd.f32 %v1584, 1.0
        %v1696 = vadd.f32 %v1586, 1.0
        %v1697 = vadd.f32 %v1588, 1.0
        %v1698 = vadd.f32 %v1590, 1.0
        %v1699 = vadd.f32 %v1592, 1.0
        %v1700 = vadd.f32 %v1594, 1.0
        %v1701 = vadd.f32 %v1596, 1.0
        %v1702 = vadd.f32 %v1598, 1.0
        %v1703 = vadd.f32 %v1600, 1.0
        %v1704 = vadd.f32 %v1602, 1.0
        %v1705 = vadd.f32 %v1604, 1.0
        %v1706 = vadd.f32 %v1606, 1.0
        %v1707 = vadd.f32 %v1608, 1.0
        %v1708 = vadd.f32 %v1610, 1.0
        %v1709 = vadd.f32 %v1612, 1.0
        %v1710 = vadd.f32 %v1614, 1.0
        %v1711 = vadd.f32 %v1616, 1.0
        %v1712 = vadd.f32 %v1618, 1.0
        %v1713 = vadd.f32 %v1620, 1.0
        %v1714 = vadd.f32 %v1622, 1.0
        %v1715 = vadd.f32 %v1624, 1.0
        %v1716 = vadd.f32 %v1626, 1.0
        %v1717 = vadd.f32 %v1628, 1.0
        %v1718 = vadd.f32 %v1630, 1.0
        %v1719 = vadd.f32 %v1632, 1.0
        %v1720 = vadd.f32 %v1634, 1.0
        %v1721 = vadd.f32 %v1636, 1.0
        %v1722 = vadd.f32 %v1638, 1.0
        %v1723 = vadd.f32 %v1640, 1.0
        %v1724 = vadd.f32 %v1642, 1.0
        %v1725 = vadd.f32 %v1644, 1.0
        %v1726 = vadd.f32 %v1646, 1.0
        %v1727 = vadd.f32 %v1648, 1.0
        %v1728 = vadd.f32 %v1650, 1.0
        %v1729 = vadd.f32 %v1652, 1.0
        %v1730 = vadd.f32 %v1654, 1.0
        %v1731 = vadd.f32 %v1656, 1.0
        %v1732 = vadd.f32 %v1658, 1.0
        %v1733 = vadd.f32 %v1660, 1.0
        %v1734 = vadd.f32 %v1662, 1.0
        %v1735 = vadd.f32 %v1664, 1.0
        %v1736 = vadd.f32 %v1666, 1.0
        %v1737 = vadd.f32 %v1668, 1.0
        %v1738 = vadd.f32 %v1670, 1.0
        %v1739 = vadd.f32 %v1672, 1.0
        %v1740 = vadd.f32 %v1674, 1.0
        %v1741 = vadd.f32 %v1676, 1.0
        %v1742 = vadd.f32 %v1678, 1.0
        %v1743 = vrcp.pop %v1679
        %v1744 = vmul.f32 1.0, %v1743
        %v1745 = vrcp.pop %v1680
        %v1746 = vmul.f32 1.0, %v1745
        %v1747 = vrcp.pop %v1681
        %v1748 = vmul.f32 1.0, %v1747
        %v1749 = vrcp.pop %v1682
        %v1750 = vmul.f32 1.0, %v1749
        %v1751 = vrcp.pop %v1683
        %v1752 = vmul.f32 1.0, %v1751
        %v1753 = vrcp.pop %v1684
        %v1754 = vmul.f32 1.0, %v1753
        %v1755 = vrcp.pop %v1685
        %v1756 = vmul.f32 1.0, %v1755
        %v1757 = vrcp.pop %v1686
        %v1758 = vmul.f32 1.0, %v1757
        %v1759 = vrcp.pop %v1687
        %v1760 = vmul.f32 1.0, %v1759
        %v1761 = vrcp.pop %v1688
        %v1762 = vmul.f32 1.0, %v1761
        %v1763 = vrcp.pop %v1689
        %v1764 = vmul.f32 1.0, %v1763
        %v1765 = vrcp.pop %v1690
        %v1766 = vmul.f32 1.0, %v1765
        %v1767 = vrcp.pop %v1691
        %v1768 = vmul.f32 1.0, %v1767
        %v1769 = vrcp.pop %v1692
        %v1770 = vmul.f32 1.0, %v1769
        %v1771 = vrcp.pop %v1693
        %v1772 = vmul.f32 1.0, %v1771
        %v1773 = vrcp.pop %v1694
        %v1774 = vmul.f32 1.0, %v1773
        %v1775 = vrcp.pop %v1695
        %v1776 = vmul.f32 1.0, %v1775
        %v1777 = vrcp.pop %v1696
        %v1778 = vmul.f32 1.0, %v1777
        %v1779 = vrcp.pop %v1697
        %v1780 = vmul.f32 1.0, %v1779
        %v1781 = vrcp.pop %v1698
        %v1782 = vmul.f32 1.0, %v1781
        %v1783 = vrcp.pop %v1699
        %v1784 = vmul.f32 1.0, %v1783
        %v1785 = vrcp.pop %v1700
        %v1786 = vmul.f32 1.0, %v1785
        %v1787 = vrcp.pop %v1701
        %v1788 = vmul.f32 1.0, %v1787
        %v1789 = vrcp.pop %v1702
        %v1790 = vmul.f32 1.0, %v1789
        %v1791 = vrcp.pop %v1703
        %v1792 = vmul.f32 1.0, %v1791
        %v1793 = vrcp.pop %v1704
        %v1794 = vmul.f32 1.0, %v1793
        %v1795 = vrcp.pop %v1705
        %v1796 = vmul.f32 1.0, %v1795
        %v1797 = vrcp.pop %v1706
        %v1798 = vmul.f32 1.0, %v1797
        %v1799 = vrcp.pop %v1707
        %v1800 = vmul.f32 1.0, %v1799
        %v1801 = vrcp.pop %v1708
        %v1802 = vmul.f32 1.0, %v1801
        %v1803 = vrcp.pop %v1709
        %v1804 = vmul.f32 1.0, %v1803
        %v1805 = vrcp.pop %v1710
        %v1806 = vmul.f32 1.0, %v1805
        %v1807 = vrcp.pop %v1711
        %v1808 = vmul.f32 1.0, %v1807
        %v1809 = vrcp.pop %v1712
        %v1810 = vmul.f32 1.0, %v1809
        %v1811 = vrcp.pop %v1713
        %v1812 = vmul.f32 1.0, %v1811
        %v1813 = vrcp.pop %v1714
        %v1814 = vmul.f32 1.0, %v1813
        %v1815 = vrcp.pop %v1715
        %v1816 = vmul.f32 1.0, %v1815
        %v1817 = vrcp.pop %v1716
        %v1818 = vmul.f32 1.0, %v1817
        %v1819 = vrcp.pop %v1717
        %v1820 = vmul.f32 1.0, %v1819
        %v1821 = vrcp.pop %v1718
        %v1822 = vmul.f32 1.0, %v1821
        %v1823 = vrcp.pop %v1719
        %v1824 = vmul.f32 1.0, %v1823
        %v1825 = vrcp.pop %v1720
        %v1826 = vmul.f32 1.0, %v1825
        %v1827 = vrcp.pop %v1721
        %v1828 = vmul.f32 1.0, %v1827
        %v1829 = vrcp.pop %v1722
        %v1830 = vmul.f32 1.0, %v1829
        %v1831 = vrcp.pop %v1723
        %v1832 = vmul.f32 1.0, %v1831
        %v1833 = vrcp.pop %v1724
        %v1834 = vmul.f32 1.0, %v1833
        %v1835 = vrcp.pop %v1725
        %v1836 = vmul.f32 1.0, %v1835
        %v1837 = vrcp.pop %v1726
        %v1838 = vmul.f32 1.0, %v1837
        %v1839 = vrcp.pop %v1727
        %v1840 = vmul.f32 1.0, %v1839
        %v1841 = vrcp.pop %v1728
        %v1842 = vmul.f32 1.0, %v1841
        %v1843 = vrcp.pop %v1729
        %v1844 = vmul.f32 1.0, %v1843
        %v1845 = vrcp.pop %v1730
        %v1846 = vmul.f32 1.0, %v1845
        %v1847 = vrcp.pop %v1731
        %v1848 = vmul.f32 1.0, %v1847
        %v1849 = vrcp.pop %v1732
        %v1850 = vmul.f32 1.0, %v1849
        %v1851 = vrcp.pop %v1733
        %v1852 = vmul.f32 1.0, %v1851
        %v1853 = vrcp.pop %v1734
        %v1854 = vmul.f32 1.0, %v1853
        %v1855 = vrcp.pop %v1735
        %v1856 = vmul.f32 1.0, %v1855
        %v1857 = vrcp.pop %v1736
        %v1858 = vmul.f32 1.0, %v1857
        %v1859 = vrcp.pop %v1737
        %v1860 = vmul.f32 1.0, %v1859
        %v1861 = vrcp.pop %v1738
        %v1862 = vmul.f32 1.0, %v1861
        %v1863 = vrcp.pop %v1739
        %v1864 = vmul.f32 1.0, %v1863
        %v1865 = vrcp.pop %v1740
        %v1866 = vmul.f32 1.0, %v1865
        %v1867 = vrcp.pop %v1741
        %v1868 = vmul.f32 1.0, %v1867
        %v1869 = vrcp.pop %v1742
        %v1870 = vmul.f32 1.0, %v1869
        %v1871 = vmul.f32 %v1329, %v1744
        %v1872 = vmul.f32 %v1331, %v1746
        %v1873 = vmul.f32 %v1333, %v1748
        %v1874 = vmul.f32 %v1335, %v1750
        %v1875 = vmul.f32 %v1339, %v1752
        %v1876 = vmul.f32 %v1341, %v1754
        %v1877 = vmul.f32 %v1343, %v1756
        %v1878 = vmul.f32 %v1345, %v1758
        %v1879 = vmul.f32 %v1349, %v1760
        %v1880 = vmul.f32 %v1351, %v1762
        %v1881 = vmul.f32 %v1353, %v1764
        %v1882 = vmul.f32 %v1355, %v1766
        %v1883 = vmul.f32 %v1359, %v1768
        %v1884 = vmul.f32 %v1361, %v1770
        %v1885 = vmul.f32 %v1363, %v1772
        %v1886 = vmul.f32 %v1365, %v1774
        %v1887 = vmul.f32 %v1369, %v1776
        %v1888 = vmul.f32 %v1371, %v1778
        %v1889 = vmul.f32 %v1373, %v1780
        %v1890 = vmul.f32 %v1375, %v1782
        %v1891 = vmul.f32 %v1379, %v1784
        %v1892 = vmul.f32 %v1381, %v1786
        %v1893 = vmul.f32 %v1383, %v1788
        %v1894 = vmul.f32 %v1385, %v1790
        %v1895 = vmul.f32 %v1389, %v1792
        %v1896 = vmul.f32 %v1391, %v1794
        %v1897 = vmul.f32 %v1393, %v1796
        %v1898 = vmul.f32 %v1395, %v1798
        %v1899 = vmul.f32 %v1399, %v1800
        %v1900 = vmul.f32 %v1401, %v1802
        %v1901 = vmul.f32 %v1403, %v1804
        %v1902 = vmul.f32 %v1405, %v1806
        %v1903 = vmul.f32 %v1409, %v1808
        %v1904 = vmul.f32 %v1411, %v1810
        %v1905 = vmul.f32 %v1413, %v1812
        %v1906 = vmul.f32 %v1415, %v1814
        %v1907 = vmul.f32 %v1419, %v1816
        %v1908 = vmul.f32 %v1421, %v1818
        %v1909 = vmul.f32 %v1423, %v1820
        %v1910 = vmul.f32 %v1425, %v1822
        %v1911 = vmul.f32 %v1429, %v1824
        %v1912 = vmul.f32 %v1431, %v1826
        %v1913 = vmul.f32 %v1433, %v1828
        %v1914 = vmul.f32 %v1435, %v1830
        %v1915 = vmul.f32 %v1439, %v1832
        %v1916 = vmul.f32 %v1441, %v1834
        %v1917 = vmul.f32 %v1443, %v1836
        %v1918 = vmul.f32 %v1445, %v1838
        %v1919 = vmul.f32 %v1449, %v1840
        %v1920 = vmul.f32 %v1451, %v1842
        %v1921 = vmul.f32 %v1453, %v1844
        %v1922 = vmul.f32 %v1455, %v1846
        %v1923 = vmul.f32 %v1459, %v1848
        %v1924 = vmul.f32 %v1461, %v1850
        %v1925 = vmul.f32 %v1463, %v1852
        %v1926 = vmul.f32 %v1465, %v1854
        %v1927 = vmul.f32 %v1469, %v1856
        %v1928 = vmul.f32 %v1471, %v1858
        %v1929 = vmul.f32 %v1473, %v1860
        %v1930 = vmul.f32 %v1475, %v1862
        %v1931 = vmul.f32 %v1479, %v1864
        %v1932 = vmul.f32 %v1481, %v1866
        %v1933 = vmul.f32 %v1483, %v1868
        %v1934 = vmul.f32 %v1485, %v1870
        %v1935 = vpack.c.bf16 %v1873, %v1871
        %v1936 = vpack.c.bf16 %v1874, %v1872
        %v1937 = vpack.c.bf16 %v1877, %v1875
        %v1938 = vpack.c.bf16 %v1878, %v1876
        %v1939 = vpack.c.bf16 %v1881, %v1879
        %v1940 = vpack.c.bf16 %v1882, %v1880
        %v1941 = vpack.c.bf16 %v1885, %v1883
        %v1942 = vpack.c.bf16 %v1886, %v1884
        %v1943 = vpack.c.bf16 %v1889, %v1887
        %v1944 = vpack.c.bf16 %v1890, %v1888
        %v1945 = vpack.c.bf16 %v1893, %v1891
        %v1946 = vpack.c.bf16 %v1894, %v1892
        %v1947 = vpack.c.bf16 %v1897, %v1895
        %v1948 = vpack.c.bf16 %v1898, %v1896
        %v1949 = vpack.c.bf16 %v1901, %v1899
        %v1950 = vpack.c.bf16 %v1902, %v1900
        %v1951 = vpack.c.bf16 %v1905, %v1903
        %v1952 = vpack.c.bf16 %v1906, %v1904
        %v1953 = vpack.c.bf16 %v1909, %v1907
        %v1954 = vpack.c.bf16 %v1910, %v1908
        %v1955 = vpack.c.bf16 %v1913, %v1911
        %v1956 = vpack.c.bf16 %v1914, %v1912
        %v1957 = vpack.c.bf16 %v1917, %v1915
        %v1958 = vpack.c.bf16 %v1918, %v1916
        %v1959 = vpack.c.bf16 %v1921, %v1919
        %v1960 = vpack.c.bf16 %v1922, %v1920
        %v1961 = vpack.c.bf16 %v1925, %v1923
        %v1962 = vpack.c.bf16 %v1926, %v1924
        %v1963 = vpack.c.bf16 %v1929, %v1927
        %v1964 = vpack.c.bf16 %v1930, %v1928
        %v1965 = vpack.c.bf16 %v1933, %v1931
        %v1966 = vpack.c.bf16 %v1934, %v1932
        %1967 = vmatprep.subr.bf16.mxu0 %v1936
        %1968 = vmatpush1.bf16.msra.mxu0 %v1935
        %1969 = vmatprep.subr.bf16.mxu0 %v1938
        %1970 = vmatpush1.bf16.msra.mxu0 %v1937
        %1971 = vmatprep.subr.bf16.mxu0 %v1940
        %1972 = vmatpush1.bf16.msra.mxu0 %v1939
        %1973 = vmatprep.subr.bf16.mxu0 %v1942
        %1974 = vmatpush1.bf16.msra.mxu0 %v1941
        %1975 = vmatprep.subr.bf16.mxu0 %v1944
        %1976 = vmatpush1.bf16.msra.mxu0 %v1943
        %1977 = vmatprep.subr.bf16.mxu0 %v1946
        %1978 = vmatpush1.bf16.msra.mxu0 %v1945
        %1979 = vmatprep.subr.bf16.mxu0 %v1948
        %1980 = vmatpush1.bf16.msra.mxu0 %v1947
        %1981 = vmatprep.subr.bf16.mxu0 %v1950
        %1982 = vmatpush1.bf16.msra.mxu0 %v1949
        %1983 = vmatprep.subr.bf16.mxu0 %v1952
        %1984 = vmatpush1.bf16.msra.mxu0 %v1951
        %1985 = vmatprep.subr.bf16.mxu0 %v1954
        %1986 = vmatpush1.bf16.msra.mxu0 %v1953
        %1987 = vmatprep.subr.bf16.mxu0 %v1956
        %1988 = vmatpush1.bf16.msra.mxu0 %v1955
        %1989 = vmatprep.subr.bf16.mxu0 %v1958
        %1990 = vmatpush1.bf16.msra.mxu0 %v1957
        %1991 = vmatprep.subr.bf16.mxu0 %v1960
        %1992 = vmatpush1.bf16.msra.mxu0 %v1959
        %1993 = vmatprep.subr.bf16.mxu0 %v1962
        %1994 = vmatpush1.bf16.msra.mxu0 %v1961
        %1995 = vmatprep.subr.bf16.mxu0 %v1964
        %1996 = vmatpush1.bf16.msra.mxu0 %v1963
        %1997 = vmatprep.subr.bf16.mxu0 %v1966
        %1998 = vmatpush1.bf16.msra.mxu0 %v1965
        %1999 = vmatprep.mubr.bf16.mxu0 %v953
        %2000 = vmatmul.mubr.bf16.gmra.mrb[0].mxu0 %v952
        %v2001 = vpop.f32.mrb[0].mxu0
        %v2002 = vadd.f32 0.0, %v2001
        %v2003 = vpop.f32.mrb[0].mxu0
        %v2004 = vadd.f32 0.0, %v2003
        %v2005 = vpop.f32.mrb[0].mxu0
        %v2006 = vadd.f32 0.0, %v2005
        %v2007 = vpop.f32.mrb[0].mxu0
        %v2008 = vadd.f32 0.0, %v2007
        %2009 = vmatprep.mubr.bf16.mxu0 %v955
        %2010 = vmatmul.mubr.bf16.gmra.mrb[0].mxu0 %v954
        %v2011 = vpop.f32.mrb[0].mxu0
        %v2012 = vadd.f32 0.0, %v2011
        %v2013 = vpop.f32.mrb[0].mxu0
        %v2014 = vadd.f32 0.0, %v2013
        %v2015 = vpop.f32.mrb[0].mxu0
        %v2016 = vadd.f32 0.0, %v2015
        %v2017 = vpop.f32.mrb[0].mxu0
        %v2018 = vadd.f32 0.0, %v2017
        %2019 = vmatprep.mubr.bf16.mxu0 %v957
        %2020 = vmatmul.mubr.bf16.gmra.mrb[0].mxu0 %v956
        %v2021 = vpop.f32.mrb[0].mxu0
        %v2022 = vadd.f32 0.0, %v2021
        %v2023 = vpop.f32.mrb[0].mxu0
        %v2024 = vadd.f32 0.0, %v2023
        %v2025 = vpop.f32.mrb[0].mxu0
        %v2026 = vadd.f32 0.0, %v2025
        %v2027 = vpop.f32.mrb[0].mxu0
        %v2028 = vadd.f32 0.0, %v2027
        %2029 = vmatprep.mubr.bf16.mxu0 %v959
        %2030 = vmatmul.mubr.bf16.gmra.mrb[0].mxu0 %v958
        %v2031 = vpop.f32.mrb[0].mxu0
        %v2032 = vadd.f32 0.0, %v2031
        %v2033 = vpop.f32.mrb[0].mxu0
        %v2034 = vadd.f32 0.0, %v2033
        %v2035 = vpop.f32.mrb[0].mxu0
        %v2036 = vadd.f32 0.0, %v2035
        %v2037 = vpop.f32.mrb[0].mxu0
        %v2038 = vadd.f32 0.0, %v2037
        %2039 = vmatprep.mubr.bf16.mxu0 %v961
        %2040 = vmatmul.mubr.bf16.gmra.mrb[0].mxu0 %v960
        %v2041 = vpop.f32.mrb[0].mxu0
        %v2042 = vadd.f32 0.0, %v2041
        %v2043 = vpop.f32.mrb[0].mxu0
        %v2044 = vadd.f32 0.0, %v2043
        %v2045 = vpop.f32.mrb[0].mxu0
        %v2046 = vadd.f32 0.0, %v2045
        %v2047 = vpop.f32.mrb[0].mxu0
        %v2048 = vadd.f32 0.0, %v2047
        %2049 = vmatprep.mubr.bf16.mxu0 %v963
        %2050 = vmatmul.mubr.bf16.gmra.mrb[0].mxu0 %v962
        %v2051 = vpop.f32.mrb[0].mxu0
        %v2052 = vadd.f32 0.0, %v2051
        %v2053 = vpop.f32.mrb[0].mxu0
        %v2054 = vadd.f32 0.0, %v2053
        %v2055 = vpop.f32.mrb[0].mxu0
        %v2056 = vadd.f32 0.0, %v2055
        %v2057 = vpop.f32.mrb[0].mxu0
        %v2058 = vadd.f32 0.0, %v2057
        %2059 = vmatprep.mubr.bf16.mxu0 %v965
        %2060 = vmatmul.mubr.bf16.gmra.mrb[0].mxu0 %v964
        %v2061 = vpop.f32.mrb[0].mxu0
        %v2062 = vadd.f32 0.0, %v2061
        %v2063 = vpop.f32.mrb[0].mxu0
        %v2064 = vadd.f32 0.0, %v2063
        %v2065 = vpop.f32.mrb[0].mxu0
        %v2066 = vadd.f32 0.0, %v2065
        %v2067 = vpop.f32.mrb[0].mxu0
        %v2068 = vadd.f32 0.0, %v2067
        %2069 = vmatprep.mubr.bf16.mxu0 %v967
        %2070 = vmatmul.mubr.bf16.gmra.mrb[0].mxu0 %v966
        %v2071 = vpop.f32.mrb[0].mxu0
        %v2072 = vadd.f32 0.0, %v2071
        %v2073 = vpop.f32.mrb[0].mxu0
        %v2074 = vadd.f32 0.0, %v2073
        %v2075 = vpop.f32.mrb[0].mxu0
        %v2076 = vadd.f32 0.0, %v2075
        %v2077 = vpop.f32.mrb[0].mxu0
        %v2078 = vadd.f32 0.0, %v2077
        %2079 = vmatprep.mubr.bf16.mxu0 %v969
        %2080 = vmatmul.mubr.bf16.gmra.mrb[0].mxu0 %v968
        %v2081 = vpop.f32.mrb[0].mxu0
        %v2082 = vadd.f32 0.0, %v2081
        %v2083 = vpop.f32.mrb[0].mxu0
        %v2084 = vadd.f32 0.0, %v2083
        %v2085 = vpop.f32.mrb[0].mxu0
        %v2086 = vadd.f32 0.0, %v2085
        %v2087 = vpop.f32.mrb[0].mxu0
        %v2088 = vadd.f32 0.0, %v2087
        %2089 = vmatprep.mubr.bf16.mxu0 %v971
        %2090 = vmatmul.mubr.bf16.gmra.mrb[0].mxu0 %v970
        %v2091 = vpop.f32.mrb[0].mxu0
        %v2092 = vadd.f32 0.0, %v2091
        %v2093 = vpop.f32.mrb[0].mxu0
        %v2094 = vadd.f32 0.0, %v2093
        %v2095 = vpop.f32.mrb[0].mxu0
        %v2096 = vadd.f32 0.0, %v2095
        %v2097 = vpop.f32.mrb[0].mxu0
        %v2098 = vadd.f32 0.0, %v2097
        %2099 = vmatprep.mubr.bf16.mxu0 %v973
        %2100 = vmatmul.mubr.bf16.gmra.mrb[0].mxu0 %v972
        %v2101 = vpop.f32.mrb[0].mxu0
        %v2102 = vadd.f32 0.0, %v2101
        %v2103 = vpop.f32.mrb[0].mxu0
        %v2104 = vadd.f32 0.0, %v2103
        %v2105 = vpop.f32.mrb[0].mxu0
        %v2106 = vadd.f32 0.0, %v2105
        %v2107 = vpop.f32.mrb[0].mxu0
        %v2108 = vadd.f32 0.0, %v2107
        %2109 = vmatprep.mubr.bf16.mxu0 %v975
        %2110 = vmatmul.mubr.bf16.gmra.mrb[0].mxu0 %v974
        %v2111 = vpop.f32.mrb[0].mxu0
        %v2112 = vadd.f32 0.0, %v2111
        %v2113 = vpop.f32.mrb[0].mxu0
        %v2114 = vadd.f32 0.0, %v2113
        %v2115 = vpop.f32.mrb[0].mxu0
        %v2116 = vadd.f32 0.0, %v2115
        %v2117 = vpop.f32.mrb[0].mxu0
        %v2118 = vadd.f32 0.0, %v2117
        %2119 = vmatprep.mubr.bf16.mxu0 %v977
        %2120 = vmatmul.mubr.bf16.gmra.mrb[0].mxu0 %v976
        %v2121 = vpop.f32.mrb[0].mxu0
        %v2122 = vadd.f32 0.0, %v2121
        %v2123 = vpop.f32.mrb[0].mxu0
        %v2124 = vadd.f32 0.0, %v2123
        %v2125 = vpop.f32.mrb[0].mxu0
        %v2126 = vadd.f32 0.0, %v2125
        %v2127 = vpop.f32.mrb[0].mxu0
        %v2128 = vadd.f32 0.0, %v2127
        %2129 = vmatprep.mubr.bf16.mxu0 %v979
        %2130 = vmatmul.mubr.bf16.gmra.mrb[0].mxu0 %v978
        %v2131 = vpop.f32.mrb[0].mxu0
        %v2132 = vadd.f32 0.0, %v2131
        %v2133 = vpop.f32.mrb[0].mxu0
        %v2134 = vadd.f32 0.0, %v2133
        %v2135 = vpop.f32.mrb[0].mxu0
        %v2136 = vadd.f32 0.0, %v2135
        %v2137 = vpop.f32.mrb[0].mxu0
        %v2138 = vadd.f32 0.0, %v2137
        %2139 = vmatprep.mubr.bf16.mxu0 %v981
        %2140 = vmatmul.mubr.bf16.gmra.mrb[0].mxu0 %v980
        %v2141 = vpop.f32.mrb[0].mxu0
        %v2142 = vadd.f32 0.0, %v2141
        %v2143 = vpop.f32.mrb[0].mxu0
        %v2144 = vadd.f32 0.0, %v2143
        %v2145 = vpop.f32.mrb[0].mxu0
        %v2146 = vadd.f32 0.0, %v2145
        %v2147 = vpop.f32.mrb[0].mxu0
        %v2148 = vadd.f32 0.0, %v2147
        %2149 = vmatprep.mubr.bf16.mxu0 %v983
        %2150 = vmatmul.mubr.bf16.gmra.mrb[0].mxu0 %v982
        %v2151 = vpop.f32.mrb[0].mxu0
        %v2152 = vadd.f32 0.0, %v2151
        %v2153 = vpop.f32.mrb[0].mxu0
        %v2154 = vadd.f32 0.0, %v2153
        %v2155 = vpop.f32.mrb[0].mxu0
        %v2156 = vadd.f32 0.0, %v2155
        %v2157 = vpop.f32.mrb[0].mxu0
        %v2158 = vadd.f32 0.0, %v2157
        %2159 = vdwg.mxu0
        %v2160 = vpack.c.bf16 %v2006, %v2002
        %v2161 = vpack.c.bf16 %v2008, %v2004
        %v2162 = vpack.c.bf16 %v2016, %v2012
        %v2163 = vpack.c.bf16 %v2018, %v2014
        %v2164 = vpack.c.bf16 %v2026, %v2022
        %v2165 = vpack.c.bf16 %v2028, %v2024
        %v2166 = vpack.c.bf16 %v2036, %v2032
        %v2167 = vpack.c.bf16 %v2038, %v2034
        %v2168 = vpack.c.bf16 %v2046, %v2042
        %v2169 = vpack.c.bf16 %v2048, %v2044
        %v2170 = vpack.c.bf16 %v2056, %v2052
        %v2171 = vpack.c.bf16 %v2058, %v2054
        %v2172 = vpack.c.bf16 %v2066, %v2062
        %v2173 = vpack.c.bf16 %v2068, %v2064
        %v2174 = vpack.c.bf16 %v2076, %v2072
        %v2175 = vpack.c.bf16 %v2078, %v2074
        %v2176 = vpack.c.bf16 %v2086, %v2082
        %v2177 = vpack.c.bf16 %v2088, %v2084
        %v2178 = vpack.c.bf16 %v2096, %v2092
        %v2179 = vpack.c.bf16 %v2098, %v2094
        %v2180 = vpack.c.bf16 %v2106, %v2102
        %v2181 = vpack.c.bf16 %v2108, %v2104
        %v2182 = vpack.c.bf16 %v2116, %v2112
        %v2183 = vpack.c.bf16 %v2118, %v2114
        %v2184 = vpack.c.bf16 %v2126, %v2122
        %v2185 = vpack.c.bf16 %v2128, %v2124
        %v2186 = vpack.c.bf16 %v2136, %v2132
        %v2187 = vpack.c.bf16 %v2138, %v2134
        %v2188 = vpack.c.bf16 %v2146, %v2142
        %v2189 = vpack.c.bf16 %v2148, %v2144
        %v2190 = vpack.c.bf16 %v2156, %v2152
        %v2191 = vpack.c.bf16 %v2158, %v2154
        %v2192 = vld [vmem:[%s4] sm:$0xff]
        %v2193 = vld [vmem:[%s4 + $0x8] sm:$0xff]
        %v2194 = vld [vmem:[%s4 + $0x10] sm:$0xff]
        %v2195 = vld [vmem:[%s4 + $0x18] sm:$0xff]
        %v2196 = vld [vmem:[%s4 + $0x20] sm:$0xff]
        %v2197 = vld [vmem:[%s4 + $0x28] sm:$0xff]
        %v2198 = vld [vmem:[%s4 + $0x30] sm:$0xff]
        %v2199 = vld [vmem:[%s4 + $0x38] sm:$0xff]
        %v2200 = vld [vmem:[%s4 + $0x40] sm:$0xff]
        %v2201 = vld [vmem:[%s4 + $0x48] sm:$0xff]
        %v2202 = vld [vmem:[%s4 + $0x50] sm:$0xff]
        %v2203 = vld [vmem:[%s4 + $0x58] sm:$0xff]
        %v2204 = vld [vmem:[%s4 + $0x60] sm:$0xff]
        %v2205 = vld [vmem:[%s4 + $0x68] sm:$0xff]
        %v2206 = vld [vmem:[%s4 + $0x70] sm:$0xff]
        %v2207 = vld [vmem:[%s4 + $0x78] sm:$0xff]
        %v2208 = vld [vmem:[%s4 + $0x80] sm:$0xff]
        %v2209 = vld [vmem:[%s4 + $0x88] sm:$0xff]
        %v2210 = vld [vmem:[%s4 + $0x90] sm:$0xff]
        %v2211 = vld [vmem:[%s4 + $0x98] sm:$0xff]
        %v2212 = vld [vmem:[%s4 + $0xa0] sm:$0xff]
        %v2213 = vld [vmem:[%s4 + $0xa8] sm:$0xff]
        %v2214 = vld [vmem:[%s4 + $0xb0] sm:$0xff]
        %v2215 = vld [vmem:[%s4 + $0xb8] sm:$0xff]
        %v2216 = vld [vmem:[%s4 + $0xc0] sm:$0xff]
        %v2217 = vld [vmem:[%s4 + $0xc8] sm:$0xff]
        %v2218 = vld [vmem:[%s4 + $0xd0] sm:$0xff]
        %v2219 = vld [vmem:[%s4 + $0xd8] sm:$0xff]
        %v2220 = vld [vmem:[%s4 + $0xe0] sm:$0xff]
        %v2221 = vld [vmem:[%s4 + $0xe8] sm:$0xff]
        %v2222 = vld [vmem:[%s4 + $0xf0] sm:$0xff]
        %v2223 = vld [vmem:[%s4 + $0xf8] sm:$0xff]
        %v2224 = vld [vmem:[%s4 + $0x100] sm:$0xff]
        %v2225 = vld [vmem:[%s4 + $0x108] sm:$0xff]
        %v2226 = vld [vmem:[%s4 + $0x110] sm:$0xff]
        %v2227 = vld [vmem:[%s4 + $0x118] sm:$0xff]
        %v2228 = vld [vmem:[%s4 + $0x120] sm:$0xff]
        %v2229 = vld [vmem:[%s4 + $0x128] sm:$0xff]
        %v2230 = vld [vmem:[%s4 + $0x130] sm:$0xff]
        %v2231 = vld [vmem:[%s4 + $0x138] sm:$0xff]
        %v2232 = vld [vmem:[%s4 + $0x140] sm:$0xff]
        %v2233 = vld [vmem:[%s4 + $0x148] sm:$0xff]
        %v2234 = vld [vmem:[%s4 + $0x150] sm:$0xff]
        %v2235 = vld [vmem:[%s4 + $0x158] sm:$0xff]
        %v2236 = vld [vmem:[%s4 + $0x160] sm:$0xff]
        %v2237 = vld [vmem:[%s4 + $0x168] sm:$0xff]
        %v2238 = vld [vmem:[%s4 + $0x170] sm:$0xff]
        %v2239 = vld [vmem:[%s4 + $0x178] sm:$0xff]
        %v2240 = vld [vmem:[%s4 + $0x180] sm:$0xff]
        %v2241 = vld [vmem:[%s4 + $0x188] sm:$0xff]
        %v2242 = vld [vmem:[%s4 + $0x190] sm:$0xff]
        %v2243 = vld [vmem:[%s4 + $0x198] sm:$0xff]
        %v2244 = vld [vmem:[%s4 + $0x1a0] sm:$0xff]
        %v2245 = vld [vmem:[%s4 + $0x1a8] sm:$0xff]
        %v2246 = vld [vmem:[%s4 + $0x1b0] sm:$0xff]
        %v2247 = vld [vmem:[%s4 + $0x1b8] sm:$0xff]
        %v2248 = vld [vmem:[%s4 + $0x1c0] sm:$0xff]
        %v2249 = vld [vmem:[%s4 + $0x1c8] sm:$0xff]
        %v2250 = vld [vmem:[%s4 + $0x1d0] sm:$0xff]
        %v2251 = vld [vmem:[%s4 + $0x1d8] sm:$0xff]
        %v2252 = vld [vmem:[%s4 + $0x1e0] sm:$0xff]
        %v2253 = vld [vmem:[%s4 + $0x1e8] sm:$0xff]
        %v2254 = vld [vmem:[%s4 + $0x1f0] sm:$0xff]
        %v2255 = vld [vmem:[%s4 + $0x1f8] sm:$0xff]
        %v2256 = vld [vmem:[#allocation4] sm:$0xf]
        %v2258 = vlaneseq
        %v2259 = vshrl.u32 %v2258, 7
        %v2260 = vsub.s32 0, %v2259
        %v2261 = vrot.slane %v2256, %v2260
        %v2262 = vlaneseq
        %v2263 = vshrl.u32 %v2262, 7
        %v2264 = vsub.s32 1, %v2263
        %v2265 = vrot.slane %v2256, %v2264
        %v2266 = vlaneseq
        %v2267 = vshrl.u32 %v2266, 7
        %v2268 = vsub.s32 2, %v2267
        %v2269 = vrot.slane %v2256, %v2268
        %v2270 = vlaneseq
        %v2271 = vshrl.u32 %v2270, 7
        %v2272 = vsub.s32 3, %v2271
        %v2273 = vrot.slane %v2256, %v2272
        %v2342 = vunpack.c.l.b16 %v2192
        %v2343 = vunpack.c.h.b16 %v2192
        %v2344 = vunpack.c.l.b16 %v2193
        %v2345 = vunpack.c.h.b16 %v2193
        %v2346 = vunpack.c.l.b16 %v2194
        %v2347 = vunpack.c.h.b16 %v2194
        %v2348 = vunpack.c.l.b16 %v2195
        %v2349 = vunpack.c.h.b16 %v2195
        %v2350 = vunpack.c.l.b16 %v2196
        %v2351 = vunpack.c.h.b16 %v2196
        %v2352 = vunpack.c.l.b16 %v2197
        %v2353 = vunpack.c.h.b16 %v2197
        %v2354 = vunpack.c.l.b16 %v2198
        %v2355 = vunpack.c.h.b16 %v2198
        %v2356 = vunpack.c.l.b16 %v2199
        %v2357 = vunpack.c.h.b16 %v2199
        %v2358 = vunpack.c.l.b16 %v2200
        %v2359 = vunpack.c.h.b16 %v2200
        %v2360 = vunpack.c.l.b16 %v2201
        %v2361 = vunpack.c.h.b16 %v2201
        %v2362 = vunpack.c.l.b16 %v2202
        %v2363 = vunpack.c.h.b16 %v2202
        %v2364 = vunpack.c.l.b16 %v2203
        %v2365 = vunpack.c.h.b16 %v2203
        %v2366 = vunpack.c.l.b16 %v2204
        %v2367 = vunpack.c.h.b16 %v2204
        %v2368 = vunpack.c.l.b16 %v2205
        %v2369 = vunpack.c.h.b16 %v2205
        %v2370 = vunpack.c.l.b16 %v2206
        %v2371 = vunpack.c.h.b16 %v2206
        %v2372 = vunpack.c.l.b16 %v2207
        %v2373 = vunpack.c.h.b16 %v2207
        %v2374 = vunpack.c.l.b16 %v2208
        %v2375 = vunpack.c.h.b16 %v2208
        %v2376 = vunpack.c.l.b16 %v2209
        %v2377 = vunpack.c.h.b16 %v2209
        %v2378 = vunpack.c.l.b16 %v2210
        %v2379 = vunpack.c.h.b16 %v2210
        %v2380 = vunpack.c.l.b16 %v2211
        %v2381 = vunpack.c.h.b16 %v2211
        %v2382 = vunpack.c.l.b16 %v2212
        %v2383 = vunpack.c.h.b16 %v2212
        %v2384 = vunpack.c.l.b16 %v2213
        %v2385 = vunpack.c.h.b16 %v2213
        %v2386 = vunpack.c.l.b16 %v2214
        %v2387 = vunpack.c.h.b16 %v2214
        %v2388 = vunpack.c.l.b16 %v2215
        %v2389 = vunpack.c.h.b16 %v2215
        %v2390 = vunpack.c.l.b16 %v2216
        %v2391 = vunpack.c.h.b16 %v2216
        %v2392 = vunpack.c.l.b16 %v2217
        %v2393 = vunpack.c.h.b16 %v2217
        %v2394 = vunpack.c.l.b16 %v2218
        %v2395 = vunpack.c.h.b16 %v2218
        %v2396 = vunpack.c.l.b16 %v2219
        %v2397 = vunpack.c.h.b16 %v2219
        %v2398 = vunpack.c.l.b16 %v2220
        %v2399 = vunpack.c.h.b16 %v2220
        %v2400 = vunpack.c.l.b16 %v2221
        %v2401 = vunpack.c.h.b16 %v2221
        %v2402 = vunpack.c.l.b16 %v2222
        %v2403 = vunpack.c.h.b16 %v2222
        %v2404 = vunpack.c.l.b16 %v2223
        %v2405 = vunpack.c.h.b16 %v2223
        %v2406 = vunpack.c.l.b16 %v2224
        %v2407 = vunpack.c.h.b16 %v2224
        %v2408 = vunpack.c.l.b16 %v2225
        %v2409 = vunpack.c.h.b16 %v2225
        %v2410 = vunpack.c.l.b16 %v2226
        %v2411 = vunpack.c.h.b16 %v2226
        %v2412 = vunpack.c.l.b16 %v2227
        %v2413 = vunpack.c.h.b16 %v2227
        %v2414 = vunpack.c.l.b16 %v2228
        %v2415 = vunpack.c.h.b16 %v2228
        %v2416 = vunpack.c.l.b16 %v2229
        %v2417 = vunpack.c.h.b16 %v2229
        %v2418 = vunpack.c.l.b16 %v2230
        %v2419 = vunpack.c.h.b16 %v2230
        %v2420 = vunpack.c.l.b16 %v2231
        %v2421 = vunpack.c.h.b16 %v2231
        %v2422 = vunpack.c.l.b16 %v2232
        %v2423 = vunpack.c.h.b16 %v2232
        %v2424 = vunpack.c.l.b16 %v2233
        %v2425 = vunpack.c.h.b16 %v2233
        %v2426 = vunpack.c.l.b16 %v2234
        %v2427 = vunpack.c.h.b16 %v2234
        %v2428 = vunpack.c.l.b16 %v2235
        %v2429 = vunpack.c.h.b16 %v2235
        %v2430 = vunpack.c.l.b16 %v2236
        %v2431 = vunpack.c.h.b16 %v2236
        %v2432 = vunpack.c.l.b16 %v2237
        %v2433 = vunpack.c.h.b16 %v2237
        %v2434 = vunpack.c.l.b16 %v2238
        %v2435 = vunpack.c.h.b16 %v2238
        %v2436 = vunpack.c.l.b16 %v2239
        %v2437 = vunpack.c.h.b16 %v2239
        %v2438 = vunpack.c.l.b16 %v2240
        %v2439 = vunpack.c.h.b16 %v2240
        %v2440 = vunpack.c.l.b16 %v2241
        %v2441 = vunpack.c.h.b16 %v2241
        %v2442 = vunpack.c.l.b16 %v2242
        %v2443 = vunpack.c.h.b16 %v2242
        %v2444 = vunpack.c.l.b16 %v2243
        %v2445 = vunpack.c.h.b16 %v2243
        %v2446 = vunpack.c.l.b16 %v2244
        %v2447 = vunpack.c.h.b16 %v2244
        %v2448 = vunpack.c.l.b16 %v2245
        %v2449 = vunpack.c.h.b16 %v2245
        %v2450 = vunpack.c.l.b16 %v2246
        %v2451 = vunpack.c.h.b16 %v2246
        %v2452 = vunpack.c.l.b16 %v2247
        %v2453 = vunpack.c.h.b16 %v2247
        %v2454 = vunpack.c.l.b16 %v2248
        %v2455 = vunpack.c.h.b16 %v2248
        %v2456 = vunpack.c.l.b16 %v2249
        %v2457 = vunpack.c.h.b16 %v2249
        %v2458 = vunpack.c.l.b16 %v2250
        %v2459 = vunpack.c.h.b16 %v2250
        %v2460 = vunpack.c.l.b16 %v2251
        %v2461 = vunpack.c.h.b16 %v2251
        %v2462 = vunpack.c.l.b16 %v2252
        %v2463 = vunpack.c.h.b16 %v2252
        %v2464 = vunpack.c.l.b16 %v2253
        %v2465 = vunpack.c.h.b16 %v2253
        %v2466 = vunpack.c.l.b16 %v2254
        %v2467 = vunpack.c.h.b16 %v2254
        %v2468 = vunpack.c.l.b16 %v2255
        %v2469 = vunpack.c.h.b16 %v2255
        %v2470 = vpack.c.b16 %v2346, %v2342
        %v2471 = vpack.c.b16 %v2347, %v2343
        %v2472 = vpack.c.b16 %v2348, %v2344
        %v2473 = vpack.c.b16 %v2349, %v2345
        %v2474 = vpack.c.b16 %v2354, %v2350
        %v2475 = vpack.c.b16 %v2355, %v2351
        %v2476 = vpack.c.b16 %v2356, %v2352
        %v2477 = vpack.c.b16 %v2357, %v2353
        %v2478 = vpack.c.b16 %v2362, %v2358
        %v2479 = vpack.c.b16 %v2363, %v2359
        %v2480 = vpack.c.b16 %v2364, %v2360
        %v2481 = vpack.c.b16 %v2365, %v2361
        %v2482 = vpack.c.b16 %v2370, %v2366
        %v2483 = vpack.c.b16 %v2371, %v2367
        %v2484 = vpack.c.b16 %v2372, %v2368
        %v2485 = vpack.c.b16 %v2373, %v2369
        %v2486 = vpack.c.b16 %v2378, %v2374
        %v2487 = vpack.c.b16 %v2379, %v2375
        %v2488 = vpack.c.b16 %v2380, %v2376
        %v2489 = vpack.c.b16 %v2381, %v2377
        %v2490 = vpack.c.b16 %v2386, %v2382
        %v2491 = vpack.c.b16 %v2387, %v2383
        %v2492 = vpack.c.b16 %v2388, %v2384
        %v2493 = vpack.c.b16 %v2389, %v2385
        %v2494 = vpack.c.b16 %v2394, %v2390
        %v2495 = vpack.c.b16 %v2395, %v2391
        %v2496 = vpack.c.b16 %v2396, %v2392
        %v2497 = vpack.c.b16 %v2397, %v2393
        %v2498 = vpack.c.b16 %v2402, %v2398
        %v2499 = vpack.c.b16 %v2403, %v2399
        %v2500 = vpack.c.b16 %v2404, %v2400
        %v2501 = vpack.c.b16 %v2405, %v2401
        %v2502 = vpack.c.b16 %v2410, %v2406
        %v2503 = vpack.c.b16 %v2411, %v2407
        %v2504 = vpack.c.b16 %v2412, %v2408
        %v2505 = vpack.c.b16 %v2413, %v2409
        %v2506 = vpack.c.b16 %v2418, %v2414
        %v2507 = vpack.c.b16 %v2419, %v2415
        %v2508 = vpack.c.b16 %v2420, %v2416
        %v2509 = vpack.c.b16 %v2421, %v2417
        %v2510 = vpack.c.b16 %v2426, %v2422
        %v2511 = vpack.c.b16 %v2427, %v2423
        %v2512 = vpack.c.b16 %v2428, %v2424
        %v2513 = vpack.c.b16 %v2429, %v2425
        %v2514 = vpack.c.b16 %v2434, %v2430
        %v2515 = vpack.c.b16 %v2435, %v2431
        %v2516 = vpack.c.b16 %v2436, %v2432
        %v2517 = vpack.c.b16 %v2437, %v2433
        %v2518 = vpack.c.b16 %v2442, %v2438
        %v2519 = vpack.c.b16 %v2443, %v2439
        %v2520 = vpack.c.b16 %v2444, %v2440
        %v2521 = vpack.c.b16 %v2445, %v2441
        %v2522 = vpack.c.b16 %v2450, %v2446
        %v2523 = vpack.c.b16 %v2451, %v2447
        %v2524 = vpack.c.b16 %v2452, %v2448
        %v2525 = vpack.c.b16 %v2453, %v2449
        %v2526 = vpack.c.b16 %v2458, %v2454
        %v2527 = vpack.c.b16 %v2459, %v2455
        %v2528 = vpack.c.b16 %v2460, %v2456
        %v2529 = vpack.c.b16 %v2461, %v2457
        %v2530 = vpack.c.b16 %v2466, %v2462
        %v2531 = vpack.c.b16 %v2467, %v2463
        %v2532 = vpack.c.b16 %v2468, %v2464
        %v2533 = vpack.c.b16 %v2469, %v2465
        %2598 = vmatprep.subr.bf16.mxu0 %v2471
        %2599 = vmatpush1.bf16.msra.mxu0 %v2470
        %2600 = vmatprep.subr.bf16.mxu0 %v2475
        %2601 = vmatpush1.bf16.msra.mxu0 %v2474
        %2602 = vmatprep.subr.bf16.mxu0 %v2479
        %2603 = vmatpush1.bf16.msra.mxu0 %v2478
        %2604 = vmatprep.subr.bf16.mxu0 %v2483
        %2605 = vmatpush1.bf16.msra.mxu0 %v2482
        %2606 = vmatprep.subr.bf16.mxu0 %v2487
        %2607 = vmatpush1.bf16.msra.mxu0 %v2486
        %2608 = vmatprep.subr.bf16.mxu0 %v2491
        %2609 = vmatpush1.bf16.msra.mxu0 %v2490
        %2610 = vmatprep.subr.bf16.mxu0 %v2495
        %2611 = vmatpush1.bf16.msra.mxu0 %v2494
        %2612 = vmatprep.subr.bf16.mxu0 %v2499
        %2613 = vmatpush1.bf16.msra.mxu0 %v2498
        %2614 = vmatprep.subr.bf16.mxu0 %v2503
        %2615 = vmatpush1.bf16.msra.mxu0 %v2502
        %2616 = vmatprep.subr.bf16.mxu0 %v2507
        %2617 = vmatpush1.bf16.msra.mxu0 %v2506
        %2618 = vmatprep.subr.bf16.mxu0 %v2511
        %2619 = vmatpush1.bf16.msra.mxu0 %v2510
        %2620 = vmatprep.subr.bf16.mxu0 %v2515
        %2621 = vmatpush1.bf16.msra.mxu0 %v2514
        %2622 = vmatprep.subr.bf16.mxu0 %v2519
        %2623 = vmatpush1.bf16.msra.mxu0 %v2518
        %2624 = vmatprep.subr.bf16.mxu0 %v2523
        %2625 = vmatpush1.bf16.msra.mxu0 %v2522
        %2626 = vmatprep.subr.bf16.mxu0 %v2527
        %2627 = vmatpush1.bf16.msra.mxu0 %v2526
        %2628 = vmatprep.subr.bf16.mxu0 %v2531
        %2629 = vmatpush1.bf16.msra.mxu0 %v2530
        %2630 = vmatprep.mubr.bf16.mxu0 %v2161
        %2631 = vmatmul.mubr.bf16.gmra.mrb[0].mxu0 %v2160
        %v2632 = vpop.f32.mrb[0].mxu0
        %v2633 = vadd.f32 %v2261, %v2632
        %v2634 = vpop.f32.mrb[0].mxu0
        %v2635 = vadd.f32 %v2265, %v2634
        %v2636 = vpop.f32.mrb[0].mxu0
        %v2637 = vadd.f32 %v2261, %v2636
        %v2638 = vpop.f32.mrb[0].mxu0
        %v2639 = vadd.f32 %v2265, %v2638
        %2640 = vmatprep.mubr.bf16.mxu0 %v2163
        %2641 = vmatmul.mubr.bf16.gmra.mrb[0].mxu0 %v2162
        %v2642 = vpop.f32.mrb[0].mxu0
        %v2643 = vadd.f32 %v2261, %v2642
        %v2644 = vpop.f32.mrb[0].mxu0
        %v2645 = vadd.f32 %v2265, %v2644
        %v2646 = vpop.f32.mrb[0].mxu0
        %v2647 = vadd.f32 %v2261, %v2646
        %v2648 = vpop.f32.mrb[0].mxu0
        %v2649 = vadd.f32 %v2265, %v2648
        %2650 = vmatprep.mubr.bf16.mxu0 %v2165
        %2651 = vmatmul.mubr.bf16.gmra.mrb[0].mxu0 %v2164
        %v2652 = vpop.f32.mrb[0].mxu0
        %v2653 = vadd.f32 %v2261, %v2652
        %v2654 = vpop.f32.mrb[0].mxu0
        %v2655 = vadd.f32 %v2265, %v2654
        %v2656 = vpop.f32.mrb[0].mxu0
        %v2657 = vadd.f32 %v2261, %v2656
        %v2658 = vpop.f32.mrb[0].mxu0
        %v2659 = vadd.f32 %v2265, %v2658
        %2660 = vmatprep.mubr.bf16.mxu0 %v2167
        %2661 = vmatmul.mubr.bf16.gmra.mrb[0].mxu0 %v2166
        %v2662 = vpop.f32.mrb[0].mxu0
        %v2663 = vadd.f32 %v2261, %v2662
        %v2664 = vpop.f32.mrb[0].mxu0
        %v2665 = vadd.f32 %v2265, %v2664
        %v2666 = vpop.f32.mrb[0].mxu0
        %v2667 = vadd.f32 %v2261, %v2666
        %v2668 = vpop.f32.mrb[0].mxu0
        %v2669 = vadd.f32 %v2265, %v2668
        %2670 = vmatprep.mubr.bf16.mxu0 %v2169
        %2671 = vmatmul.mubr.bf16.gmra.mrb[0].mxu0 %v2168
        %v2672 = vpop.f32.mrb[0].mxu0
        %v2673 = vadd.f32 %v2261, %v2672
        %v2674 = vpop.f32.mrb[0].mxu0
        %v2675 = vadd.f32 %v2265, %v2674
        %v2676 = vpop.f32.mrb[0].mxu0
        %v2677 = vadd.f32 %v2261, %v2676
        %v2678 = vpop.f32.mrb[0].mxu0
        %v2679 = vadd.f32 %v2265, %v2678
        %2680 = vmatprep.mubr.bf16.mxu0 %v2171
        %2681 = vmatmul.mubr.bf16.gmra.mrb[0].mxu0 %v2170
        %v2682 = vpop.f32.mrb[0].mxu0
        %v2683 = vadd.f32 %v2261, %v2682
        %v2684 = vpop.f32.mrb[0].mxu0
        %v2685 = vadd.f32 %v2265, %v2684
        %v2686 = vpop.f32.mrb[0].mxu0
        %v2687 = vadd.f32 %v2261, %v2686
        %v2688 = vpop.f32.mrb[0].mxu0
        %v2689 = vadd.f32 %v2265, %v2688
        %2690 = vmatprep.mubr.bf16.mxu0 %v2173
        %2691 = vmatmul.mubr.bf16.gmra.mrb[0].mxu0 %v2172
        %v2692 = vpop.f32.mrb[0].mxu0
        %v2693 = vadd.f32 %v2261, %v2692
        %v2694 = vpop.f32.mrb[0].mxu0
        %v2695 = vadd.f32 %v2265, %v2694
        %v2696 = vpop.f32.mrb[0].mxu0
        %v2697 = vadd.f32 %v2261, %v2696
        %v2698 = vpop.f32.mrb[0].mxu0
        %v2699 = vadd.f32 %v2265, %v2698
        %2700 = vmatprep.mubr.bf16.mxu0 %v2175
        %2701 = vmatmul.mubr.bf16.gmra.mrb[0].mxu0 %v2174
        %v2702 = vpop.f32.mrb[0].mxu0
        %v2703 = vadd.f32 %v2261, %v2702
        %v2704 = vpop.f32.mrb[0].mxu0
        %v2705 = vadd.f32 %v2265, %v2704
        %v2706 = vpop.f32.mrb[0].mxu0
        %v2707 = vadd.f32 %v2261, %v2706
        %v2708 = vpop.f32.mrb[0].mxu0
        %v2709 = vadd.f32 %v2265, %v2708
        %2710 = vmatprep.mubr.bf16.mxu0 %v2177
        %2711 = vmatmul.mubr.bf16.gmra.mrb[0].mxu0 %v2176
        %v2712 = vpop.f32.mrb[0].mxu0
        %v2713 = vadd.f32 %v2261, %v2712
        %v2714 = vpop.f32.mrb[0].mxu0
        %v2715 = vadd.f32 %v2265, %v2714
        %v2716 = vpop.f32.mrb[0].mxu0
        %v2717 = vadd.f32 %v2261, %v2716
        %v2718 = vpop.f32.mrb[0].mxu0
        %v2719 = vadd.f32 %v2265, %v2718
        %2720 = vmatprep.mubr.bf16.mxu0 %v2179
        %2721 = vmatmul.mubr.bf16.gmra.mrb[0].mxu0 %v2178
        %v2722 = vpop.f32.mrb[0].mxu0
        %v2723 = vadd.f32 %v2261, %v2722
        %v2724 = vpop.f32.mrb[0].mxu0
        %v2725 = vadd.f32 %v2265, %v2724
        %v2726 = vpop.f32.mrb[0].mxu0
        %v2727 = vadd.f32 %v2261, %v2726
        %v2728 = vpop.f32.mrb[0].mxu0
        %v2729 = vadd.f32 %v2265, %v2728
        %2730 = vmatprep.mubr.bf16.mxu0 %v2181
        %2731 = vmatmul.mubr.bf16.gmra.mrb[0].mxu0 %v2180
        %v2732 = vpop.f32.mrb[0].mxu0
        %v2733 = vadd.f32 %v2261, %v2732
        %v2734 = vpop.f32.mrb[0].mxu0
        %v2735 = vadd.f32 %v2265, %v2734
        %v2736 = vpop.f32.mrb[0].mxu0
        %v2737 = vadd.f32 %v2261, %v2736
        %v2738 = vpop.f32.mrb[0].mxu0
        %v2739 = vadd.f32 %v2265, %v2738
        %2740 = vmatprep.mubr.bf16.mxu0 %v2183
        %2741 = vmatmul.mubr.bf16.gmra.mrb[0].mxu0 %v2182
        %v2742 = vpop.f32.mrb[0].mxu0
        %v2743 = vadd.f32 %v2261, %v2742
        %v2744 = vpop.f32.mrb[0].mxu0
        %v2745 = vadd.f32 %v2265, %v2744
        %v2746 = vpop.f32.mrb[0].mxu0
        %v2747 = vadd.f32 %v2261, %v2746
        %v2748 = vpop.f32.mrb[0].mxu0
        %v2749 = vadd.f32 %v2265, %v2748
        %2750 = vmatprep.mubr.bf16.mxu0 %v2185
        %2751 = vmatmul.mubr.bf16.gmra.mrb[0].mxu0 %v2184
        %v2752 = vpop.f32.mrb[0].mxu0
        %v2753 = vadd.f32 %v2261, %v2752
        %v2754 = vpop.f32.mrb[0].mxu0
        %v2755 = vadd.f32 %v2265, %v2754
        %v2756 = vpop.f32.mrb[0].mxu0
        %v2757 = vadd.f32 %v2261, %v2756
        %v2758 = vpop.f32.mrb[0].mxu0
        %v2759 = vadd.f32 %v2265, %v2758
        %2760 = vmatprep.mubr.bf16.mxu0 %v2187
        %2761 = vmatmul.mubr.bf16.gmra.mrb[0].mxu0 %v2186
        %v2762 = vpop.f32.mrb[0].mxu0
        %v2763 = vadd.f32 %v2261, %v2762
        %v2764 = vpop.f32.mrb[0].mxu0
        %v2765 = vadd.f32 %v2265, %v2764
        %v2766 = vpop.f32.mrb[0].mxu0
        %v2767 = vadd.f32 %v2261, %v2766
        %v2768 = vpop.f32.mrb[0].mxu0
        %v2769 = vadd.f32 %v2265, %v2768
        %2770 = vmatprep.mubr.bf16.mxu0 %v2189
        %2771 = vmatmul.mubr.bf16.gmra.mrb[0].mxu0 %v2188
        %v2772 = vpop.f32.mrb[0].mxu0
        %v2773 = vadd.f32 %v2261, %v2772
        %v2774 = vpop.f32.mrb[0].mxu0
        %v2775 = vadd.f32 %v2265, %v2774
        %v2776 = vpop.f32.mrb[0].mxu0
        %v2777 = vadd.f32 %v2261, %v2776
        %v2778 = vpop.f32.mrb[0].mxu0
        %v2779 = vadd.f32 %v2265, %v2778
        %2780 = vmatprep.mubr.bf16.mxu0 %v2191
        %2781 = vmatmul.mubr.bf16.gmra.mrb[0].mxu0 %v2190
        %v2782 = vpop.f32.mrb[0].mxu0
        %v2783 = vadd.f32 %v2261, %v2782
        %v2784 = vpop.f32.mrb[0].mxu0
        %v2785 = vadd.f32 %v2265, %v2784
        %v2786 = vpop.f32.mrb[0].mxu0
        %v2787 = vadd.f32 %v2261, %v2786
        %v2788 = vpop.f32.mrb[0].mxu0
        %v2789 = vadd.f32 %v2265, %v2788
        %2790 = vdwg.mxu0
        %2791 = vmatprep.subr.bf16.mxu0 %v2473
        %2792 = vmatpush1.bf16.msra.mxu0 %v2472
        %2793 = vmatprep.subr.bf16.mxu0 %v2477
        %2794 = vmatpush1.bf16.msra.mxu0 %v2476
        %2795 = vmatprep.subr.bf16.mxu0 %v2481
        %2796 = vmatpush1.bf16.msra.mxu0 %v2480
        %2797 = vmatprep.subr.bf16.mxu0 %v2485
        %2798 = vmatpush1.bf16.msra.mxu0 %v2484
        %2799 = vmatprep.subr.bf16.mxu0 %v2489
        %2800 = vmatpush1.bf16.msra.mxu0 %v2488
        %2801 = vmatprep.subr.bf16.mxu0 %v2493
        %2802 = vmatpush1.bf16.msra.mxu0 %v2492
        %2803 = vmatprep.subr.bf16.mxu0 %v2497
        %2804 = vmatpush1.bf16.msra.mxu0 %v2496
        %2805 = vmatprep.subr.bf16.mxu0 %v2501
        %2806 = vmatpush1.bf16.msra.mxu0 %v2500
        %2807 = vmatprep.subr.bf16.mxu0 %v2505
        %2808 = vmatpush1.bf16.msra.mxu0 %v2504
        %2809 = vmatprep.subr.bf16.mxu0 %v2509
        %2810 = vmatpush1.bf16.msra.mxu0 %v2508
        %2811 = vmatprep.subr.bf16.mxu0 %v2513
        %2812 = vmatpush1.bf16.msra.mxu0 %v2512
        %2813 = vmatprep.subr.bf16.mxu0 %v2517
        %2814 = vmatpush1.bf16.msra.mxu0 %v2516
        %2815 = vmatprep.subr.bf16.mxu0 %v2521
        %2816 = vmatpush1.bf16.msra.mxu0 %v2520
        %2817 = vmatprep.subr.bf16.mxu0 %v2525
        %2818 = vmatpush1.bf16.msra.mxu0 %v2524
        %2819 = vmatprep.subr.bf16.mxu0 %v2529
        %2820 = vmatpush1.bf16.msra.mxu0 %v2528
        %2821 = vmatprep.subr.bf16.mxu0 %v2533
        %2822 = vmatpush1.bf16.msra.mxu0 %v2532
        %2823 = vmatprep.mubr.bf16.mxu0 %v2161
        %2824 = vmatmul.mubr.bf16.gmra.mrb[0].mxu0 %v2160
        %v2825 = vpop.f32.mrb[0].mxu0
        %v2826 = vadd.f32 %v2269, %v2825
        %v2827 = vpop.f32.mrb[0].mxu0
        %v2828 = vadd.f32 %v2273, %v2827
        %v2829 = vpop.f32.mrb[0].mxu0
        %v2830 = vadd.f32 %v2269, %v2829
        %v2831 = vpop.f32.mrb[0].mxu0
        %v2832 = vadd.f32 %v2273, %v2831
        %2833 = vmatprep.mubr.bf16.mxu0 %v2163
        %2834 = vmatmul.mubr.bf16.gmra.mrb[0].mxu0 %v2162
        %v2835 = vpop.f32.mrb[0].mxu0
        %v2836 = vadd.f32 %v2269, %v2835
        %v2837 = vpop.f32.mrb[0].mxu0
        %v2838 = vadd.f32 %v2273, %v2837
        %v2839 = vpop.f32.mrb[0].mxu0
        %v2840 = vadd.f32 %v2269, %v2839
        %v2841 = vpop.f32.mrb[0].mxu0
        %v2842 = vadd.f32 %v2273, %v2841
        %2843 = vmatprep.mubr.bf16.mxu0 %v2165
        %2844 = vmatmul.mubr.bf16.gmra.mrb[0].mxu0 %v2164
        %v2845 = vpop.f32.mrb[0].mxu0
        %v2846 = vadd.f32 %v2269, %v2845
        %v2847 = vpop.f32.mrb[0].mxu0
        %v2848 = vadd.f32 %v2273, %v2847
        %v2849 = vpop.f32.mrb[0].mxu0
        %v2850 = vadd.f32 %v2269, %v2849
        %v2851 = vpop.f32.mrb[0].mxu0
        %v2852 = vadd.f32 %v2273, %v2851
        %2853 = vmatprep.mubr.bf16.mxu0 %v2167
        %2854 = vmatmul.mubr.bf16.gmra.mrb[0].mxu0 %v2166
        %v2855 = vpop.f32.mrb[0].mxu0
        %v2856 = vadd.f32 %v2269, %v2855
        %v2857 = vpop.f32.mrb[0].mxu0
        %v2858 = vadd.f32 %v2273, %v2857
        %v2859 = vpop.f32.mrb[0].mxu0
        %v2860 = vadd.f32 %v2269, %v2859
        %v2861 = vpop.f32.mrb[0].mxu0
        %v2862 = vadd.f32 %v2273, %v2861
        %2863 = vmatprep.mubr.bf16.mxu0 %v2169
        %2864 = vmatmul.mubr.bf16.gmra.mrb[0].mxu0 %v2168
        %v2865 = vpop.f32.mrb[0].mxu0
        %v2866 = vadd.f32 %v2269, %v2865
        %v2867 = vpop.f32.mrb[0].mxu0
        %v2868 = vadd.f32 %v2273, %v2867
        %v2869 = vpop.f32.mrb[0].mxu0
        %v2870 = vadd.f32 %v2269, %v2869
        %v2871 = vpop.f32.mrb[0].mxu0
        %v2872 = vadd.f32 %v2273, %v2871
        %2873 = vmatprep.mubr.bf16.mxu0 %v2171
        %2874 = vmatmul.mubr.bf16.gmra.mrb[0].mxu0 %v2170
        %v2875 = vpop.f32.mrb[0].mxu0
        %v2876 = vadd.f32 %v2269, %v2875
        %v2877 = vpop.f32.mrb[0].mxu0
        %v2878 = vadd.f32 %v2273, %v2877
        %v2879 = vpop.f32.mrb[0].mxu0
        %v2880 = vadd.f32 %v2269, %v2879
        %v2881 = vpop.f32.mrb[0].mxu0
        %v2882 = vadd.f32 %v2273, %v2881
        %2883 = vmatprep.mubr.bf16.mxu0 %v2173
        %2884 = vmatmul.mubr.bf16.gmra.mrb[0].mxu0 %v2172
        %v2885 = vpop.f32.mrb[0].mxu0
        %v2886 = vadd.f32 %v2269, %v2885
        %v2887 = vpop.f32.mrb[0].mxu0
        %v2888 = vadd.f32 %v2273, %v2887
        %v2889 = vpop.f32.mrb[0].mxu0
        %v2890 = vadd.f32 %v2269, %v2889
        %v2891 = vpop.f32.mrb[0].mxu0
        %v2892 = vadd.f32 %v2273, %v2891
        %2893 = vmatprep.mubr.bf16.mxu0 %v2175
        %2894 = vmatmul.mubr.bf16.gmra.mrb[0].mxu0 %v2174
        %v2895 = vpop.f32.mrb[0].mxu0
        %v2896 = vadd.f32 %v2269, %v2895
        %v2897 = vpop.f32.mrb[0].mxu0
        %v2898 = vadd.f32 %v2273, %v2897
        %v2899 = vpop.f32.mrb[0].mxu0
        %v2900 = vadd.f32 %v2269, %v2899
        %v2901 = vpop.f32.mrb[0].mxu0
        %v2902 = vadd.f32 %v2273, %v2901
        %2903 = vmatprep.mubr.bf16.mxu0 %v2177
        %2904 = vmatmul.mubr.bf16.gmra.mrb[0].mxu0 %v2176
        %v2905 = vpop.f32.mrb[0].mxu0
        %v2906 = vadd.f32 %v2269, %v2905
        %v2907 = vpop.f32.mrb[0].mxu0
        %v2908 = vadd.f32 %v2273, %v2907
        %v2909 = vpop.f32.mrb[0].mxu0
        %v2910 = vadd.f32 %v2269, %v2909
        %v2911 = vpop.f32.mrb[0].mxu0
        %v2912 = vadd.f32 %v2273, %v2911
        %2913 = vmatprep.mubr.bf16.mxu0 %v2179
        %2914 = vmatmul.mubr.bf16.gmra.mrb[0].mxu0 %v2178
        %v2915 = vpop.f32.mrb[0].mxu0
        %v2916 = vadd.f32 %v2269, %v2915
        %v2917 = vpop.f32.mrb[0].mxu0
        %v2918 = vadd.f32 %v2273, %v2917
        %v2919 = vpop.f32.mrb[0].mxu0
        %v2920 = vadd.f32 %v2269, %v2919
        %v2921 = vpop.f32.mrb[0].mxu0
        %v2922 = vadd.f32 %v2273, %v2921
        %2923 = vmatprep.mubr.bf16.mxu0 %v2181
        %2924 = vmatmul.mubr.bf16.gmra.mrb[0].mxu0 %v2180
        %v2925 = vpop.f32.mrb[0].mxu0
        %v2926 = vadd.f32 %v2269, %v2925
        %v2927 = vpop.f32.mrb[0].mxu0
        %v2928 = vadd.f32 %v2273, %v2927
        %v2929 = vpop.f32.mrb[0].mxu0
        %v2930 = vadd.f32 %v2269, %v2929
        %v2931 = vpop.f32.mrb[0].mxu0
        %v2932 = vadd.f32 %v2273, %v2931
        %2933 = vmatprep.mubr.bf16.mxu0 %v2183
        %2934 = vmatmul.mubr.bf16.gmra.mrb[0].mxu0 %v2182
        %v2935 = vpop.f32.mrb[0].mxu0
        %v2936 = vadd.f32 %v2269, %v2935
        %v2937 = vpop.f32.mrb[0].mxu0
        %v2938 = vadd.f32 %v2273, %v2937
        %v2939 = vpop.f32.mrb[0].mxu0
        %v2940 = vadd.f32 %v2269, %v2939
        %v2941 = vpop.f32.mrb[0].mxu0
        %v2942 = vadd.f32 %v2273, %v2941
        %2943 = vmatprep.mubr.bf16.mxu0 %v2185
        %2944 = vmatmul.mubr.bf16.gmra.mrb[0].mxu0 %v2184
        %v2945 = vpop.f32.mrb[0].mxu0
        %v2946 = vadd.f32 %v2269, %v2945
        %v2947 = vpop.f32.mrb[0].mxu0
        %v2948 = vadd.f32 %v2273, %v2947
        %v2949 = vpop.f32.mrb[0].mxu0
        %v2950 = vadd.f32 %v2269, %v2949
        %v2951 = vpop.f32.mrb[0].mxu0
        %v2952 = vadd.f32 %v2273, %v2951
        %2953 = vmatprep.mubr.bf16.mxu0 %v2187
        %2954 = vmatmul.mubr.bf16.gmra.mrb[0].mxu0 %v2186
        %v2955 = vpop.f32.mrb[0].mxu0
        %v2956 = vadd.f32 %v2269, %v2955
        %v2957 = vpop.f32.mrb[0].mxu0
        %v2958 = vadd.f32 %v2273, %v2957
        %v2959 = vpop.f32.mrb[0].mxu0
        %v2960 = vadd.f32 %v2269, %v2959
        %v2961 = vpop.f32.mrb[0].mxu0
        %v2962 = vadd.f32 %v2273, %v2961
        %2963 = vmatprep.mubr.bf16.mxu0 %v2189
        %2964 = vmatmul.mubr.bf16.gmra.mrb[0].mxu0 %v2188
        %v2965 = vpop.f32.mrb[0].mxu0
        %v2966 = vadd.f32 %v2269, %v2965
        %v2967 = vpop.f32.mrb[0].mxu0
        %v2968 = vadd.f32 %v2273, %v2967
        %v2969 = vpop.f32.mrb[0].mxu0
        %v2970 = vadd.f32 %v2269, %v2969
        %v2971 = vpop.f32.mrb[0].mxu0
        %v2972 = vadd.f32 %v2273, %v2971
        %2973 = vmatprep.mubr.bf16.mxu0 %v2191
        %2974 = vmatmul.mubr.bf16.gmra.mrb[0].mxu0 %v2190
        %v2975 = vpop.f32.mrb[0].mxu0
        %v2976 = vadd.f32 %v2269, %v2975
        %v2977 = vpop.f32.mrb[0].mxu0
        %v2978 = vadd.f32 %v2273, %v2977
        %v2979 = vpop.f32.mrb[0].mxu0
        %v2980 = vadd.f32 %v2269, %v2979
        %v2981 = vpop.f32.mrb[0].mxu0
        %v2982 = vadd.f32 %v2273, %v2981
        %2983 = vdwg.mxu0
        %v2984 = vxor.u32 %v2633, 2147483648
        %v2985 = vxor.u32 %v2635, 2147483648
        %v2986 = vxor.u32 %v2826, 2147483648
        %v2987 = vxor.u32 %v2828, 2147483648
        %v2988 = vxor.u32 %v2637, 2147483648
        %v2989 = vxor.u32 %v2639, 2147483648
        %v2990 = vxor.u32 %v2830, 2147483648
        %v2991 = vxor.u32 %v2832, 2147483648
        %v2992 = vxor.u32 %v2643, 2147483648
        %v2993 = vxor.u32 %v2645, 2147483648
        %v2994 = vxor.u32 %v2836, 2147483648
        %v2995 = vxor.u32 %v2838, 2147483648
        %v2996 = vxor.u32 %v2647, 2147483648
        %v2997 = vxor.u32 %v2649, 2147483648
        %v2998 = vxor.u32 %v2840, 2147483648
        %v2999 = vxor.u32 %v2842, 2147483648
        %v3000 = vxor.u32 %v2653, 2147483648
        %v3001 = vxor.u32 %v2655, 2147483648
        %v3002 = vxor.u32 %v2846, 2147483648
        %v3003 = vxor.u32 %v2848, 2147483648
        %v3004 = vxor.u32 %v2657, 2147483648
        %v3005 = vxor.u32 %v2659, 2147483648
        %v3006 = vxor.u32 %v2850, 2147483648
        %v3007 = vxor.u32 %v2852, 2147483648
        %v3008 = vxor.u32 %v2663, 2147483648
        %v3009 = vxor.u32 %v2665, 2147483648
        %v3010 = vxor.u32 %v2856, 2147483648
        %v3011 = vxor.u32 %v2858, 2147483648
        %v3012 = vxor.u32 %v2667, 2147483648
        %v3013 = vxor.u32 %v2669, 2147483648
        %v3014 = vxor.u32 %v2860, 2147483648
        %v3015 = vxor.u32 %v2862, 2147483648
        %v3016 = vxor.u32 %v2673, 2147483648
        %v3017 = vxor.u32 %v2675, 2147483648
        %v3018 = vxor.u32 %v2866, 2147483648
        %v3019 = vxor.u32 %v2868, 2147483648
        %v3020 = vxor.u32 %v2677, 2147483648
        %v3021 = vxor.u32 %v2679, 2147483648
        %v3022 = vxor.u32 %v2870, 2147483648
        %v3023 = vxor.u32 %v2872, 2147483648
        %v3024 = vxor.u32 %v2683, 2147483648
        %v3025 = vxor.u32 %v2685, 2147483648
        %v3026 = vxor.u32 %v2876, 2147483648
        %v3027 = vxor.u32 %v2878, 2147483648
        %v3028 = vxor.u32 %v2687, 2147483648
        %v3029 = vxor.u32 %v2689, 2147483648
        %v3030 = vxor.u32 %v2880, 2147483648
        %v3031 = vxor.u32 %v2882, 2147483648
        %v3032 = vxor.u32 %v2693, 2147483648
        %v3033 = vxor.u32 %v2695, 2147483648
        %v3034 = vxor.u32 %v2886, 2147483648
        %v3035 = vxor.u32 %v2888, 2147483648
        %v3036 = vxor.u32 %v2697, 2147483648
        %v3037 = vxor.u32 %v2699, 2147483648
        %v3038 = vxor.u32 %v2890, 2147483648
        %v3039 = vxor.u32 %v2892, 2147483648
        %v3040 = vxor.u32 %v2703, 2147483648
        %v3041 = vxor.u32 %v2705, 2147483648
        %v3042 = vxor.u32 %v2896, 2147483648
        %v3043 = vxor.u32 %v2898, 2147483648
        %v3044 = vxor.u32 %v2707, 2147483648
        %v3045 = vxor.u32 %v2709, 2147483648
        %v3046 = vxor.u32 %v2900, 2147483648
        %v3047 = vxor.u32 %v2902, 2147483648
        %v3048 = vxor.u32 %v2713, 2147483648
        %v3049 = vxor.u32 %v2715, 2147483648
        %v3050 = vxor.u32 %v2906, 2147483648
        %v3051 = vxor.u32 %v2908, 2147483648
        %v3052 = vxor.u32 %v2717, 2147483648
        %v3053 = vxor.u32 %v2719, 2147483648
        %v3054 = vxor.u32 %v2910, 2147483648
        %v3055 = vxor.u32 %v2912, 2147483648
        %v3056 = vxor.u32 %v2723, 2147483648
        %v3057 = vxor.u32 %v2725, 2147483648
        %v3058 = vxor.u32 %v2916, 2147483648
        %v3059 = vxor.u32 %v2918, 2147483648
        %v3060 = vxor.u32 %v2727, 2147483648
        %v3061 = vxor.u32 %v2729, 2147483648
        %v3062 = vxor.u32 %v2920, 2147483648
        %v3063 = vxor.u32 %v2922, 2147483648
        %v3064 = vxor.u32 %v2733, 2147483648
        %v3065 = vxor.u32 %v2735, 2147483648
        %v3066 = vxor.u32 %v2926, 2147483648
        %v3067 = vxor.u32 %v2928, 2147483648
        %v3068 = vxor.u32 %v2737, 2147483648
        %v3069 = vxor.u32 %v2739, 2147483648
        %v3070 = vxor.u32 %v2930, 2147483648
        %v3071 = vxor.u32 %v2932, 2147483648
        %v3072 = vxor.u32 %v2743, 2147483648
        %v3073 = vxor.u32 %v2745, 2147483648
        %v3074 = vxor.u32 %v2936, 2147483648
        %v3075 = vxor.u32 %v2938, 2147483648
        %v3076 = vxor.u32 %v2747, 2147483648
        %v3077 = vxor.u32 %v2749, 2147483648
        %v3078 = vxor.u32 %v2940, 2147483648
        %v3079 = vxor.u32 %v2942, 2147483648
        %v3080 = vxor.u32 %v2753, 2147483648
        %v3081 = vxor.u32 %v2755, 2147483648
        %v3082 = vxor.u32 %v2946, 2147483648
        %v3083 = vxor.u32 %v2948, 2147483648
        %v3084 = vxor.u32 %v2757, 2147483648
        %v3085 = vxor.u32 %v2759, 2147483648
        %v3086 = vxor.u32 %v2950, 2147483648
        %v3087 = vxor.u32 %v2952, 2147483648
        %v3088 = vxor.u32 %v2763, 2147483648
        %v3089 = vxor.u32 %v2765, 2147483648
        %v3090 = vxor.u32 %v2956, 2147483648
        %v3091 = vxor.u32 %v2958, 2147483648
        %v3092 = vxor.u32 %v2767, 2147483648
        %v3093 = vxor.u32 %v2769, 2147483648
        %v3094 = vxor.u32 %v2960, 2147483648
        %v3095 = vxor.u32 %v2962, 2147483648
        %v3096 = vxor.u32 %v2773, 2147483648
        %v3097 = vxor.u32 %v2775, 2147483648
        %v3098 = vxor.u32 %v2966, 2147483648
        %v3099 = vxor.u32 %v2968, 2147483648
        %v3100 = vxor.u32 %v2777, 2147483648
        %v3101 = vxor.u32 %v2779, 2147483648
        %v3102 = vxor.u32 %v2970, 2147483648
        %v3103 = vxor.u32 %v2972, 2147483648
        %v3104 = vxor.u32 %v2783, 2147483648
        %v3105 = vxor.u32 %v2785, 2147483648
        %v3106 = vxor.u32 %v2976, 2147483648
        %v3107 = vxor.u32 %v2978, 2147483648
        %v3108 = vxor.u32 %v2787, 2147483648
        %v3109 = vxor.u32 %v2789, 2147483648
        %v3110 = vxor.u32 %v2980, 2147483648
        %v3111 = vxor.u32 %v2982, 2147483648
        %v3112 = vmul.f32 %v2984, 1.442695
        %v3113 = vpow.pop %v3112
        %v3114 = vmul.f32 %v2985, 1.442695
        %v3115 = vpow.pop %v3114
        %v3116 = vmul.f32 %v2986, 1.442695
        %v3117 = vpow.pop %v3116
        %v3118 = vmul.f32 %v2987, 1.442695
        %v3119 = vpow.pop %v3118
        %v3120 = vmul.f32 %v2988, 1.442695
        %v3121 = vpow.pop %v3120
        %v3122 = vmul.f32 %v2989, 1.442695
        %v3123 = vpow.pop %v3122
        %v3124 = vmul.f32 %v2990, 1.442695
        %v3125 = vpow.pop %v3124
        %v3126 = vmul.f32 %v2991, 1.442695
        %v3127 = vpow.pop %v3126
        %v3128 = vmul.f32 %v2992, 1.442695
        %v3129 = vpow.pop %v3128
        %v3130 = vmul.f32 %v2993, 1.442695
        %v3131 = vpow.pop %v3130
        %v3132 = vmul.f32 %v2994, 1.442695
        %v3133 = vpow.pop %v3132
        %v3134 = vmul.f32 %v2995, 1.442695
        %v3135 = vpow.pop %v3134
        %v3136 = vmul.f32 %v2996, 1.442695
        %v3137 = vpow.pop %v3136
        %v3138 = vmul.f32 %v2997, 1.442695
        %v3139 = vpow.pop %v3138
        %v3140 = vmul.f32 %v2998, 1.442695
        %v3141 = vpow.pop %v3140
        %v3142 = vmul.f32 %v2999, 1.442695
        %v3143 = vpow.pop %v3142
        %v3144 = vmul.f32 %v3000, 1.442695
        %v3145 = vpow.pop %v3144
        %v3146 = vmul.f32 %v3001, 1.442695
        %v3147 = vpow.pop %v3146
        %v3148 = vmul.f32 %v3002, 1.442695
        %v3149 = vpow.pop %v3148
        %v3150 = vmul.f32 %v3003, 1.442695
        %v3151 = vpow.pop %v3150
        %v3152 = vmul.f32 %v3004, 1.442695
        %v3153 = vpow.pop %v3152
        %v3154 = vmul.f32 %v3005, 1.442695
        %v3155 = vpow.pop %v3154
        %v3156 = vmul.f32 %v3006, 1.442695
        %v3157 = vpow.pop %v3156
        %v3158 = vmul.f32 %v3007, 1.442695
        %v3159 = vpow.pop %v3158
        %v3160 = vmul.f32 %v3008, 1.442695
        %v3161 = vpow.pop %v3160
        %v3162 = vmul.f32 %v3009, 1.442695
        %v3163 = vpow.pop %v3162
        %v3164 = vmul.f32 %v3010, 1.442695
        %v3165 = vpow.pop %v3164
        %v3166 = vmul.f32 %v3011, 1.442695
        %v3167 = vpow.pop %v3166
        %v3168 = vmul.f32 %v3012, 1.442695
        %v3169 = vpow.pop %v3168
        %v3170 = vmul.f32 %v3013, 1.442695
        %v3171 = vpow.pop %v3170
        %v3172 = vmul.f32 %v3014, 1.442695
        %v3173 = vpow.pop %v3172
        %v3174 = vmul.f32 %v3015, 1.442695
        %v3175 = vpow.pop %v3174
        %v3176 = vmul.f32 %v3016, 1.442695
        %v3177 = vpow.pop %v3176
        %v3178 = vmul.f32 %v3017, 1.442695
        %v3179 = vpow.pop %v3178
        %v3180 = vmul.f32 %v3018, 1.442695
        %v3181 = vpow.pop %v3180
        %v3182 = vmul.f32 %v3019, 1.442695
        %v3183 = vpow.pop %v3182
        %v3184 = vmul.f32 %v3020, 1.442695
        %v3185 = vpow.pop %v3184
        %v3186 = vmul.f32 %v3021, 1.442695
        %v3187 = vpow.pop %v3186
        %v3188 = vmul.f32 %v3022, 1.442695
        %v3189 = vpow.pop %v3188
        %v3190 = vmul.f32 %v3023, 1.442695
        %v3191 = vpow.pop %v3190
        %v3192 = vmul.f32 %v3024, 1.442695
        %v3193 = vpow.pop %v3192
        %v3194 = vmul.f32 %v3025, 1.442695
        %v3195 = vpow.pop %v3194
        %v3196 = vmul.f32 %v3026, 1.442695
        %v3197 = vpow.pop %v3196
        %v3198 = vmul.f32 %v3027, 1.442695
        %v3199 = vpow.pop %v3198
        %v3200 = vmul.f32 %v3028, 1.442695
        %v3201 = vpow.pop %v3200
        %v3202 = vmul.f32 %v3029, 1.442695
        %v3203 = vpow.pop %v3202
        %v3204 = vmul.f32 %v3030, 1.442695
        %v3205 = vpow.pop %v3204
        %v3206 = vmul.f32 %v3031, 1.442695
        %v3207 = vpow.pop %v3206
        %v3208 = vmul.f32 %v3032, 1.442695
        %v3209 = vpow.pop %v3208
        %v3210 = vmul.f32 %v3033, 1.442695
        %v3211 = vpow.pop %v3210
        %v3212 = vmul.f32 %v3034, 1.442695
        %v3213 = vpow.pop %v3212
        %v3214 = vmul.f32 %v3035, 1.442695
        %v3215 = vpow.pop %v3214
        %v3216 = vmul.f32 %v3036, 1.442695
        %v3217 = vpow.pop %v3216
        %v3218 = vmul.f32 %v3037, 1.442695
        %v3219 = vpow.pop %v3218
        %v3220 = vmul.f32 %v3038, 1.442695
        %v3221 = vpow.pop %v3220
        %v3222 = vmul.f32 %v3039, 1.442695
        %v3223 = vpow.pop %v3222
        %v3224 = vmul.f32 %v3040, 1.442695
        %v3225 = vpow.pop %v3224
        %v3226 = vmul.f32 %v3041, 1.442695
        %v3227 = vpow.pop %v3226
        %v3228 = vmul.f32 %v3042, 1.442695
        %v3229 = vpow.pop %v3228
        %v3230 = vmul.f32 %v3043, 1.442695
        %v3231 = vpow.pop %v3230
        %v3232 = vmul.f32 %v3044, 1.442695
        %v3233 = vpow.pop %v3232
        %v3234 = vmul.f32 %v3045, 1.442695
        %v3235 = vpow.pop %v3234
        %v3236 = vmul.f32 %v3046, 1.442695
        %v3237 = vpow.pop %v3236
        %v3238 = vmul.f32 %v3047, 1.442695
        %v3239 = vpow.pop %v3238
        %v3240 = vmul.f32 %v3048, 1.442695
        %v3241 = vpow.pop %v3240
        %v3242 = vmul.f32 %v3049, 1.442695
        %v3243 = vpow.pop %v3242
        %v3244 = vmul.f32 %v3050, 1.442695
        %v3245 = vpow.pop %v3244
        %v3246 = vmul.f32 %v3051, 1.442695
        %v3247 = vpow.pop %v3246
        %v3248 = vmul.f32 %v3052, 1.442695
        %v3249 = vpow.pop %v3248
        %v3250 = vmul.f32 %v3053, 1.442695
        %v3251 = vpow.pop %v3250
        %v3252 = vmul.f32 %v3054, 1.442695
        %v3253 = vpow.pop %v3252
        %v3254 = vmul.f32 %v3055, 1.442695
        %v3255 = vpow.pop %v3254
        %v3256 = vmul.f32 %v3056, 1.442695
        %v3257 = vpow.pop %v3256
        %v3258 = vmul.f32 %v3057, 1.442695
        %v3259 = vpow.pop %v3258
        %v3260 = vmul.f32 %v3058, 1.442695
        %v3261 = vpow.pop %v3260
        %v3262 = vmul.f32 %v3059, 1.442695
        %v3263 = vpow.pop %v3262
        %v3264 = vmul.f32 %v3060, 1.442695
        %v3265 = vpow.pop %v3264
        %v3266 = vmul.f32 %v3061, 1.442695
        %v3267 = vpow.pop %v3266
        %v3268 = vmul.f32 %v3062, 1.442695
        %v3269 = vpow.pop %v3268
        %v3270 = vmul.f32 %v3063, 1.442695
        %v3271 = vpow.pop %v3270
        %v3272 = vmul.f32 %v3064, 1.442695
        %v3273 = vpow.pop %v3272
        %v3274 = vmul.f32 %v3065, 1.442695
        %v3275 = vpow.pop %v3274
        %v3276 = vmul.f32 %v3066, 1.442695
        %v3277 = vpow.pop %v3276
        %v3278 = vmul.f32 %v3067, 1.442695
        %v3279 = vpow.pop %v3278
        %v3280 = vmul.f32 %v3068, 1.442695
        %v3281 = vpow.pop %v3280
        %v3282 = vmul.f32 %v3069, 1.442695
        %v3283 = vpow.pop %v3282
        %v3284 = vmul.f32 %v3070, 1.442695
        %v3285 = vpow.pop %v3284
        %v3286 = vmul.f32 %v3071, 1.442695
        %v3287 = vpow.pop %v3286
        %v3288 = vmul.f32 %v3072, 1.442695
        %v3289 = vpow.pop %v3288
        %v3290 = vmul.f32 %v3073, 1.442695
        %v3291 = vpow.pop %v3290
        %v3292 = vmul.f32 %v3074, 1.442695
        %v3293 = vpow.pop %v3292
        %v3294 = vmul.f32 %v3075, 1.442695
        %v3295 = vpow.pop %v3294
        %v3296 = vmul.f32 %v3076, 1.442695
        %v3297 = vpow.pop %v3296
        %v3298 = vmul.f32 %v3077, 1.442695
        %v3299 = vpow.pop %v3298
        %v3300 = vmul.f32 %v3078, 1.442695
        %v3301 = vpow.pop %v3300
        %v3302 = vmul.f32 %v3079, 1.442695
        %v3303 = vpow.pop %v3302
        %v3304 = vmul.f32 %v3080, 1.442695
        %v3305 = vpow.pop %v3304
        %v3306 = vmul.f32 %v3081, 1.442695
        %v3307 = vpow.pop %v3306
        %v3308 = vmul.f32 %v3082, 1.442695
        %v3309 = vpow.pop %v3308
        %v3310 = vmul.f32 %v3083, 1.442695
        %v3311 = vpow.pop %v3310
        %v3312 = vmul.f32 %v3084, 1.442695
        %v3313 = vpow.pop %v3312
        %v3314 = vmul.f32 %v3085, 1.442695
        %v3315 = vpow.pop %v3314
        %v3316 = vmul.f32 %v3086, 1.442695
        %v3317 = vpow.pop %v3316
        %v3318 = vmul.f32 %v3087, 1.442695
        %v3319 = vpow.pop %v3318
        %v3320 = vmul.f32 %v3088, 1.442695
        %v3321 = vpow.pop %v3320
        %v3322 = vmul.f32 %v3089, 1.442695
        %v3323 = vpow.pop %v3322
        %v3324 = vmul.f32 %v3090, 1.442695
        %v3325 = vpow.pop %v3324
        %v3326 = vmul.f32 %v3091, 1.442695
        %v3327 = vpow.pop %v3326
        %v3328 = vmul.f32 %v3092, 1.442695
        %v3329 = vpow.pop %v3328
        %v3330 = vmul.f32 %v3093, 1.442695
        %v3331 = vpow.pop %v3330
        %v3332 = vmul.f32 %v3094, 1.442695
        %v3333 = vpow.pop %v3332
        %v3334 = vmul.f32 %v3095, 1.442695
        %v3335 = vpow.pop %v3334
        %v3336 = vmul.f32 %v3096, 1.442695
        %v3337 = vpow.pop %v3336
        %v3338 = vmul.f32 %v3097, 1.442695
        %v3339 = vpow.pop %v3338
        %v3340 = vmul.f32 %v3098, 1.442695
        %v3341 = vpow.pop %v3340
        %v3342 = vmul.f32 %v3099, 1.442695
        %v3343 = vpow.pop %v3342
        %v3344 = vmul.f32 %v3100, 1.442695
        %v3345 = vpow.pop %v3344
        %v3346 = vmul.f32 %v3101, 1.442695
        %v3347 = vpow.pop %v3346
        %v3348 = vmul.f32 %v3102, 1.442695
        %v3349 = vpow.pop %v3348
        %v3350 = vmul.f32 %v3103, 1.442695
        %v3351 = vpow.pop %v3350
        %v3352 = vmul.f32 %v3104, 1.442695
        %v3353 = vpow.pop %v3352
        %v3354 = vmul.f32 %v3105, 1.442695
        %v3355 = vpow.pop %v3354
        %v3356 = vmul.f32 %v3106, 1.442695
        %v3357 = vpow.pop %v3356
        %v3358 = vmul.f32 %v3107, 1.442695
        %v3359 = vpow.pop %v3358
        %v3360 = vmul.f32 %v3108, 1.442695
        %v3361 = vpow.pop %v3360
        %v3362 = vmul.f32 %v3109, 1.442695
        %v3363 = vpow.pop %v3362
        %v3364 = vmul.f32 %v3110, 1.442695
        %v3365 = vpow.pop %v3364
        %v3366 = vmul.f32 %v3111, 1.442695
        %v3367 = vpow.pop %v3366
        %v3368 = vadd.f32 %v3113, 1.0
        %v3369 = vadd.f32 %v3115, 1.0
        %v3370 = vadd.f32 %v3117, 1.0
        %v3371 = vadd.f32 %v3119, 1.0
        %v3372 = vadd.f32 %v3121, 1.0
        %v3373 = vadd.f32 %v3123, 1.0
        %v3374 = vadd.f32 %v3125, 1.0
        %v3375 = vadd.f32 %v3127, 1.0
        %v3376 = vadd.f32 %v3129, 1.0
        %v3377 = vadd.f32 %v3131, 1.0
        %v3378 = vadd.f32 %v3133, 1.0
        %v3379 = vadd.f32 %v3135, 1.0
        %v3380 = vadd.f32 %v3137, 1.0
        %v3381 = vadd.f32 %v3139, 1.0
        %v3382 = vadd.f32 %v3141, 1.0
        %v3383 = vadd.f32 %v3143, 1.0
        %v3384 = vadd.f32 %v3145, 1.0
        %v3385 = vadd.f32 %v3147, 1.0
        %v3386 = vadd.f32 %v3149, 1.0
        %v3387 = vadd.f32 %v3151, 1.0
        %v3388 = vadd.f32 %v3153, 1.0
        %v3389 = vadd.f32 %v3155, 1.0
        %v3390 = vadd.f32 %v3157, 1.0
        %v3391 = vadd.f32 %v3159, 1.0
        %v3392 = vadd.f32 %v3161, 1.0
        %v3393 = vadd.f32 %v3163, 1.0
        %v3394 = vadd.f32 %v3165, 1.0
        %v3395 = vadd.f32 %v3167, 1.0
        %v3396 = vadd.f32 %v3169, 1.0
        %v3397 = vadd.f32 %v3171, 1.0
        %v3398 = vadd.f32 %v3173, 1.0
        %v3399 = vadd.f32 %v3175, 1.0
        %v3400 = vadd.f32 %v3177, 1.0
        %v3401 = vadd.f32 %v3179, 1.0
        %v3402 = vadd.f32 %v3181, 1.0
        %v3403 = vadd.f32 %v3183, 1.0
        %v3404 = vadd.f32 %v3185, 1.0
        %v3405 = vadd.f32 %v3187, 1.0
        %v3406 = vadd.f32 %v3189, 1.0
        %v3407 = vadd.f32 %v3191, 1.0
        %v3408 = vadd.f32 %v3193, 1.0
        %v3409 = vadd.f32 %v3195, 1.0
        %v3410 = vadd.f32 %v3197, 1.0
        %v3411 = vadd.f32 %v3199, 1.0
        %v3412 = vadd.f32 %v3201, 1.0
        %v3413 = vadd.f32 %v3203, 1.0
        %v3414 = vadd.f32 %v3205, 1.0
        %v3415 = vadd.f32 %v3207, 1.0
        %v3416 = vadd.f32 %v3209, 1.0
        %v3417 = vadd.f32 %v3211, 1.0
        %v3418 = vadd.f32 %v3213, 1.0
        %v3419 = vadd.f32 %v3215, 1.0
        %v3420 = vadd.f32 %v3217, 1.0
        %v3421 = vadd.f32 %v3219, 1.0
        %v3422 = vadd.f32 %v3221, 1.0
        %v3423 = vadd.f32 %v3223, 1.0
        %v3424 = vadd.f32 %v3225, 1.0
        %v3425 = vadd.f32 %v3227, 1.0
        %v3426 = vadd.f32 %v3229, 1.0
        %v3427 = vadd.f32 %v3231, 1.0
        %v3428 = vadd.f32 %v3233, 1.0
        %v3429 = vadd.f32 %v3235, 1.0
        %v3430 = vadd.f32 %v3237, 1.0
        %v3431 = vadd.f32 %v3239, 1.0
        %v3432 = vadd.f32 %v3241, 1.0
        %v3433 = vadd.f32 %v3243, 1.0
        %v3434 = vadd.f32 %v3245, 1.0
        %v3435 = vadd.f32 %v3247, 1.0
        %v3436 = vadd.f32 %v3249, 1.0
        %v3437 = vadd.f32 %v3251, 1.0
        %v3438 = vadd.f32 %v3253, 1.0
        %v3439 = vadd.f32 %v3255, 1.0
        %v3440 = vadd.f32 %v3257, 1.0
        %v3441 = vadd.f32 %v3259, 1.0
        %v3442 = vadd.f32 %v3261, 1.0
        %v3443 = vadd.f32 %v3263, 1.0
        %v3444 = vadd.f32 %v3265, 1.0
        %v3445 = vadd.f32 %v3267, 1.0
        %v3446 = vadd.f32 %v3269, 1.0
        %v3447 = vadd.f32 %v3271, 1.0
        %v3448 = vadd.f32 %v3273, 1.0
        %v3449 = vadd.f32 %v3275, 1.0
        %v3450 = vadd.f32 %v3277, 1.0
        %v3451 = vadd.f32 %v3279, 1.0
        %v3452 = vadd.f32 %v3281, 1.0
        %v3453 = vadd.f32 %v3283, 1.0
        %v3454 = vadd.f32 %v3285, 1.0
        %v3455 = vadd.f32 %v3287, 1.0
        %v3456 = vadd.f32 %v3289, 1.0
        %v3457 = vadd.f32 %v3291, 1.0
        %v3458 = vadd.f32 %v3293, 1.0
        %v3459 = vadd.f32 %v3295, 1.0
        %v3460 = vadd.f32 %v3297, 1.0
        %v3461 = vadd.f32 %v3299, 1.0
        %v3462 = vadd.f32 %v3301, 1.0
        %v3463 = vadd.f32 %v3303, 1.0
        %v3464 = vadd.f32 %v3305, 1.0
        %v3465 = vadd.f32 %v3307, 1.0
        %v3466 = vadd.f32 %v3309, 1.0
        %v3467 = vadd.f32 %v3311, 1.0
        %v3468 = vadd.f32 %v3313, 1.0
        %v3469 = vadd.f32 %v3315, 1.0
        %v3470 = vadd.f32 %v3317, 1.0
        %v3471 = vadd.f32 %v3319, 1.0
        %v3472 = vadd.f32 %v3321, 1.0
        %v3473 = vadd.f32 %v3323, 1.0
        %v3474 = vadd.f32 %v3325, 1.0
        %v3475 = vadd.f32 %v3327, 1.0
        %v3476 = vadd.f32 %v3329, 1.0
        %v3477 = vadd.f32 %v3331, 1.0
        %v3478 = vadd.f32 %v3333, 1.0
        %v3479 = vadd.f32 %v3335, 1.0
        %v3480 = vadd.f32 %v3337, 1.0
        %v3481 = vadd.f32 %v3339, 1.0
        %v3482 = vadd.f32 %v3341, 1.0
        %v3483 = vadd.f32 %v3343, 1.0
        %v3484 = vadd.f32 %v3345, 1.0
        %v3485 = vadd.f32 %v3347, 1.0
        %v3486 = vadd.f32 %v3349, 1.0
        %v3487 = vadd.f32 %v3351, 1.0
        %v3488 = vadd.f32 %v3353, 1.0
        %v3489 = vadd.f32 %v3355, 1.0
        %v3490 = vadd.f32 %v3357, 1.0
        %v3491 = vadd.f32 %v3359, 1.0
        %v3492 = vadd.f32 %v3361, 1.0
        %v3493 = vadd.f32 %v3363, 1.0
        %v3494 = vadd.f32 %v3365, 1.0
        %v3495 = vadd.f32 %v3367, 1.0
        %v3496 = vrcp.pop %v3368
        %v3497 = vmul.f32 1.0, %v3496
        %v3498 = vrcp.pop %v3369
        %v3499 = vmul.f32 1.0, %v3498
        %v3500 = vrcp.pop %v3370
        %v3501 = vmul.f32 1.0, %v3500
        %v3502 = vrcp.pop %v3371
        %v3503 = vmul.f32 1.0, %v3502
        %v3504 = vrcp.pop %v3372
        %v3505 = vmul.f32 1.0, %v3504
        %v3506 = vrcp.pop %v3373
        %v3507 = vmul.f32 1.0, %v3506
        %v3508 = vrcp.pop %v3374
        %v3509 = vmul.f32 1.0, %v3508
        %v3510 = vrcp.pop %v3375
        %v3511 = vmul.f32 1.0, %v3510
        %v3512 = vrcp.pop %v3376
        %v3513 = vmul.f32 1.0, %v3512
        %v3514 = vrcp.pop %v3377
        %v3515 = vmul.f32 1.0, %v3514
        %v3516 = vrcp.pop %v3378
        %v3517 = vmul.f32 1.0, %v3516
        %v3518 = vrcp.pop %v3379
        %v3519 = vmul.f32 1.0, %v3518
        %v3520 = vrcp.pop %v3380
        %v3521 = vmul.f32 1.0, %v3520
        %v3522 = vrcp.pop %v3381
        %v3523 = vmul.f32 1.0, %v3522
        %v3524 = vrcp.pop %v3382
        %v3525 = vmul.f32 1.0, %v3524
        %v3526 = vrcp.pop %v3383
        %v3527 = vmul.f32 1.0, %v3526
        %v3528 = vrcp.pop %v3384
        %v3529 = vmul.f32 1.0, %v3528
        %v3530 = vrcp.pop %v3385
        %v3531 = vmul.f32 1.0, %v3530
        %v3532 = vrcp.pop %v3386
        %v3533 = vmul.f32 1.0, %v3532
        %v3534 = vrcp.pop %v3387
        %v3535 = vmul.f32 1.0, %v3534
        %v3536 = vrcp.pop %v3388
        %v3537 = vmul.f32 1.0, %v3536
        %v3538 = vrcp.pop %v3389
        %v3539 = vmul.f32 1.0, %v3538
        %v3540 = vrcp.pop %v3390
        %v3541 = vmul.f32 1.0, %v3540
        %v3542 = vrcp.pop %v3391
        %v3543 = vmul.f32 1.0, %v3542
        %v3544 = vrcp.pop %v3392
        %v3545 = vmul.f32 1.0, %v3544
        %v3546 = vrcp.pop %v3393
        %v3547 = vmul.f32 1.0, %v3546
        %v3548 = vrcp.pop %v3394
        %v3549 = vmul.f32 1.0, %v3548
        %v3550 = vrcp.pop %v3395
        %v3551 = vmul.f32 1.0, %v3550
        %v3552 = vrcp.pop %v3396
        %v3553 = vmul.f32 1.0, %v3552
        %v3554 = vrcp.pop %v3397
        %v3555 = vmul.f32 1.0, %v3554
        %v3556 = vrcp.pop %v3398
        %v3557 = vmul.f32 1.0, %v3556
        %v3558 = vrcp.pop %v3399
        %v3559 = vmul.f32 1.0, %v3558
        %v3560 = vrcp.pop %v3400
        %v3561 = vmul.f32 1.0, %v3560
        %v3562 = vrcp.pop %v3401
        %v3563 = vmul.f32 1.0, %v3562
        %v3564 = vrcp.pop %v3402
        %v3565 = vmul.f32 1.0, %v3564
        %v3566 = vrcp.pop %v3403
        %v3567 = vmul.f32 1.0, %v3566
        %v3568 = vrcp.pop %v3404
        %v3569 = vmul.f32 1.0, %v3568
        %v3570 = vrcp.pop %v3405
        %v3571 = vmul.f32 1.0, %v3570
        %v3572 = vrcp.pop %v3406
        %v3573 = vmul.f32 1.0, %v3572
        %v3574 = vrcp.pop %v3407
        %v3575 = vmul.f32 1.0, %v3574
        %v3576 = vrcp.pop %v3408
        %v3577 = vmul.f32 1.0, %v3576
        %v3578 = vrcp.pop %v3409
        %v3579 = vmul.f32 1.0, %v3578
        %v3580 = vrcp.pop %v3410
        %v3581 = vmul.f32 1.0, %v3580
        %v3582 = vrcp.pop %v3411
        %v3583 = vmul.f32 1.0, %v3582
        %v3584 = vrcp.pop %v3412
        %v3585 = vmul.f32 1.0, %v3584
        %v3586 = vrcp.pop %v3413
        %v3587 = vmul.f32 1.0, %v3586
        %v3588 = vrcp.pop %v3414
        %v3589 = vmul.f32 1.0, %v3588
        %v3590 = vrcp.pop %v3415
        %v3591 = vmul.f32 1.0, %v3590
        %v3592 = vrcp.pop %v3416
        %v3593 = vmul.f32 1.0, %v3592
        %v3594 = vrcp.pop %v3417
        %v3595 = vmul.f32 1.0, %v3594
        %v3596 = vrcp.pop %v3418
        %v3597 = vmul.f32 1.0, %v3596
        %v3598 = vrcp.pop %v3419
        %v3599 = vmul.f32 1.0, %v3598
        %v3600 = vrcp.pop %v3420
        %v3601 = vmul.f32 1.0, %v3600
        %v3602 = vrcp.pop %v3421
        %v3603 = vmul.f32 1.0, %v3602
        %v3604 = vrcp.pop %v3422
        %v3605 = vmul.f32 1.0, %v3604
        %v3606 = vrcp.pop %v3423
        %v3607 = vmul.f32 1.0, %v3606
        %v3608 = vrcp.pop %v3424
        %v3609 = vmul.f32 1.0, %v3608
        %v3610 = vrcp.pop %v3425
        %v3611 = vmul.f32 1.0, %v3610
        %v3612 = vrcp.pop %v3426
        %v3613 = vmul.f32 1.0, %v3612
        %v3614 = vrcp.pop %v3427
        %v3615 = vmul.f32 1.0, %v3614
        %v3616 = vrcp.pop %v3428
        %v3617 = vmul.f32 1.0, %v3616
        %v3618 = vrcp.pop %v3429
        %v3619 = vmul.f32 1.0, %v3618
        %v3620 = vrcp.pop %v3430
        %v3621 = vmul.f32 1.0, %v3620
        %v3622 = vrcp.pop %v3431
        %v3623 = vmul.f32 1.0, %v3622
        %v3624 = vrcp.pop %v3432
        %v3625 = vmul.f32 1.0, %v3624
        %v3626 = vrcp.pop %v3433
        %v3627 = vmul.f32 1.0, %v3626
        %v3628 = vrcp.pop %v3434
        %v3629 = vmul.f32 1.0, %v3628
        %v3630 = vrcp.pop %v3435
        %v3631 = vmul.f32 1.0, %v3630
        %v3632 = vrcp.pop %v3436
        %v3633 = vmul.f32 1.0, %v3632
        %v3634 = vrcp.pop %v3437
        %v3635 = vmul.f32 1.0, %v3634
        %v3636 = vrcp.pop %v3438
        %v3637 = vmul.f32 1.0, %v3636
        %v3638 = vrcp.pop %v3439
        %v3639 = vmul.f32 1.0, %v3638
        %v3640 = vrcp.pop %v3440
        %v3641 = vmul.f32 1.0, %v3640
        %v3642 = vrcp.pop %v3441
        %v3643 = vmul.f32 1.0, %v3642
        %v3644 = vrcp.pop %v3442
        %v3645 = vmul.f32 1.0, %v3644
        %v3646 = vrcp.pop %v3443
        %v3647 = vmul.f32 1.0, %v3646
        %v3648 = vrcp.pop %v3444
        %v3649 = vmul.f32 1.0, %v3648
        %v3650 = vrcp.pop %v3445
        %v3651 = vmul.f32 1.0, %v3650
        %v3652 = vrcp.pop %v3446
        %v3653 = vmul.f32 1.0, %v3652
        %v3654 = vrcp.pop %v3447
        %v3655 = vmul.f32 1.0, %v3654
        %v3656 = vrcp.pop %v3448
        %v3657 = vmul.f32 1.0, %v3656
        %v3658 = vrcp.pop %v3449
        %v3659 = vmul.f32 1.0, %v3658
        %v3660 = vrcp.pop %v3450
        %v3661 = vmul.f32 1.0, %v3660
        %v3662 = vrcp.pop %v3451
        %v3663 = vmul.f32 1.0, %v3662
        %v3664 = vrcp.pop %v3452
        %v3665 = vmul.f32 1.0, %v3664
        %v3666 = vrcp.pop %v3453
        %v3667 = vmul.f32 1.0, %v3666
        %v3668 = vrcp.pop %v3454
        %v3669 = vmul.f32 1.0, %v3668
        %v3670 = vrcp.pop %v3455
        %v3671 = vmul.f32 1.0, %v3670
        %v3672 = vrcp.pop %v3456
        %v3673 = vmul.f32 1.0, %v3672
        %v3674 = vrcp.pop %v3457
        %v3675 = vmul.f32 1.0, %v3674
        %v3676 = vrcp.pop %v3458
        %v3677 = vmul.f32 1.0, %v3676
        %v3678 = vrcp.pop %v3459
        %v3679 = vmul.f32 1.0, %v3678
        %v3680 = vrcp.pop %v3460
        %v3681 = vmul.f32 1.0, %v3680
        %v3682 = vrcp.pop %v3461
        %v3683 = vmul.f32 1.0, %v3682
        %v3684 = vrcp.pop %v3462
        %v3685 = vmul.f32 1.0, %v3684
        %v3686 = vrcp.pop %v3463
        %v3687 = vmul.f32 1.0, %v3686
        %v3688 = vrcp.pop %v3464
        %v3689 = vmul.f32 1.0, %v3688
        %v3690 = vrcp.pop %v3465
        %v3691 = vmul.f32 1.0, %v3690
        %v3692 = vrcp.pop %v3466
        %v3693 = vmul.f32 1.0, %v3692
        %v3694 = vrcp.pop %v3467
        %v3695 = vmul.f32 1.0, %v3694
        %v3696 = vrcp.pop %v3468
        %v3697 = vmul.f32 1.0, %v3696
        %v3698 = vrcp.pop %v3469
        %v3699 = vmul.f32 1.0, %v3698
        %v3700 = vrcp.pop %v3470
        %v3701 = vmul.f32 1.0, %v3700
        %v3702 = vrcp.pop %v3471
        %v3703 = vmul.f32 1.0, %v3702
        %v3704 = vrcp.pop %v3472
        %v3705 = vmul.f32 1.0, %v3704
        %v3706 = vrcp.pop %v3473
        %v3707 = vmul.f32 1.0, %v3706
        %v3708 = vrcp.pop %v3474
        %v3709 = vmul.f32 1.0, %v3708
        %v3710 = vrcp.pop %v3475
        %v3711 = vmul.f32 1.0, %v3710
        %v3712 = vrcp.pop %v3476
        %v3713 = vmul.f32 1.0, %v3712
        %v3714 = vrcp.pop %v3477
        %v3715 = vmul.f32 1.0, %v3714
        %v3716 = vrcp.pop %v3478
        %v3717 = vmul.f32 1.0, %v3716
        %v3718 = vrcp.pop %v3479
        %v3719 = vmul.f32 1.0, %v3718
        %v3720 = vrcp.pop %v3480
        %v3721 = vmul.f32 1.0, %v3720
        %v3722 = vrcp.pop %v3481
        %v3723 = vmul.f32 1.0, %v3722
        %v3724 = vrcp.pop %v3482
        %v3725 = vmul.f32 1.0, %v3724
        %v3726 = vrcp.pop %v3483
        %v3727 = vmul.f32 1.0, %v3726
        %v3728 = vrcp.pop %v3484
        %v3729 = vmul.f32 1.0, %v3728
        %v3730 = vrcp.pop %v3485
        %v3731 = vmul.f32 1.0, %v3730
        %v3732 = vrcp.pop %v3486
        %v3733 = vmul.f32 1.0, %v3732
        %v3734 = vrcp.pop %v3487
        %v3735 = vmul.f32 1.0, %v3734
        %v3736 = vrcp.pop %v3488
        %v3737 = vmul.f32 1.0, %v3736
        %v3738 = vrcp.pop %v3489
        %v3739 = vmul.f32 1.0, %v3738
        %v3740 = vrcp.pop %v3490
        %v3741 = vmul.f32 1.0, %v3740
        %v3742 = vrcp.pop %v3491
        %v3743 = vmul.f32 1.0, %v3742
        %v3744 = vrcp.pop %v3492
        %v3745 = vmul.f32 1.0, %v3744
        %v3746 = vrcp.pop %v3493
        %v3747 = vmul.f32 1.0, %v3746
        %v3748 = vrcp.pop %v3494
        %v3749 = vmul.f32 1.0, %v3748
        %v3750 = vrcp.pop %v3495
        %v3751 = vmul.f32 1.0, %v3750
        %v3752 = vmul.f32 %v2633, %v3497
        %v3753 = vmul.f32 %v2635, %v3499
        %v3754 = vmul.f32 %v2826, %v3501
        %v3755 = vmul.f32 %v2828, %v3503
        %v3756 = vmul.f32 %v2637, %v3505
        %v3757 = vmul.f32 %v2639, %v3507
        %v3758 = vmul.f32 %v2830, %v3509
        %v3759 = vmul.f32 %v2832, %v3511
        %v3760 = vmul.f32 %v2643, %v3513
        %v3761 = vmul.f32 %v2645, %v3515
        %v3762 = vmul.f32 %v2836, %v3517
        %v3763 = vmul.f32 %v2838, %v3519
        %v3764 = vmul.f32 %v2647, %v3521
        %v3765 = vmul.f32 %v2649, %v3523
        %v3766 = vmul.f32 %v2840, %v3525
        %v3767 = vmul.f32 %v2842, %v3527
        %v3768 = vmul.f32 %v2653, %v3529
        %v3769 = vmul.f32 %v2655, %v3531
        %v3770 = vmul.f32 %v2846, %v3533
        %v3771 = vmul.f32 %v2848, %v3535
        %v3772 = vmul.f32 %v2657, %v3537
        %v3773 = vmul.f32 %v2659, %v3539
        %v3774 = vmul.f32 %v2850, %v3541
        %v3775 = vmul.f32 %v2852, %v3543
        %v3776 = vmul.f32 %v2663, %v3545
        %v3777 = vmul.f32 %v2665, %v3547
        %v3778 = vmul.f32 %v2856, %v3549
        %v3779 = vmul.f32 %v2858, %v3551
        %v3780 = vmul.f32 %v2667, %v3553
        %v3781 = vmul.f32 %v2669, %v3555
        %v3782 = vmul.f32 %v2860, %v3557
        %v3783 = vmul.f32 %v2862, %v3559
        %v3784 = vmul.f32 %v2673, %v3561
        %v3785 = vmul.f32 %v2675, %v3563
        %v3786 = vmul.f32 %v2866, %v3565
        %v3787 = vmul.f32 %v2868, %v3567
        %v3788 = vmul.f32 %v2677, %v3569
        %v3789 = vmul.f32 %v2679, %v3571
        %v3790 = vmul.f32 %v2870, %v3573
        %v3791 = vmul.f32 %v2872, %v3575
        %v3792 = vmul.f32 %v2683, %v3577
        %v3793 = vmul.f32 %v2685, %v3579
        %v3794 = vmul.f32 %v2876, %v3581
        %v3795 = vmul.f32 %v2878, %v3583
        %v3796 = vmul.f32 %v2687, %v3585
        %v3797 = vmul.f32 %v2689, %v3587
        %v3798 = vmul.f32 %v2880, %v3589
        %v3799 = vmul.f32 %v2882, %v3591
        %v3800 = vmul.f32 %v2693, %v3593
        %v3801 = vmul.f32 %v2695, %v3595
        %v3802 = vmul.f32 %v2886, %v3597
        %v3803 = vmul.f32 %v2888, %v3599
        %v3804 = vmul.f32 %v2697, %v3601
        %v3805 = vmul.f32 %v2699, %v3603
        %v3806 = vmul.f32 %v2890, %v3605
        %v3807 = vmul.f32 %v2892, %v3607
        %v3808 = vmul.f32 %v2703, %v3609
        %v3809 = vmul.f32 %v2705, %v3611
        %v3810 = vmul.f32 %v2896, %v3613
        %v3811 = vmul.f32 %v2898, %v3615
        %v3812 = vmul.f32 %v2707, %v3617
        %v3813 = vmul.f32 %v2709, %v3619
        %v3814 = vmul.f32 %v2900, %v3621
        %v3815 = vmul.f32 %v2902, %v3623
        %v3816 = vmul.f32 %v2713, %v3625
        %v3817 = vmul.f32 %v2715, %v3627
        %v3818 = vmul.f32 %v2906, %v3629
        %v3819 = vmul.f32 %v2908, %v3631
        %v3820 = vmul.f32 %v2717, %v3633
        %v3821 = vmul.f32 %v2719, %v3635
        %v3822 = vmul.f32 %v2910, %v3637
        %v3823 = vmul.f32 %v2912, %v3639
        %v3824 = vmul.f32 %v2723, %v3641
        %v3825 = vmul.f32 %v2725, %v3643
        %v3826 = vmul.f32 %v2916, %v3645
        %v3827 = vmul.f32 %v2918, %v3647
        %v3828 = vmul.f32 %v2727, %v3649
        %v3829 = vmul.f32 %v2729, %v3651
        %v3830 = vmul.f32 %v2920, %v3653
        %v3831 = vmul.f32 %v2922, %v3655
        %v3832 = vmul.f32 %v2733, %v3657
        %v3833 = vmul.f32 %v2735, %v3659
        %v3834 = vmul.f32 %v2926, %v3661
        %v3835 = vmul.f32 %v2928, %v3663
        %v3836 = vmul.f32 %v2737, %v3665
        %v3837 = vmul.f32 %v2739, %v3667
        %v3838 = vmul.f32 %v2930, %v3669
        %v3839 = vmul.f32 %v2932, %v3671
        %v3840 = vmul.f32 %v2743, %v3673
        %v3841 = vmul.f32 %v2745, %v3675
        %v3842 = vmul.f32 %v2936, %v3677
        %v3843 = vmul.f32 %v2938, %v3679
        %v3844 = vmul.f32 %v2747, %v3681
        %v3845 = vmul.f32 %v2749, %v3683
        %v3846 = vmul.f32 %v2940, %v3685
        %v3847 = vmul.f32 %v2942, %v3687
        %v3848 = vmul.f32 %v2753, %v3689
        %v3849 = vmul.f32 %v2755, %v3691
        %v3850 = vmul.f32 %v2946, %v3693
        %v3851 = vmul.f32 %v2948, %v3695
        %v3852 = vmul.f32 %v2757, %v3697
        %v3853 = vmul.f32 %v2759, %v3699
        %v3854 = vmul.f32 %v2950, %v3701
        %v3855 = vmul.f32 %v2952, %v3703
        %v3856 = vmul.f32 %v2763, %v3705
        %v3857 = vmul.f32 %v2765, %v3707
        %v3858 = vmul.f32 %v2956, %v3709
        %v3859 = vmul.f32 %v2958, %v3711
        %v3860 = vmul.f32 %v2767, %v3713
        %v3861 = vmul.f32 %v2769, %v3715
        %v3862 = vmul.f32 %v2960, %v3717
        %v3863 = vmul.f32 %v2962, %v3719
        %v3864 = vmul.f32 %v2773, %v3721
        %v3865 = vmul.f32 %v2775, %v3723
        %v3866 = vmul.f32 %v2966, %v3725
        %v3867 = vmul.f32 %v2968, %v3727
        %v3868 = vmul.f32 %v2777, %v3729
        %v3869 = vmul.f32 %v2779, %v3731
        %v3870 = vmul.f32 %v2970, %v3733
        %v3871 = vmul.f32 %v2972, %v3735
        %v3872 = vmul.f32 %v2783, %v3737
        %v3873 = vmul.f32 %v2785, %v3739
        %v3874 = vmul.f32 %v2976, %v3741
        %v3875 = vmul.f32 %v2978, %v3743
        %v3876 = vmul.f32 %v2787, %v3745
        %v3877 = vmul.f32 %v2789, %v3747
        %v3878 = vmul.f32 %v2980, %v3749
        %v3879 = vmul.f32 %v2982, %v3751
        %v3880 = vmax.f32 %v3752, %v3756
        %v3881 = vrot.slane %v3880, 4
        %v3882 = vmax.f32 %v3880, %v3881
        %v3883 = vrot.slane %v3882, 2
        %v3884 = vmax.f32 %v3882, %v3883
        %v3885 = vrot.slane %v3884, 1
        %v3886 = vmax.f32 %v3884, %v3885
        %v3887 = vmax.f32 %v3753, %v3757
        %v3888 = vrot.slane %v3887, 4
        %v3889 = vmax.f32 %v3887, %v3888
        %v3890 = vrot.slane %v3889, 2
        %v3891 = vmax.f32 %v3889, %v3890
        %v3892 = vrot.slane %v3891, 1
        %v3893 = vmax.f32 %v3891, %v3892
        %v3894 = vmax.f32 %v3754, %v3758
        %v3895 = vrot.slane %v3894, 4
        %v3896 = vmax.f32 %v3894, %v3895
        %v3897 = vrot.slane %v3896, 2
        %v3898 = vmax.f32 %v3896, %v3897
        %v3899 = vrot.slane %v3898, 1
        %v3900 = vmax.f32 %v3898, %v3899
        %v3901 = vmax.f32 %v3755, %v3759
        %v3902 = vrot.slane %v3901, 4
        %v3903 = vmax.f32 %v3901, %v3902
        %v3904 = vrot.slane %v3903, 2
        %v3905 = vmax.f32 %v3903, %v3904
        %v3906 = vrot.slane %v3905, 1
        %v3907 = vmax.f32 %v3905, %v3906
        %v3908 = vmax.f32 %v3760, %v3764
        %v3909 = vrot.slane %v3908, 4
        %v3910 = vmax.f32 %v3908, %v3909
        %v3911 = vrot.slane %v3910, 2
        %v3912 = vmax.f32 %v3910, %v3911
        %v3913 = vrot.slane %v3912, 1
        %v3914 = vmax.f32 %v3912, %v3913
        %v3915 = vmax.f32 %v3761, %v3765
        %v3916 = vrot.slane %v3915, 4
        %v3917 = vmax.f32 %v3915, %v3916
        %v3918 = vrot.slane %v3917, 2
        %v3919 = vmax.f32 %v3917, %v3918
        %v3920 = vrot.slane %v3919, 1
        %v3921 = vmax.f32 %v3919, %v3920
        %v3922 = vmax.f32 %v3762, %v3766
        %v3923 = vrot.slane %v3922, 4
        %v3924 = vmax.f32 %v3922, %v3923
        %v3925 = vrot.slane %v3924, 2
        %v3926 = vmax.f32 %v3924, %v3925
        %v3927 = vrot.slane %v3926, 1
        %v3928 = vmax.f32 %v3926, %v3927
        %v3929 = vmax.f32 %v3763, %v3767
        %v3930 = vrot.slane %v3929, 4
        %v3931 = vmax.f32 %v3929, %v3930
        %v3932 = vrot.slane %v3931, 2
        %v3933 = vmax.f32 %v3931, %v3932
        %v3934 = vrot.slane %v3933, 1
        %v3935 = vmax.f32 %v3933, %v3934
        %v3936 = vmax.f32 %v3768, %v3772
        %v3937 = vrot.slane %v3936, 4
        %v3938 = vmax.f32 %v3936, %v3937
        %v3939 = vrot.slane %v3938, 2
        %v3940 = vmax.f32 %v3938, %v3939
        %v3941 = vrot.slane %v3940, 1
        %v3942 = vmax.f32 %v3940, %v3941
        %v3943 = vmax.f32 %v3769, %v3773
        %v3944 = vrot.slane %v3943, 4
        %v3945 = vmax.f32 %v3943, %v3944
        %v3946 = vrot.slane %v3945, 2
        %v3947 = vmax.f32 %v3945, %v3946
        %v3948 = vrot.slane %v3947, 1
        %v3949 = vmax.f32 %v3947, %v3948
        %v3950 = vmax.f32 %v3770, %v3774
        %v3951 = vrot.slane %v3950, 4
        %v3952 = vmax.f32 %v3950, %v3951
        %v3953 = vrot.slane %v3952, 2
        %v3954 = vmax.f32 %v3952, %v3953
        %v3955 = vrot.slane %v3954, 1
        %v3956 = vmax.f32 %v3954, %v3955
        %v3957 = vmax.f32 %v3771, %v3775
        %v3958 = vrot.slane %v3957, 4
        %v3959 = vmax.f32 %v3957, %v3958
        %v3960 = vrot.slane %v3959, 2
        %v3961 = vmax.f32 %v3959, %v3960
        %v3962 = vrot.slane %v3961, 1
        %v3963 = vmax.f32 %v3961, %v3962
        %v3964 = vmax.f32 %v3776, %v3780
        %v3965 = vrot.slane %v3964, 4
        %v3966 = vmax.f32 %v3964, %v3965
        %v3967 = vrot.slane %v3966, 2
        %v3968 = vmax.f32 %v3966, %v3967
        %v3969 = vrot.slane %v3968, 1
        %v3970 = vmax.f32 %v3968, %v3969
        %v3971 = vmax.f32 %v3777, %v3781
        %v3972 = vrot.slane %v3971, 4
        %v3973 = vmax.f32 %v3971, %v3972
        %v3974 = vrot.slane %v3973, 2
        %v3975 = vmax.f32 %v3973, %v3974
        %v3976 = vrot.slane %v3975, 1
        %v3977 = vmax.f32 %v3975, %v3976
        %v3978 = vmax.f32 %v3778, %v3782
        %v3979 = vrot.slane %v3978, 4
        %v3980 = vmax.f32 %v3978, %v3979
        %v3981 = vrot.slane %v3980, 2
        %v3982 = vmax.f32 %v3980, %v3981
        %v3983 = vrot.slane %v3982, 1
        %v3984 = vmax.f32 %v3982, %v3983
        %v3985 = vmax.f32 %v3779, %v3783
        %v3986 = vrot.slane %v3985, 4
        %v3987 = vmax.f32 %v3985, %v3986
        %v3988 = vrot.slane %v3987, 2
        %v3989 = vmax.f32 %v3987, %v3988
        %v3990 = vrot.slane %v3989, 1
        %v3991 = vmax.f32 %v3989, %v3990
        %v3992 = vmax.f32 %v3784, %v3788
        %v3993 = vrot.slane %v3992, 4
        %v3994 = vmax.f32 %v3992, %v3993
        %v3995 = vrot.slane %v3994, 2
        %v3996 = vmax.f32 %v3994, %v3995
        %v3997 = vrot.slane %v3996, 1
        %v3998 = vmax.f32 %v3996, %v3997
        %v3999 = vmax.f32 %v3785, %v3789
        %v4000 = vrot.slane %v3999, 4
        %v4001 = vmax.f32 %v3999, %v4000
        %v4002 = vrot.slane %v4001, 2
        %v4003 = vmax.f32 %v4001, %v4002
        %v4004 = vrot.slane %v4003, 1
        %v4005 = vmax.f32 %v4003, %v4004
        %v4006 = vmax.f32 %v3786, %v3790
        %v4007 = vrot.slane %v4006, 4
        %v4008 = vmax.f32 %v4006, %v4007
        %v4009 = vrot.slane %v4008, 2
        %v4010 = vmax.f32 %v4008, %v4009
        %v4011 = vrot.slane %v4010, 1
        %v4012 = vmax.f32 %v4010, %v4011
        %v4013 = vmax.f32 %v3787, %v3791
        %v4014 = vrot.slane %v4013, 4
        %v4015 = vmax.f32 %v4013, %v4014
        %v4016 = vrot.slane %v4015, 2
        %v4017 = vmax.f32 %v4015, %v4016
        %v4018 = vrot.slane %v4017, 1
        %v4019 = vmax.f32 %v4017, %v4018
        %v4020 = vmax.f32 %v3792, %v3796
        %v4021 = vrot.slane %v4020, 4
        %v4022 = vmax.f32 %v4020, %v4021
        %v4023 = vrot.slane %v4022, 2
        %v4024 = vmax.f32 %v4022, %v4023
        %v4025 = vrot.slane %v4024, 1
        %v4026 = vmax.f32 %v4024, %v4025
        %v4027 = vmax.f32 %v3793, %v3797
        %v4028 = vrot.slane %v4027, 4
        %v4029 = vmax.f32 %v4027, %v4028
        %v4030 = vrot.slane %v4029, 2
        %v4031 = vmax.f32 %v4029, %v4030
        %v4032 = vrot.slane %v4031, 1
        %v4033 = vmax.f32 %v4031, %v4032
        %v4034 = vmax.f32 %v3794, %v3798
        %v4035 = vrot.slane %v4034, 4
        %v4036 = vmax.f32 %v4034, %v4035
        %v4037 = vrot.slane %v4036, 2
        %v4038 = vmax.f32 %v4036, %v4037
        %v4039 = vrot.slane %v4038, 1
        %v4040 = vmax.f32 %v4038, %v4039
        %v4041 = vmax.f32 %v3795, %v3799
        %v4042 = vrot.slane %v4041, 4
        %v4043 = vmax.f32 %v4041, %v4042
        %v4044 = vrot.slane %v4043, 2
        %v4045 = vmax.f32 %v4043, %v4044
        %v4046 = vrot.slane %v4045, 1
        %v4047 = vmax.f32 %v4045, %v4046
        %v4048 = vmax.f32 %v3800, %v3804
        %v4049 = vrot.slane %v4048, 4
        %v4050 = vmax.f32 %v4048, %v4049
        %v4051 = vrot.slane %v4050, 2
        %v4052 = vmax.f32 %v4050, %v4051
        %v4053 = vrot.slane %v4052, 1
        %v4054 = vmax.f32 %v4052, %v4053
        %v4055 = vmax.f32 %v3801, %v3805
        %v4056 = vrot.slane %v4055, 4
        %v4057 = vmax.f32 %v4055, %v4056
        %v4058 = vrot.slane %v4057, 2
        %v4059 = vmax.f32 %v4057, %v4058
        %v4060 = vrot.slane %v4059, 1
        %v4061 = vmax.f32 %v4059, %v4060
        %v4062 = vmax.f32 %v3802, %v3806
        %v4063 = vrot.slane %v4062, 4
        %v4064 = vmax.f32 %v4062, %v4063
        %v4065 = vrot.slane %v4064, 2
        %v4066 = vmax.f32 %v4064, %v4065
        %v4067 = vrot.slane %v4066, 1
        %v4068 = vmax.f32 %v4066, %v4067
        %v4069 = vmax.f32 %v3803, %v3807
        %v4070 = vrot.slane %v4069, 4
        %v4071 = vmax.f32 %v4069, %v4070
        %v4072 = vrot.slane %v4071, 2
        %v4073 = vmax.f32 %v4071, %v4072
        %v4074 = vrot.slane %v4073, 1
        %v4075 = vmax.f32 %v4073, %v4074
        %v4076 = vmax.f32 %v3808, %v3812
        %v4077 = vrot.slane %v4076, 4
        %v4078 = vmax.f32 %v4076, %v4077
        %v4079 = vrot.slane %v4078, 2
        %v4080 = vmax.f32 %v4078, %v4079
        %v4081 = vrot.slane %v4080, 1
        %v4082 = vmax.f32 %v4080, %v4081
        %v4083 = vmax.f32 %v3809, %v3813
        %v4084 = vrot.slane %v4083, 4
        %v4085 = vmax.f32 %v4083, %v4084
        %v4086 = vrot.slane %v4085, 2
        %v4087 = vmax.f32 %v4085, %v4086
        %v4088 = vrot.slane %v4087, 1
        %v4089 = vmax.f32 %v4087, %v4088
        %v4090 = vmax.f32 %v3810, %v3814
        %v4091 = vrot.slane %v4090, 4
        %v4092 = vmax.f32 %v4090, %v4091
        %v4093 = vrot.slane %v4092, 2
        %v4094 = vmax.f32 %v4092, %v4093
        %v4095 = vrot.slane %v4094, 1
        %v4096 = vmax.f32 %v4094, %v4095
        %v4097 = vmax.f32 %v3811, %v3815
        %v4098 = vrot.slane %v4097, 4
        %v4099 = vmax.f32 %v4097, %v4098
        %v4100 = vrot.slane %v4099, 2
        %v4101 = vmax.f32 %v4099, %v4100
        %v4102 = vrot.slane %v4101, 1
        %v4103 = vmax.f32 %v4101, %v4102
        %v4104 = vmax.f32 %v3816, %v3820
        %v4105 = vrot.slane %v4104, 4
        %v4106 = vmax.f32 %v4104, %v4105
        %v4107 = vrot.slane %v4106, 2
        %v4108 = vmax.f32 %v4106, %v4107
        %v4109 = vrot.slane %v4108, 1
        %v4110 = vmax.f32 %v4108, %v4109
        %v4111 = vmax.f32 %v3817, %v3821
        %v4112 = vrot.slane %v4111, 4
        %v4113 = vmax.f32 %v4111, %v4112
        %v4114 = vrot.slane %v4113, 2
        %v4115 = vmax.f32 %v4113, %v4114
        %v4116 = vrot.slane %v4115, 1
        %v4117 = vmax.f32 %v4115, %v4116
        %v4118 = vmax.f32 %v3818, %v3822
        %v4119 = vrot.slane %v4118, 4
        %v4120 = vmax.f32 %v4118, %v4119
        %v4121 = vrot.slane %v4120, 2
        %v4122 = vmax.f32 %v4120, %v4121
        %v4123 = vrot.slane %v4122, 1
        %v4124 = vmax.f32 %v4122, %v4123
        %v4125 = vmax.f32 %v3819, %v3823
        %v4126 = vrot.slane %v4125, 4
        %v4127 = vmax.f32 %v4125, %v4126
        %v4128 = vrot.slane %v4127, 2
        %v4129 = vmax.f32 %v4127, %v4128
        %v4130 = vrot.slane %v4129, 1
        %v4131 = vmax.f32 %v4129, %v4130
        %v4132 = vmax.f32 %v3824, %v3828
        %v4133 = vrot.slane %v4132, 4
        %v4134 = vmax.f32 %v4132, %v4133
        %v4135 = vrot.slane %v4134, 2
        %v4136 = vmax.f32 %v4134, %v4135
        %v4137 = vrot.slane %v4136, 1
        %v4138 = vmax.f32 %v4136, %v4137
        %v4139 = vmax.f32 %v3825, %v3829
        %v4140 = vrot.slane %v4139, 4
        %v4141 = vmax.f32 %v4139, %v4140
        %v4142 = vrot.slane %v4141, 2
        %v4143 = vmax.f32 %v4141, %v4142
        %v4144 = vrot.slane %v4143, 1
        %v4145 = vmax.f32 %v4143, %v4144
        %v4146 = vmax.f32 %v3826, %v3830
        %v4147 = vrot.slane %v4146, 4
        %v4148 = vmax.f32 %v4146, %v4147
        %v4149 = vrot.slane %v4148, 2
        %v4150 = vmax.f32 %v4148, %v4149
        %v4151 = vrot.slane %v4150, 1
        %v4152 = vmax.f32 %v4150, %v4151
        %v4153 = vmax.f32 %v3827, %v3831
        %v4154 = vrot.slane %v4153, 4
        %v4155 = vmax.f32 %v4153, %v4154
        %v4156 = vrot.slane %v4155, 2
        %v4157 = vmax.f32 %v4155, %v4156
        %v4158 = vrot.slane %v4157, 1
        %v4159 = vmax.f32 %v4157, %v4158
        %v4160 = vmax.f32 %v3832, %v3836
        %v4161 = vrot.slane %v4160, 4
        %v4162 = vmax.f32 %v4160, %v4161
        %v4163 = vrot.slane %v4162, 2
        %v4164 = vmax.f32 %v4162, %v4163
        %v4165 = vrot.slane %v4164, 1
        %v4166 = vmax.f32 %v4164, %v4165
        %v4167 = vmax.f32 %v3833, %v3837
        %v4168 = vrot.slane %v4167, 4
        %v4169 = vmax.f32 %v4167, %v4168
        %v4170 = vrot.slane %v4169, 2
        %v4171 = vmax.f32 %v4169, %v4170
        %v4172 = vrot.slane %v4171, 1
        %v4173 = vmax.f32 %v4171, %v4172
        %v4174 = vmax.f32 %v3834, %v3838
        %v4175 = vrot.slane %v4174, 4
        %v4176 = vmax.f32 %v4174, %v4175
        %v4177 = vrot.slane %v4176, 2
        %v4178 = vmax.f32 %v4176, %v4177
        %v4179 = vrot.slane %v4178, 1
        %v4180 = vmax.f32 %v4178, %v4179
        %v4181 = vmax.f32 %v3835, %v3839
        %v4182 = vrot.slane %v4181, 4
        %v4183 = vmax.f32 %v4181, %v4182
        %v4184 = vrot.slane %v4183, 2
        %v4185 = vmax.f32 %v4183, %v4184
        %v4186 = vrot.slane %v4185, 1
        %v4187 = vmax.f32 %v4185, %v4186
        %v4188 = vmax.f32 %v3840, %v3844
        %v4189 = vrot.slane %v4188, 4
        %v4190 = vmax.f32 %v4188, %v4189
        %v4191 = vrot.slane %v4190, 2
        %v4192 = vmax.f32 %v4190, %v4191
        %v4193 = vrot.slane %v4192, 1
        %v4194 = vmax.f32 %v4192, %v4193
        %v4195 = vmax.f32 %v3841, %v3845
        %v4196 = vrot.slane %v4195, 4
        %v4197 = vmax.f32 %v4195, %v4196
        %v4198 = vrot.slane %v4197, 2
        %v4199 = vmax.f32 %v4197, %v4198
        %v4200 = vrot.slane %v4199, 1
        %v4201 = vmax.f32 %v4199, %v4200
        %v4202 = vmax.f32 %v3842, %v3846
        %v4203 = vrot.slane %v4202, 4
        %v4204 = vmax.f32 %v4202, %v4203
        %v4205 = vrot.slane %v4204, 2
        %v4206 = vmax.f32 %v4204, %v4205
        %v4207 = vrot.slane %v4206, 1
        %v4208 = vmax.f32 %v4206, %v4207
        %v4209 = vmax.f32 %v3843, %v3847
        %v4210 = vrot.slane %v4209, 4
        %v4211 = vmax.f32 %v4209, %v4210
        %v4212 = vrot.slane %v4211, 2
        %v4213 = vmax.f32 %v4211, %v4212
        %v4214 = vrot.slane %v4213, 1
        %v4215 = vmax.f32 %v4213, %v4214
        %v4216 = vmax.f32 %v3848, %v3852
        %v4217 = vrot.slane %v4216, 4
        %v4218 = vmax.f32 %v4216, %v4217
        %v4219 = vrot.slane %v4218, 2
        %v4220 = vmax.f32 %v4218, %v4219
        %v4221 = vrot.slane %v4220, 1
        %v4222 = vmax.f32 %v4220, %v4221
        %v4223 = vmax.f32 %v3849, %v3853
        %v4224 = vrot.slane %v4223, 4
        %v4225 = vmax.f32 %v4223, %v4224
        %v4226 = vrot.slane %v4225, 2
        %v4227 = vmax.f32 %v4225, %v4226
        %v4228 = vrot.slane %v4227, 1
        %v4229 = vmax.f32 %v4227, %v4228
        %v4230 = vmax.f32 %v3850, %v3854
        %v4231 = vrot.slane %v4230, 4
        %v4232 = vmax.f32 %v4230, %v4231
        %v4233 = vrot.slane %v4232, 2
        %v4234 = vmax.f32 %v4232, %v4233
        %v4235 = vrot.slane %v4234, 1
        %v4236 = vmax.f32 %v4234, %v4235
        %v4237 = vmax.f32 %v3851, %v3855
        %v4238 = vrot.slane %v4237, 4
        %v4239 = vmax.f32 %v4237, %v4238
        %v4240 = vrot.slane %v4239, 2
        %v4241 = vmax.f32 %v4239, %v4240
        %v4242 = vrot.slane %v4241, 1
        %v4243 = vmax.f32 %v4241, %v4242
        %v4244 = vmax.f32 %v3856, %v3860
        %v4245 = vrot.slane %v4244, 4
        %v4246 = vmax.f32 %v4244, %v4245
        %v4247 = vrot.slane %v4246, 2
        %v4248 = vmax.f32 %v4246, %v4247
        %v4249 = vrot.slane %v4248, 1
        %v4250 = vmax.f32 %v4248, %v4249
        %v4251 = vmax.f32 %v3857, %v3861
        %v4252 = vrot.slane %v4251, 4
        %v4253 = vmax.f32 %v4251, %v4252
        %v4254 = vrot.slane %v4253, 2
        %v4255 = vmax.f32 %v4253, %v4254
        %v4256 = vrot.slane %v4255, 1
        %v4257 = vmax.f32 %v4255, %v4256
        %v4258 = vmax.f32 %v3858, %v3862
        %v4259 = vrot.slane %v4258, 4
        %v4260 = vmax.f32 %v4258, %v4259
        %v4261 = vrot.slane %v4260, 2
        %v4262 = vmax.f32 %v4260, %v4261
        %v4263 = vrot.slane %v4262, 1
        %v4264 = vmax.f32 %v4262, %v4263
        %v4265 = vmax.f32 %v3859, %v3863
        %v4266 = vrot.slane %v4265, 4
        %v4267 = vmax.f32 %v4265, %v4266
        %v4268 = vrot.slane %v4267, 2
        %v4269 = vmax.f32 %v4267, %v4268
        %v4270 = vrot.slane %v4269, 1
        %v4271 = vmax.f32 %v4269, %v4270
        %v4272 = vmax.f32 %v3864, %v3868
        %v4273 = vrot.slane %v4272, 4
        %v4274 = vmax.f32 %v4272, %v4273
        %v4275 = vrot.slane %v4274, 2
        %v4276 = vmax.f32 %v4274, %v4275
        %v4277 = vrot.slane %v4276, 1
        %v4278 = vmax.f32 %v4276, %v4277
        %v4279 = vmax.f32 %v3865, %v3869
        %v4280 = vrot.slane %v4279, 4
        %v4281 = vmax.f32 %v4279, %v4280
        %v4282 = vrot.slane %v4281, 2
        %v4283 = vmax.f32 %v4281, %v4282
        %v4284 = vrot.slane %v4283, 1
        %v4285 = vmax.f32 %v4283, %v4284
        %v4286 = vmax.f32 %v3866, %v3870
        %v4287 = vrot.slane %v4286, 4
        %v4288 = vmax.f32 %v4286, %v4287
        %v4289 = vrot.slane %v4288, 2
        %v4290 = vmax.f32 %v4288, %v4289
        %v4291 = vrot.slane %v4290, 1
        %v4292 = vmax.f32 %v4290, %v4291
        %v4293 = vmax.f32 %v3867, %v3871
        %v4294 = vrot.slane %v4293, 4
        %v4295 = vmax.f32 %v4293, %v4294
        %v4296 = vrot.slane %v4295, 2
        %v4297 = vmax.f32 %v4295, %v4296
        %v4298 = vrot.slane %v4297, 1
        %v4299 = vmax.f32 %v4297, %v4298
        %v4300 = vmax.f32 %v3872, %v3876
        %v4301 = vrot.slane %v4300, 4
        %v4302 = vmax.f32 %v4300, %v4301
        %v4303 = vrot.slane %v4302, 2
        %v4304 = vmax.f32 %v4302, %v4303
        %v4305 = vrot.slane %v4304, 1
        %v4306 = vmax.f32 %v4304, %v4305
        %v4307 = vmax.f32 %v3873, %v3877
        %v4308 = vrot.slane %v4307, 4
        %v4309 = vmax.f32 %v4307, %v4308
        %v4310 = vrot.slane %v4309, 2
        %v4311 = vmax.f32 %v4309, %v4310
        %v4312 = vrot.slane %v4311, 1
        %v4313 = vmax.f32 %v4311, %v4312
        %v4314 = vmax.f32 %v3874, %v3878
        %v4315 = vrot.slane %v4314, 4
        %v4316 = vmax.f32 %v4314, %v4315
        %v4317 = vrot.slane %v4316, 2
        %v4318 = vmax.f32 %v4316, %v4317
        %v4319 = vrot.slane %v4318, 1
        %v4320 = vmax.f32 %v4318, %v4319
        %v4321 = vmax.f32 %v3875, %v3879
        %v4322 = vrot.slane %v4321, 4
        %v4323 = vmax.f32 %v4321, %v4322
        %v4324 = vrot.slane %v4323, 2
        %v4325 = vmax.f32 %v4323, %v4324
        %v4326 = vrot.slane %v4325, 1
        %v4327 = vmax.f32 %v4325, %v4326
        %v4328 = vpack.c.bf16 %v3886, %v3886
        %v4329 = vpack.c.bf16 %v3893, %v3893
        %v4330 = vpack.c.bf16 %v3900, %v3900
        %v4331 = vpack.c.bf16 %v3907, %v3907
        %v4332 = vpack.c.bf16 %v3914, %v3914
        %v4333 = vpack.c.bf16 %v3921, %v3921
        %v4334 = vpack.c.bf16 %v3928, %v3928
        %v4335 = vpack.c.bf16 %v3935, %v3935
        %v4336 = vpack.c.bf16 %v3942, %v3942
        %v4337 = vpack.c.bf16 %v3949, %v3949
        %v4338 = vpack.c.bf16 %v3956, %v3956
        %v4339 = vpack.c.bf16 %v3963, %v3963
        %v4340 = vpack.c.bf16 %v3970, %v3970
        %v4341 = vpack.c.bf16 %v3977, %v3977
        %v4342 = vpack.c.bf16 %v3984, %v3984
        %v4343 = vpack.c.bf16 %v3991, %v3991
        %v4344 = vpack.c.bf16 %v3998, %v3998
        %v4345 = vpack.c.bf16 %v4005, %v4005
        %v4346 = vpack.c.bf16 %v4012, %v4012
        %v4347 = vpack.c.bf16 %v4019, %v4019
        %v4348 = vpack.c.bf16 %v4026, %v4026
        %v4349 = vpack.c.bf16 %v4033, %v4033
        %v4350 = vpack.c.bf16 %v4040, %v4040
        %v4351 = vpack.c.bf16 %v4047, %v4047
        %v4352 = vpack.c.bf16 %v4054, %v4054
        %v4353 = vpack.c.bf16 %v4061, %v4061
        %v4354 = vpack.c.bf16 %v4068, %v4068
        %v4355 = vpack.c.bf16 %v4075, %v4075
        %v4356 = vpack.c.bf16 %v4082, %v4082
        %v4357 = vpack.c.bf16 %v4089, %v4089
        %v4358 = vpack.c.bf16 %v4096, %v4096
        %v4359 = vpack.c.bf16 %v4103, %v4103
        %v4360 = vpack.c.bf16 %v4110, %v4110
        %v4361 = vpack.c.bf16 %v4117, %v4117
        %v4362 = vpack.c.bf16 %v4124, %v4124
        %v4363 = vpack.c.bf16 %v4131, %v4131
        %v4364 = vpack.c.bf16 %v4138, %v4138
        %v4365 = vpack.c.bf16 %v4145, %v4145
        %v4366 = vpack.c.bf16 %v4152, %v4152
        %v4367 = vpack.c.bf16 %v4159, %v4159
        %v4368 = vpack.c.bf16 %v4166, %v4166
        %v4369 = vpack.c.bf16 %v4173, %v4173
        %v4370 = vpack.c.bf16 %v4180, %v4180
        %v4371 = vpack.c.bf16 %v4187, %v4187
        %v4372 = vpack.c.bf16 %v4194, %v4194
        %v4373 = vpack.c.bf16 %v4201, %v4201
        %v4374 = vpack.c.bf16 %v4208, %v4208
        %v4375 = vpack.c.bf16 %v4215, %v4215
        %v4376 = vpack.c.bf16 %v4222, %v4222
        %v4377 = vpack.c.bf16 %v4229, %v4229
        %v4378 = vpack.c.bf16 %v4236, %v4236
        %v4379 = vpack.c.bf16 %v4243, %v4243
        %v4380 = vpack.c.bf16 %v4250, %v4250
        %v4381 = vpack.c.bf16 %v4257, %v4257
        %v4382 = vpack.c.bf16 %v4264, %v4264
        %v4383 = vpack.c.bf16 %v4271, %v4271
        %v4384 = vpack.c.bf16 %v4278, %v4278
        %v4385 = vpack.c.bf16 %v4285, %v4285
        %v4386 = vpack.c.bf16 %v4292, %v4292
        %v4387 = vpack.c.bf16 %v4299, %v4299
        %v4388 = vpack.c.bf16 %v4306, %v4306
        %v4389 = vpack.c.bf16 %v4313, %v4313
        %v4390 = vpack.c.bf16 %v4320, %v4320
        %v4391 = vpack.c.bf16 %v4327, %v4327
        %v4392 = vld [vmem:[%s6] sm:$0xf]
        %v4393 = vld [vmem:[%s6 + $0x4] sm:$0xf]
        %v4394 = vld [vmem:[%s6 + $0x8] sm:$0xf]
        %v4395 = vld [vmem:[%s6 + $0xc] sm:$0xf]
        %v4396 = vld [vmem:[%s6 + $0x10] sm:$0xf]
        %v4397 = vld [vmem:[%s6 + $0x14] sm:$0xf]
        %v4398 = vld [vmem:[%s6 + $0x18] sm:$0xf]
        %v4399 = vld [vmem:[%s6 + $0x1c] sm:$0xf]
        %v4400 = vld [vmem:[%s6 + $0x20] sm:$0xf]
        %v4401 = vld [vmem:[%s6 + $0x24] sm:$0xf]
        %v4402 = vld [vmem:[%s6 + $0x28] sm:$0xf]
        %v4403 = vld [vmem:[%s6 + $0x2c] sm:$0xf]
        %v4404 = vld [vmem:[%s6 + $0x30] sm:$0xf]
        %v4405 = vld [vmem:[%s6 + $0x34] sm:$0xf]
        %v4406 = vld [vmem:[%s6 + $0x38] sm:$0xf]
        %v4407 = vld [vmem:[%s6 + $0x3c] sm:$0xf]
        %v4408 = vld [vmem:[%s6 + $0x40] sm:$0xf]
        %v4409 = vld [vmem:[%s6 + $0x44] sm:$0xf]
        %v4410 = vld [vmem:[%s6 + $0x48] sm:$0xf]
        %v4411 = vld [vmem:[%s6 + $0x4c] sm:$0xf]
        %v4412 = vld [vmem:[%s6 + $0x50] sm:$0xf]
        %v4413 = vld [vmem:[%s6 + $0x54] sm:$0xf]
        %v4414 = vld [vmem:[%s6 + $0x58] sm:$0xf]
        %v4415 = vld [vmem:[%s6 + $0x5c] sm:$0xf]
        %v4416 = vld [vmem:[%s6 + $0x60] sm:$0xf]
        %v4417 = vld [vmem:[%s6 + $0x64] sm:$0xf]
        %v4418 = vld [vmem:[%s6 + $0x68] sm:$0xf]
        %v4419 = vld [vmem:[%s6 + $0x6c] sm:$0xf]
        %v4420 = vld [vmem:[%s6 + $0x70] sm:$0xf]
        %v4421 = vld [vmem:[%s6 + $0x74] sm:$0xf]
        %v4422 = vld [vmem:[%s6 + $0x78] sm:$0xf]
        %v4423 = vld [vmem:[%s6 + $0x7c] sm:$0xf]
        %v4424 = vld [vmem:[%s6 + $0x80] sm:$0xf]
        %v4425 = vld [vmem:[%s6 + $0x84] sm:$0xf]
        %v4426 = vld [vmem:[%s6 + $0x88] sm:$0xf]
        %v4427 = vld [vmem:[%s6 + $0x8c] sm:$0xf]
        %v4428 = vld [vmem:[%s6 + $0x90] sm:$0xf]
        %v4429 = vld [vmem:[%s6 + $0x94] sm:$0xf]
        %v4430 = vld [vmem:[%s6 + $0x98] sm:$0xf]
        %v4431 = vld [vmem:[%s6 + $0x9c] sm:$0xf]
        %v4432 = vld [vmem:[%s6 + $0xa0] sm:$0xf]
        %v4433 = vld [vmem:[%s6 + $0xa4] sm:$0xf]
        %v4434 = vld [vmem:[%s6 + $0xa8] sm:$0xf]
        %v4435 = vld [vmem:[%s6 + $0xac] sm:$0xf]
        %v4436 = vld [vmem:[%s6 + $0xb0] sm:$0xf]
        %v4437 = vld [vmem:[%s6 + $0xb4] sm:$0xf]
        %v4438 = vld [vmem:[%s6 + $0xb8] sm:$0xf]
        %v4439 = vld [vmem:[%s6 + $0xbc] sm:$0xf]
        %v4440 = vld [vmem:[%s6 + $0xc0] sm:$0xf]
        %v4441 = vld [vmem:[%s6 + $0xc4] sm:$0xf]
        %v4442 = vld [vmem:[%s6 + $0xc8] sm:$0xf]
        %v4443 = vld [vmem:[%s6 + $0xcc] sm:$0xf]
        %v4444 = vld [vmem:[%s6 + $0xd0] sm:$0xf]
        %v4445 = vld [vmem:[%s6 + $0xd4] sm:$0xf]
        %v4446 = vld [vmem:[%s6 + $0xd8] sm:$0xf]
        %v4447 = vld [vmem:[%s6 + $0xdc] sm:$0xf]
        %v4448 = vld [vmem:[%s6 + $0xe0] sm:$0xf]
        %v4449 = vld [vmem:[%s6 + $0xe4] sm:$0xf]
        %v4450 = vld [vmem:[%s6 + $0xe8] sm:$0xf]
        %v4451 = vld [vmem:[%s6 + $0xec] sm:$0xf]
        %v4452 = vld [vmem:[%s6 + $0xf0] sm:$0xf]
        %v4453 = vld [vmem:[%s6 + $0xf4] sm:$0xf]
        %v4454 = vld [vmem:[%s6 + $0xf8] sm:$0xf]
        %v4455 = vld [vmem:[%s6 + $0xfc] sm:$0xf]
        %v4456 = vld [vmem:[#allocation6] sm:$0x1]
        %v4458 = vlaneseq
        %v4459 = vshrl.u32 %v4458, 7
        %v4460 = vsub.s32 0, %v4459
        %v4461 = vrot.slane %v4456, %v4460
        %v4527 = vunpack.c.l.b16 %v4328
        %v4528 = vunpack.c.l.b16 %v4329
        %v4529 = vunpack.c.l.b16 %v4330
        %v4530 = vunpack.c.l.b16 %v4331
        %v4531 = vunpack.c.l.b16 %v4332
        %v4532 = vunpack.c.l.b16 %v4333
        %v4533 = vunpack.c.l.b16 %v4334
        %v4534 = vunpack.c.l.b16 %v4335
        %v4535 = vunpack.c.l.b16 %v4336
        %v4536 = vunpack.c.l.b16 %v4337
        %v4537 = vunpack.c.l.b16 %v4338
        %v4538 = vunpack.c.l.b16 %v4339
        %v4539 = vunpack.c.l.b16 %v4340
        %v4540 = vunpack.c.l.b16 %v4341
        %v4541 = vunpack.c.l.b16 %v4342
        %v4542 = vunpack.c.l.b16 %v4343
        %v4543 = vunpack.c.l.b16 %v4344
        %v4544 = vunpack.c.l.b16 %v4345
        %v4545 = vunpack.c.l.b16 %v4346
        %v4546 = vunpack.c.l.b16 %v4347
        %v4547 = vunpack.c.l.b16 %v4348
        %v4548 = vunpack.c.l.b16 %v4349
        %v4549 = vunpack.c.l.b16 %v4350
        %v4550 = vunpack.c.l.b16 %v4351
        %v4551 = vunpack.c.l.b16 %v4352
        %v4552 = vunpack.c.l.b16 %v4353
        %v4553 = vunpack.c.l.b16 %v4354
        %v4554 = vunpack.c.l.b16 %v4355
        %v4555 = vunpack.c.l.b16 %v4356
        %v4556 = vunpack.c.l.b16 %v4357
        %v4557 = vunpack.c.l.b16 %v4358
        %v4558 = vunpack.c.l.b16 %v4359
        %v4559 = vunpack.c.l.b16 %v4360
        %v4560 = vunpack.c.l.b16 %v4361
        %v4561 = vunpack.c.l.b16 %v4362
        %v4562 = vunpack.c.l.b16 %v4363
        %v4563 = vunpack.c.l.b16 %v4364
        %v4564 = vunpack.c.l.b16 %v4365
        %v4565 = vunpack.c.l.b16 %v4366
        %v4566 = vunpack.c.l.b16 %v4367
        %v4567 = vunpack.c.l.b16 %v4368
        %v4568 = vunpack.c.l.b16 %v4369
        %v4569 = vunpack.c.l.b16 %v4370
        %v4570 = vunpack.c.l.b16 %v4371
        %v4571 = vunpack.c.l.b16 %v4372
        %v4572 = vunpack.c.l.b16 %v4373
        %v4573 = vunpack.c.l.b16 %v4374
        %v4574 = vunpack.c.l.b16 %v4375
        %v4575 = vunpack.c.l.b16 %v4376
        %v4576 = vunpack.c.l.b16 %v4377
        %v4577 = vunpack.c.l.b16 %v4378
        %v4578 = vunpack.c.l.b16 %v4379
        %v4579 = vunpack.c.l.b16 %v4380
        %v4580 = vunpack.c.l.b16 %v4381
        %v4581 = vunpack.c.l.b16 %v4382
        %v4582 = vunpack.c.l.b16 %v4383
        %v4583 = vunpack.c.l.b16 %v4384
        %v4584 = vunpack.c.l.b16 %v4385
        %v4585 = vunpack.c.l.b16 %v4386
        %v4586 = vunpack.c.l.b16 %v4387
        %v4587 = vunpack.c.l.b16 %v4388
        %v4588 = vunpack.c.l.b16 %v4389
        %v4589 = vunpack.c.l.b16 %v4390
        %v4590 = vunpack.c.l.b16 %v4391
        %vm4591 = vcmask 1041409
        %v4592 = vsel %vm4591, %v4531, %v4527
        %vm4593 = vcmask 1042434
        %v4594 = vsel %vm4593, %v4535, %v4592
        %vm4595 = vcmask 1043459
        %v4596 = vsel %vm4595, %v4539, %v4594
        %vm4597 = vcmask 1044484
        %v4598 = vsel %vm4597, %v4543, %v4596
        %vm4599 = vcmask 1045509
        %v4600 = vsel %vm4599, %v4547, %v4598
        %vm4601 = vcmask 1046534
        %v4602 = vsel %vm4601, %v4551, %v4600
        %vm4603 = vcmask 1047559
        %v4604 = vsel %vm4603, %v4555, %v4602
        %v4605 = vsel %vm4591, %v4532, %v4528
        %v4606 = vsel %vm4593, %v4536, %v4605
        %v4607 = vsel %vm4595, %v4540, %v4606
        %v4608 = vsel %vm4597, %v4544, %v4607
        %v4609 = vsel %vm4599, %v4548, %v4608
        %v4610 = vsel %vm4601, %v4552, %v4609
        %v4611 = vsel %vm4603, %v4556, %v4610
        %v4612 = vsel %vm4591, %v4533, %v4529
        %v4613 = vsel %vm4593, %v4537, %v4612
        %v4614 = vsel %vm4595, %v4541, %v4613
        %v4615 = vsel %vm4597, %v4545, %v4614
        %v4616 = vsel %vm4599, %v4549, %v4615
        %v4617 = vsel %vm4601, %v4553, %v4616
        %v4618 = vsel %vm4603, %v4557, %v4617
        %v4619 = vsel %vm4591, %v4534, %v4530
        %v4620 = vsel %vm4593, %v4538, %v4619
        %v4621 = vsel %vm4595, %v4542, %v4620
        %v4622 = vsel %vm4597, %v4546, %v4621
        %v4623 = vsel %vm4599, %v4550, %v4622
        %v4624 = vsel %vm4601, %v4554, %v4623
        %v4625 = vsel %vm4603, %v4558, %v4624
        %v4626 = vsel %vm4591, %v4563, %v4559
        %v4627 = vsel %vm4593, %v4567, %v4626
        %v4628 = vsel %vm4595, %v4571, %v4627
        %v4629 = vsel %vm4597, %v4575, %v4628
        %v4630 = vsel %vm4599, %v4579, %v4629
        %v4631 = vsel %vm4601, %v4583, %v4630
        %v4632 = vsel %vm4603, %v4587, %v4631
        %v4633 = vsel %vm4591, %v4564, %v4560
        %v4634 = vsel %vm4593, %v4568, %v4633
        %v4635 = vsel %vm4595, %v4572, %v4634
        %v4636 = vsel %vm4597, %v4576, %v4635
        %v4637 = vsel %vm4599, %v4580, %v4636
        %v4638 = vsel %vm4601, %v4584, %v4637
        %v4639 = vsel %vm4603, %v4588, %v4638
        %v4640 = vsel %vm4591, %v4565, %v4561
        %v4641 = vsel %vm4593, %v4569, %v4640
        %v4642 = vsel %vm4595, %v4573, %v4641
        %v4643 = vsel %vm4597, %v4577, %v4642
        %v4644 = vsel %vm4599, %v4581, %v4643
        %v4645 = vsel %vm4601, %v4585, %v4644
        %v4646 = vsel %vm4603, %v4589, %v4645
        %v4647 = vsel %vm4591, %v4566, %v4562
        %v4648 = vsel %vm4593, %v4570, %v4647
        %v4649 = vsel %vm4595, %v4574, %v4648
        %v4650 = vsel %vm4597, %v4578, %v4649
        %v4651 = vsel %vm4599, %v4582, %v4650
        %v4652 = vsel %vm4601, %v4586, %v4651
        %v4653 = vsel %vm4603, %v4590, %v4652
        %v4654 = vpack.c.b16 %v4632, %v4604
        %v4655 = vpack.c.b16 %v4639, %v4611
        %v4656 = vpack.c.b16 %v4646, %v4618
        %v4657 = vpack.c.b16 %v4653, %v4625
        %v4726 = vunpack.c.l.b16 %v4392
        %v4727 = vunpack.c.l.b16 %v4393
        %v4728 = vunpack.c.l.b16 %v4394
        %v4729 = vunpack.c.l.b16 %v4395
        %v4730 = vunpack.c.l.b16 %v4396
        %v4731 = vunpack.c.l.b16 %v4397
        %v4732 = vunpack.c.l.b16 %v4398
        %v4733 = vunpack.c.l.b16 %v4399
        %v4734 = vunpack.c.l.b16 %v4400
        %v4735 = vunpack.c.l.b16 %v4401
        %v4736 = vunpack.c.l.b16 %v4402
        %v4737 = vunpack.c.l.b16 %v4403
        %v4738 = vunpack.c.l.b16 %v4404
        %v4739 = vunpack.c.l.b16 %v4405
        %v4740 = vunpack.c.l.b16 %v4406
        %v4741 = vunpack.c.l.b16 %v4407
        %v4742 = vunpack.c.l.b16 %v4408
        %v4743 = vunpack.c.l.b16 %v4409
        %v4744 = vunpack.c.l.b16 %v4410
        %v4745 = vunpack.c.l.b16 %v4411
        %v4746 = vunpack.c.l.b16 %v4412
        %v4747 = vunpack.c.l.b16 %v4413
        %v4748 = vunpack.c.l.b16 %v4414
        %v4749 = vunpack.c.l.b16 %v4415
        %v4750 = vunpack.c.l.b16 %v4416
        %v4751 = vunpack.c.l.b16 %v4417
        %v4752 = vunpack.c.l.b16 %v4418
        %v4753 = vunpack.c.l.b16 %v4419
        %v4754 = vunpack.c.l.b16 %v4420
        %v4755 = vunpack.c.l.b16 %v4421
        %v4756 = vunpack.c.l.b16 %v4422
        %v4757 = vunpack.c.l.b16 %v4423
        %v4758 = vunpack.c.l.b16 %v4424
        %v4759 = vunpack.c.l.b16 %v4425
        %v4760 = vunpack.c.l.b16 %v4426
        %v4761 = vunpack.c.l.b16 %v4427
        %v4762 = vunpack.c.l.b16 %v4428
        %v4763 = vunpack.c.l.b16 %v4429
        %v4764 = vunpack.c.l.b16 %v4430
        %v4765 = vunpack.c.l.b16 %v4431
        %v4766 = vunpack.c.l.b16 %v4432
        %v4767 = vunpack.c.l.b16 %v4433
        %v4768 = vunpack.c.l.b16 %v4434
        %v4769 = vunpack.c.l.b16 %v4435
        %v4770 = vunpack.c.l.b16 %v4436
        %v4771 = vunpack.c.l.b16 %v4437
        %v4772 = vunpack.c.l.b16 %v4438
        %v4773 = vunpack.c.l.b16 %v4439
        %v4774 = vunpack.c.l.b16 %v4440
        %v4775 = vunpack.c.l.b16 %v4441
        %v4776 = vunpack.c.l.b16 %v4442
        %v4777 = vunpack.c.l.b16 %v4443
        %v4778 = vunpack.c.l.b16 %v4444
        %v4779 = vunpack.c.l.b16 %v4445
        %v4780 = vunpack.c.l.b16 %v4446
        %v4781 = vunpack.c.l.b16 %v4447
        %v4782 = vunpack.c.l.b16 %v4448
        %v4783 = vunpack.c.l.b16 %v4449
        %v4784 = vunpack.c.l.b16 %v4450
        %v4785 = vunpack.c.l.b16 %v4451
        %v4786 = vunpack.c.l.b16 %v4452
        %v4787 = vunpack.c.l.b16 %v4453
        %v4788 = vunpack.c.l.b16 %v4454
        %v4789 = vunpack.c.l.b16 %v4455
        %v4790 = vpack.c.b16 %v4727, %v4726
        %v4791 = vpack.c.b16 %v4729, %v4728
        %v4792 = vpack.c.b16 %v4731, %v4730
        %v4793 = vpack.c.b16 %v4733, %v4732
        %v4794 = vpack.c.b16 %v4735, %v4734
        %v4795 = vpack.c.b16 %v4737, %v4736
        %v4796 = vpack.c.b16 %v4739, %v4738
        %v4797 = vpack.c.b16 %v4741, %v4740
        %v4798 = vpack.c.b16 %v4743, %v4742
        %v4799 = vpack.c.b16 %v4745, %v4744
        %v4800 = vpack.c.b16 %v4747, %v4746
        %v4801 = vpack.c.b16 %v4749, %v4748
        %v4802 = vpack.c.b16 %v4751, %v4750
        %v4803 = vpack.c.b16 %v4753, %v4752
        %v4804 = vpack.c.b16 %v4755, %v4754
        %v4805 = vpack.c.b16 %v4757, %v4756
        %v4806 = vpack.c.b16 %v4759, %v4758
        %v4807 = vpack.c.b16 %v4761, %v4760
        %v4808 = vpack.c.b16 %v4763, %v4762
        %v4809 = vpack.c.b16 %v4765, %v4764
        %v4810 = vpack.c.b16 %v4767, %v4766
        %v4811 = vpack.c.b16 %v4769, %v4768
        %v4812 = vpack.c.b16 %v4771, %v4770
        %v4813 = vpack.c.b16 %v4773, %v4772
        %v4814 = vpack.c.b16 %v4775, %v4774
        %v4815 = vpack.c.b16 %v4777, %v4776
        %v4816 = vpack.c.b16 %v4779, %v4778
        %v4817 = vpack.c.b16 %v4781, %v4780
        %v4818 = vpack.c.b16 %v4783, %v4782
        %v4819 = vpack.c.b16 %v4785, %v4784
        %v4820 = vpack.c.b16 %v4787, %v4786
        %v4821 = vpack.c.b16 %v4789, %v4788
        %4854 = vmatprep.subr.bf16.mxu0 0
        %4855 = vmatpush1.bf16.msra.mxu0 %v4790
        %4856 = vmatprep.subr.bf16.mxu0 0
        %4857 = vmatpush1.bf16.msra.mxu0 %v4791
        %4858 = vmatprep.subr.bf16.mxu0 0
        %4859 = vmatpush1.bf16.msra.mxu0 %v4792
        %4860 = vmatprep.subr.bf16.mxu0 0
        %4861 = vmatpush1.bf16.msra.mxu0 %v4793
        %4862 = vmatprep.subr.bf16.mxu0 0
        %4863 = vmatpush1.bf16.msra.mxu0 %v4794
        %4864 = vmatprep.subr.bf16.mxu0 0
        %4865 = vmatpush1.bf16.msra.mxu0 %v4795
        %4866 = vmatprep.subr.bf16.mxu0 0
        %4867 = vmatpush1.bf16.msra.mxu0 %v4796
        %4868 = vmatprep.subr.bf16.mxu0 0
        %4869 = vmatpush1.bf16.msra.mxu0 %v4797
        %4870 = vmatprep.subr.bf16.mxu0 0
        %4871 = vmatpush1.bf16.msra.mxu0 %v4798
        %4872 = vmatprep.subr.bf16.mxu0 0
        %4873 = vmatpush1.bf16.msra.mxu0 %v4799
        %4874 = vmatprep.subr.bf16.mxu0 0
        %4875 = vmatpush1.bf16.msra.mxu0 %v4800
        %4876 = vmatprep.subr.bf16.mxu0 0
        %4877 = vmatpush1.bf16.msra.mxu0 %v4801
        %4878 = vmatprep.subr.bf16.mxu0 0
        %4879 = vmatpush1.bf16.msra.mxu0 %v4802
        %4880 = vmatprep.subr.bf16.mxu0 0
        %4881 = vmatpush1.bf16.msra.mxu0 %v4803
        %4882 = vmatprep.subr.bf16.mxu0 0
        %4883 = vmatpush1.bf16.msra.mxu0 %v4804
        %4884 = vmatprep.subr.bf16.mxu0 0
        %4885 = vmatpush1.bf16.msra.mxu0 %v4805
        %4886 = vmatprep.mubr.bf16.mxu0 %v4655
        %4887 = vmatmul.mubr.bf16.gmra.mrb[0].mxu0 %v4654
        %v4888 = vpop.f32.mrb[0].mxu0
        %v4889 = vadd.f32 %v4461, %v4888
        %v4890 = vpop.f32.mrb[0].mxu0
        %v4891 = vpop.f32.mrb[0].mxu0
        %v4892 = vadd.f32 %v4461, %v4891
        %v4893 = vpop.f32.mrb[0].mxu0
        %4894 = vdwg.mxu0
        %4895 = vmatprep.subr.bf16.mxu0 0
        %4896 = vmatpush1.bf16.msra.mxu0 %v4806
        %4897 = vmatprep.subr.bf16.mxu0 0
        %4898 = vmatpush1.bf16.msra.mxu0 %v4807
        %4899 = vmatprep.subr.bf16.mxu0 0
        %4900 = vmatpush1.bf16.msra.mxu0 %v4808
        %4901 = vmatprep.subr.bf16.mxu0 0
        %4902 = vmatpush1.bf16.msra.mxu0 %v4809
        %4903 = vmatprep.subr.bf16.mxu0 0
        %4904 = vmatpush1.bf16.msra.mxu0 %v4810
        %4905 = vmatprep.subr.bf16.mxu0 0
        %4906 = vmatpush1.bf16.msra.mxu0 %v4811
        %4907 = vmatprep.subr.bf16.mxu0 0
        %4908 = vmatpush1.bf16.msra.mxu0 %v4812
        %4909 = vmatprep.subr.bf16.mxu0 0
        %4910 = vmatpush1.bf16.msra.mxu0 %v4813
        %4911 = vmatprep.subr.bf16.mxu0 0
        %4912 = vmatpush1.bf16.msra.mxu0 %v4814
        %4913 = vmatprep.subr.bf16.mxu0 0
        %4914 = vmatpush1.bf16.msra.mxu0 %v4815
        %4915 = vmatprep.subr.bf16.mxu0 0
        %4916 = vmatpush1.bf16.msra.mxu0 %v4816
        %4917 = vmatprep.subr.bf16.mxu0 0
        %4918 = vmatpush1.bf16.msra.mxu0 %v4817
        %4919 = vmatprep.subr.bf16.mxu0 0
        %4920 = vmatpush1.bf16.msra.mxu0 %v4818
        %4921 = vmatprep.subr.bf16.mxu0 0
        %4922 = vmatpush1.bf16.msra.mxu0 %v4819
        %4923 = vmatprep.subr.bf16.mxu0 0
        %4924 = vmatpush1.bf16.msra.mxu0 %v4820
        %4925 = vmatprep.subr.bf16.mxu0 0
        %4926 = vmatpush1.bf16.msra.mxu0 %v4821
        %4927 = vmatprep.mubr.bf16.mxu0 %v4657
        %4928 = vmatmul.mubr.bf16.gmra.mrb[0].mxu0 %v4656
        %v4929 = vpop.f32.mrb[0].mxu0
        %v4930 = vadd.f32 %v4889, %v4929
        %v4931 = vpop.f32.mrb[0].mxu0
        %v4932 = vpop.f32.mrb[0].mxu0
        %v4933 = vadd.f32 %v4892, %v4932
        %v4934 = vpop.f32.mrb[0].mxu0
        %4935 = vdwg.mxu0
        %v4936 = vxor.u32 %v4930, 2147483648
        %v4937 = vxor.u32 %v4933, 2147483648
        %v4938 = vmul.f32 %v4936, 1.442695
        %v4939 = vpow.pop %v4938
        %v4940 = vmul.f32 %v4937, 1.442695
        %v4941 = vpow.pop %v4940
        %v4942 = vadd.f32 %v4939, 1.0
        %v4943 = vadd.f32 %v4941, 1.0
        %v4944 = vrcp.pop %v4942
        %v4945 = vmul.f32 1.0, %v4944
        %v4946 = vrcp.pop %v4943
        %v4947 = vmul.f32 1.0, %v4946
        %v4948 = vmul.f32 %v4930, %v4945
        %v4949 = vmul.f32 %v4933, %v4947
        %v4950 = vld [vmem:[#allocation7] sm:$0xff]
        %v4951 = vld [vmem:[#allocation7 + $0x8] sm:$0xff]
        %v4952 = vld [vmem:[#allocation7 + $0x10] sm:$0xf]
        %v4953 = vld [vmem:[%s9] sm:$0x1]
        %v4955 = vlaneseq
        %v4956 = vshrl.u32 %v4955, 7
        %v4957 = vsub.s32 0, %v4956
        %v4958 = vrot.slane %v4953, %v4957
        %vm4960 = vcmask 162816
        %v4962 = vsel %vm4960, %v4948, 0
        %v4965 = vsel %vm4960, %v4949, 0
        %vm4967 = vcmask 1043456
        %v4969 = vsel %vm4967, %v4952, 0
        %4971 = vmatprep.subr.mxu0 0.0
        %4972 = vmatpush1.msra.mxu0 %v4950
        %4973 = vmatprep.subr.mxu0 0.0
        %4974 = vmatpush1.msra.mxu0 %v4951
        %4975 = vmatprep.subr.mxu0 0.0
        %4976 = vmatpush1.msra.mxu0 %v4969
        %4977 = vmatprep.subr.mxu0 0.0
        %4978 = vmatpush1.msra.mxu0 0.0
        %4979 = vmatprep.subr.mxu0 0.0
        %4980 = vmatpush1.msra.mxu0 0.0
        %4981 = vmatprep.subr.mxu0 0.0
        %4982 = vmatpush1.msra.mxu0 0.0
        %4983 = vmatprep.subr.mxu0 0.0
        %4984 = vmatpush1.msra.mxu0 0.0
        %4985 = vmatprep.subr.mxu0 0.0
        %4986 = vmatpush1.msra.mxu0 0.0
        %4987 = vmatprep.subr.mxu0 0.0
        %4988 = vmatpush1.msra.mxu0 0.0
        %4989 = vmatprep.subr.mxu0 0.0
        %4990 = vmatpush1.msra.mxu0 0.0
        %4991 = vmatprep.subr.mxu0 0.0
        %4992 = vmatpush1.msra.mxu0 0.0
        %4993 = vmatprep.subr.mxu0 0.0
        %4994 = vmatpush1.msra.mxu0 0.0
        %4995 = vmatprep.subr.mxu0 0.0
        %4996 = vmatpush1.msra.mxu0 0.0
        %4997 = vmatprep.subr.mxu0 0.0
        %4998 = vmatpush1.msra.mxu0 0.0
        %4999 = vmatprep.subr.mxu0 0.0
        %5000 = vmatpush1.msra.mxu0 0.0
        %5001 = vmatprep.subr.mxu0 0.0
        %5002 = vmatpush1.msra.mxu0 0.0
        %5003 = vmatprep.subr.mxu0 0.0
        %5004 = vmatpush1.msra.mxu0 0.0
        %5005 = vmatprep.subr.mxu0 0.0
        %5006 = vmatpush1.msra.mxu0 0.0
        %5007 = vmatprep.subr.mxu0 0.0
        %5008 = vmatpush1.msra.mxu0 0.0
        %5009 = vmatprep.subr.mxu0 0.0
        %5010 = vmatpush1.msra.mxu0 0.0
        %5011 = vmatprep.subr.mxu0 0.0
        %5012 = vmatpush1.msra.mxu0 0.0
        %5013 = vmatprep.subr.mxu0 0.0
        %5014 = vmatpush1.msra.mxu0 0.0
        %5015 = vmatprep.subr.mxu0 0.0
        %5016 = vmatpush1.msra.mxu0 0.0
        %5017 = vmatprep.subr.mxu0 0.0
        %5018 = vmatpush1.msra.mxu0 0.0
        %5019 = vmatprep.subr.mxu0 0.0
        %5020 = vmatpush1.msra.mxu0 0.0
        %5021 = vmatprep.subr.mxu0 0.0
        %5022 = vmatpush1.msra.mxu0 0.0
        %5023 = vmatprep.subr.mxu0 0.0
        %5024 = vmatpush1.msra.mxu0 0.0
        %5025 = vmatprep.subr.mxu0 0.0
        %5026 = vmatpush1.msra.mxu0 0.0
        %5027 = vmatprep.subr.mxu0 0.0
        %5028 = vmatpush1.msra.mxu0 0.0
        %5029 = vmatprep.subr.mxu0 0.0
        %5030 = vmatpush1.msra.mxu0 0.0
        %5031 = vmatprep.subr.mxu0 0.0
        %5032 = vmatpush1.msra.mxu0 0.0
        %5033 = vmatprep.subr.mxu0 0.0
        %5034 = vmatpush1.msra.mxu0 0.0
        %5035 = vmatprep.mubr.f32.mxu0 0.0
        %5036 = vmatmul.mubr.f32.gmra.mrb[0].mxu0 %v4962
        %v5037 = vpop.f32.mrb[0].mxu0
        %v5038 = vadd.f32 %v4958, %v5037
        %v5039 = vpop.f32.mrb[0].mxu0
        %5040 = vmatprep.mubr.f32.mxu0 0.0
        %5041 = vmatmul.mubr.f32.gmra.mrb[0].mxu0 %v4965
        %v5042 = vpop.f32.mrb[0].mxu0
        %v5043 = vadd.f32 %v4958, %v5042
        %v5044 = vpop.f32.mrb[0].mxu0
        %5045 = vdwg.mxu0
        %v5046 = vxor.u32 %v5038, 2147483648
        %v5047 = vxor.u32 %v5043, 2147483648
        %v5048 = vmul.f32 %v5046, 1.442695
        %v5049 = vpow.pop %v5048
        %v5050 = vmul.f32 %v5047, 1.442695
        %v5051 = vpow.pop %v5050
        %v5052 = vadd.f32 %v5049, 1.0
        %v5053 = vadd.f32 %v5051, 1.0
        %v5054 = vrcp.pop %v5052
        %v5055 = vmul.f32 1.0, %v5054
        %v5056 = vrcp.pop %v5053
        %v5057 = vmul.f32 1.0, %v5056
        %v5058 = vmul.f32 %v5038, %v5055
        %v5059 = vmul.f32 %v5043, %v5057
        %v5060 = vld [vmem:[%s10] sm:$0xff]
        %v5061 = vld [vmem:[%s10 + $0x8] sm:$0xff]
        %v5062 = vld [vmem:[%s10 + $0x10] sm:$0xff]
        %v5063 = vld [vmem:[%s10 + $0x18] sm:$0xff]
        %v5064 = vld [vmem:[%s10 + $0x20] sm:$0xff]
        %v5065 = vld [vmem:[%s10 + $0x28] sm:$0xff]
        %v5066 = vld [vmem:[%s10 + $0x30] sm:$0xff]
        %v5067 = vld [vmem:[%s10 + $0x38] sm:$0xff]
        %v5068 = vld [vmem:[%s10 + $0x40] sm:$0xff]
        %v5069 = vld [vmem:[%s10 + $0x48] sm:$0xff]
        %v5070 = vld [vmem:[%s10 + $0x50] sm:$0xff]
        %v5071 = vld [vmem:[%s10 + $0x58] sm:$0xff]
        %v5072 = vld [vmem:[%s10 + $0x60] sm:$0xf]
        %v5073 = vld [vmem:[%s11] sm:$0x1]
        %v5075 = vlaneseq
        %v5076 = vshrl.u32 %v5075, 7
        %v5077 = vsub.s32 0, %v5076
        %v5078 = vrot.slane %v5073, %v5077
        %vm5080 = vcmask 818176
        %v5082 = vsel %vm5080, %v5058, 0
        %v5085 = vsel %vm5080, %v5059, 0
        %v5088 = vsel %vm4967, %v5072, 0
        %5090 = vmatprep.subr.mxu0 0.0
        %5091 = vmatpush1.msra.mxu0 %v5060
        %5092 = vmatprep.subr.mxu0 0.0
        %5093 = vmatpush1.msra.mxu0 %v5061
        %5094 = vmatprep.subr.mxu0 0.0
        %5095 = vmatpush1.msra.mxu0 %v5062
        %5096 = vmatprep.subr.mxu0 0.0
        %5097 = vmatpush1.msra.mxu0 %v5063
        %5098 = vmatprep.subr.mxu0 0.0
        %5099 = vmatpush1.msra.mxu0 %v5064
        %5100 = vmatprep.subr.mxu0 0.0
        %5101 = vmatpush1.msra.mxu0 %v5065
        %5102 = vmatprep.subr.mxu0 0.0
        %5103 = vmatpush1.msra.mxu0 %v5066
        %5104 = vmatprep.subr.mxu0 0.0
        %5105 = vmatpush1.msra.mxu0 %v5067
        %5106 = vmatprep.subr.mxu0 0.0
        %5107 = vmatpush1.msra.mxu0 %v5068
        %5108 = vmatprep.subr.mxu0 0.0
        %5109 = vmatpush1.msra.mxu0 %v5069
        %5110 = vmatprep.subr.mxu0 0.0
        %5111 = vmatpush1.msra.mxu0 %v5070
        %5112 = vmatprep.subr.mxu0 0.0
        %5113 = vmatpush1.msra.mxu0 %v5071
        %5114 = vmatprep.subr.mxu0 0.0
        %5115 = vmatpush1.msra.mxu0 %v5088
        %5116 = vmatprep.subr.mxu0 0.0
        %5117 = vmatpush1.msra.mxu0 0.0
        %5118 = vmatprep.subr.mxu0 0.0
        %5119 = vmatpush1.msra.mxu0 0.0
        %5120 = vmatprep.subr.mxu0 0.0
        %5121 = vmatpush1.msra.mxu0 0.0
        %5122 = vmatprep.subr.mxu0 0.0
        %5123 = vmatpush1.msra.mxu0 0.0
        %5124 = vmatprep.subr.mxu0 0.0
        %5125 = vmatpush1.msra.mxu0 0.0
        %5126 = vmatprep.subr.mxu0 0.0
        %5127 = vmatpush1.msra.mxu0 0.0
        %5128 = vmatprep.subr.mxu0 0.0
        %5129 = vmatpush1.msra.mxu0 0.0
        %5130 = vmatprep.subr.mxu0 0.0
        %5131 = vmatpush1.msra.mxu0 0.0
        %5132 = vmatprep.subr.mxu0 0.0
        %5133 = vmatpush1.msra.mxu0 0.0
        %5134 = vmatprep.subr.mxu0 0.0
        %5135 = vmatpush1.msra.mxu0 0.0
        %5136 = vmatprep.subr.mxu0 0.0
        %5137 = vmatpush1.msra.mxu0 0.0
        %5138 = vmatprep.subr.mxu0 0.0
        %5139 = vmatpush1.msra.mxu0 0.0
        %5140 = vmatprep.subr.mxu0 0.0
        %5141 = vmatpush1.msra.mxu0 0.0
        %5142 = vmatprep.subr.mxu0 0.0
        %5143 = vmatpush1.msra.mxu0 0.0
        %5144 = vmatprep.subr.mxu0 0.0
        %5145 = vmatpush1.msra.mxu0 0.0
        %5146 = vmatprep.subr.mxu0 0.0
        %5147 = vmatpush1.msra.mxu0 0.0
        %5148 = vmatprep.subr.mxu0 0.0
        %5149 = vmatpush1.msra.mxu0 0.0
        %5150 = vmatprep.subr.mxu0 0.0
        %5151 = vmatpush1.msra.mxu0 0.0
        %5152 = vmatprep.subr.mxu0 0.0
        %5153 = vmatpush1.msra.mxu0 0.0
        %5154 = vmatprep.mubr.f32.mxu0 0.0
        %5155 = vmatmul.mubr.f32.gmra.mrb[0].mxu0 %v5082
        %v5156 = vpop.f32.mrb[0].mxu0
        %v5157 = vadd.f32 %v5078, %v5156
        %v5158 = vpop.f32.mrb[0].mxu0
        %5159 = vmatprep.mubr.f32.mxu0 0.0
        %5160 = vmatmul.mubr.f32.gmra.mrb[0].mxu0 %v5085
        %v5161 = vpop.f32.mrb[0].mxu0
        %v5162 = vadd.f32 %v5078, %v5161
        %v5163 = vpop.f32.mrb[0].mxu0
        %5164 = vdwg.mxu0
        %v5165 = vxor.u32 %v5157, 2147483648
        %v5166 = vxor.u32 %v5162, 2147483648
        %v5167 = vmul.f32 %v5165, 1.442695
        %v5168 = vpow.pop %v5167
        %v5169 = vmul.f32 %v5166, 1.442695
        %v5170 = vpow.pop %v5169
        %v5171 = vadd.f32 %v5168, 1.0
        %v5172 = vadd.f32 %v5170, 1.0
        %v5173 = vrcp.pop %v5171
        %v5174 = vmul.f32 1.0, %v5173
        %v5175 = vrcp.pop %v5172
        %v5176 = vmul.f32 1.0, %v5175
        %vm5177 = vcmask 31744
        %5178 = vst.msk [vmem:[%s488] sm:$0xff] %vm5177, %v5174
        %5179 = vst.msk [vmem:[%s488 + $0x8] sm:$0xff] %vm5177, %v5176
        %p5180 = scmp.lt.s32.totalorder %s26, 1
        %s5181 = scalar_select %p5180, %s26, 1
        %s5182 = smul.addr %s5181, 2
        %s5183 = smul.addr %s5182, 8
        %s5184 = scalar_lea.vmem %s12, %s5183
        // Predicated region
        $region85: #{tpu_custom_call.1} parent=67 // pred_check
          %p5185 = pneg %p306
        $region86: #{tpu_custom_call.1} parent=67 // pred_check_branch
          %5187 = sbr.rel (%p5185) target = $region88
        $region87: #{tpu_custom_call.1} parent=67 // pred_region
          _
        $region88: #{tpu_custom_call.1} parent=67 // pred_fallthru
          _
      $region68: #{tpu_custom_call.1} parent=5 // pred_fallthru
        _
      %p5188 = scmp.le.s32.totalorder 2, %s21
      // Predicated region
      $region89: #{tpu_custom_call.1} parent=5 // pred_check
        %p5189 = pneg %p5188
      $region90: #{tpu_custom_call.1} parent=5 // pred_check_branch
        %5191 = sbr.rel (%p5189) target = $region92
      $region91: #{tpu_custom_call.1} parent=5 // pred_region
        %s5192 = ssub.s32 %s21, 2
        // Predicated region
        $region93: #{tpu_custom_call.1} parent=91 // pred_check
          %p5193 = pneg %p312
        $region94: #{tpu_custom_call.1} parent=91 // pred_check_branch
          %5195 = sbr.rel (%p5193) target = $region96
        $region95: #{tpu_custom_call.1} parent=91 // pred_region
          %p5196 = scmp.lt.s32.totalorder %s27, 1
          %s5197 = scalar_select %p5196, %s27, 1
          %s5198 = smul.addr %s5197, 2
          %s5199 = smul.addr %s5198, 8
          %s5200 = scalar_lea.vmem %s12, %s5199
        $region96: #{tpu_custom_call.1} parent=91 // pred_fallthru
          _
      $region92: #{tpu_custom_call.1} parent=5 // pred_fallthru
        _
    $region6: #{tpu_custom_call.1} parent=1 // loop_footer
      %s25 = sadd.s32 1, %s21
    $region7: #{tpu_custom_call.1} parent=1 // loop_footer_branch
      %20 = sbr.rel target = $region3
    $region8: #{tpu_custom_call.1} parent=1 // loop_exit
      _
    %5201 = vsyncpa [#allocation3], 1
    %s5202 = scalar_lea.sflag [#allocation3], 1
    %5203 = vsyncpa %s5202, 1
    %5204 = vsyncpa [#allocation5], 1
    %5205 = vsyncpa [#allocation8], 1

</llo_original>
